<compile_context>
chip_gen: v5e
topology: v5e:2x2
jax: 0.10.0
libtpu: 0.0.40
codegen_flags: <defaults>
</compile_context>

<pallas_src>
import functools

import jax
import jax.numpy as jnp
import numpy as np
from jax import lax
from jax.experimental import pallas as pl
from jax.experimental.pallas import tpu as pltpu


# ---------------------------------------------------------------------------
# Small helpers
# ---------------------------------------------------------------------------

def _device_kind() -> str:
    try:
        return jax.devices()[0].device_kind.lower()
    except Exception:  # pragma: no cover
        return ""


def _floordiv(a, n: int):
    # Strength-reduce constant power-of-two division (avoids long VPU idiv).
    return (a >> (n.bit_length() - 1)) if (n & (n - 1)) == 0 else a // n


def _mod(a, n: int):
    return (a & (n - 1)) if (n & (n - 1)) == 0 else a % n


_ROLL_SIGN = None


def _roll_sign() -> int:
    """Probe pltpu.roll's rotation convention once on the real device.

    Returns +1 if pltpu.roll matches jnp.roll (result[i] = x[i - shift]), so a
    tap that must read x[pos + off] uses shift = -off; returns -1 otherwise.
    """
    global _ROLL_SIGN
    if _ROLL_SIGN is not None:
        return _ROLL_SIGN

    def probe_kernel(x_ref, o_ref):
        o_ref[...] = pltpu.roll(x_ref[...], shift=1, axis=1)

    try:
        x = jnp.broadcast_to(jnp.arange(128, dtype=jnp.float32), (8, 128))
        y = pl.pallas_call(
            probe_kernel,
            out_shape=jax.ShapeDtypeStruct((8, 128), jnp.float32),
        )(x)
        _ROLL_SIGN = 1 if float(y[0, 1]) == 0.0 else -1
    except Exception:
        _ROLL_SIGN = 1  # documented jnp.roll convention
    return _ROLL_SIGN


# ---------------------------------------------------------------------------
# Kernel
# ---------------------------------------------------------------------------

def cab_kernel(x_ref, w1_ref, w2_ref, wdT_ref, wu_ref, out_ref, col_ref, *,
               D, H, W, k, NB, compute_dtype, pair_stores, roll_sign):
    """Fused CAB forward for one grid step (NB batch elements).

    Layouts (channels on sublanes, flattened batch*spatial on lanes):
      x_ref   : (C, NB*D*H*W)   f32 activations
      w1_ref  : (C, KP)         conv1 weight, tap-major / c_in-minor (+ zero pad)
      w2_ref  : (C, KP)         conv2 weight
      wdT_ref : (C, C//r)       CA squeeze 1x1x1 weight, pre-transposed
      wu_ref  : (C, C//r)       CA excite  1x1x1 weight
      out_ref : (C, NB*D*H*W)   f32
      col_ref : (KP, NB*D*H*W)  im2col scratch in compute_dtype
    """
    C, L = x_ref.shape
    KP = col_ref.shape[0]
    HW = H * W
    DHW = D * HW
    p = k // 2

    # --- SAME-padding boundary masks: hoisted, computed ONCE, reused by both
    # convs and every tap (power-of-two sizes use shift/and, not div/mod).
    pos = lax.broadcasted_iota(jnp.int32, (C, L), 1)
    sp = pos if NB == 1 else _mod(pos, DHW)      # within-volume spatial index
    d_idx = _floordiv(sp, HW)
    h_idx = _mod(_floordiv(sp, W), H)
    w_idx = _mod(sp, W)

    axis_ok = {}
    for axis_id, (idx, size) in enumerate(((d_idx, D), (h_idx, H), (w_idx, W))):
        for o in range(-p, p + 1):
            if o < 0:
                axis_ok[(axis_id, o)] = idx >= -o
            elif o > 0:
                axis_ok[(axis_id, o)] = idx < size - o

    offsets = [(kd - p, kh - p, kw - p)
               for kd in range(k) for kh in range(k) for kw in range(k)]
    tap_masks = []
    for (od, oh, ow) in offsets:
        conds = [axis_ok[(a, o)] for a, o in ((0, od), (1, oh), (2, ow)) if o != 0]
        if not conds:
            tap_masks.append(None)
        else:
            m = conds[0]
            for c2 in conds[1:]:
                m = m & c2
            tap_masks.append(m)

    # Pad the tap list with zero taps (matching weight columns are zero).  For
    # the bf16 path this makes the tap count even so each store covers a full
    # 16-sublane native bf16 tile.
    n_slots = KP // C
    offsets = offsets + [None] * (n_slots - len(offsets))
    tap_masks = tap_masks + [None] * (n_slots - len(tap_masks))

    def make_tap(j, xc):
        o = offsets[j]
        if o is None:                         # zero-padding tap
            return jnp.zeros_like(xc)
        od, oh, ow = o
        off = od * HW + oh * W + ow
        # col[:, pos] must read x[:, pos + off].  Out-of-volume (and rolled
        # wrap-around / cross-batch) lanes are exactly the lanes zeroed by the
        # hoisted masks, so the rotation's wrap is harmless.  The lane
        # rotation runs on the XLU, leaving VALU / vst slots free.
        t = xc if off == 0 else pltpu.roll(
            xc, shift=(roll_sign * -off) % L, axis=1)
        m = tap_masks[j]
        return t if m is None else jnp.where(m, t, jnp.zeros_like(t))

    def conv3d(xc, w_ref):
        # Build the (KP, L) im2col operand with lane-dense stores, then do the
        # whole 3x3x3 conv as ONE MXU matmul (C, KP) @ (KP, L).
        if pair_stores:
            # bf16: write two taps (16 sublanes = one native bf16 tile) per
            # store so every store is full-tile aligned.
            for j in range(0, n_slots, 2):
                pair = jnp.concatenate(
                    [make_tap(j, xc), make_tap(j + 1, xc)], axis=0)
                col_ref[j * C:(j + 2) * C, :] = pair
        else:
            # f32: each (C, L) tap store is already (8,128)-tile aligned.
            for j in range(n_slots):
                col_ref[j * C:(j + 1) * C, :] = make_tap(j, xc)
        return jnp.dot(w_ref[...], col_ref[...],
                       preferred_element_type=jnp.float32)

    x_f32 = x_ref[...]
    xc = x_f32.astype(compute_dtype)

    r1 = jnp.maximum(conv3d(xc, w1_ref), 0.0)            # conv1 + ReLU   (f32)
    r2 = conv3d(r1.astype(compute_dtype), w2_ref)        # conv2          (f32)

    # CALayer + residual, per batch element (static lane slices of width DHW).
    # The two 1x1x1 convs are VPU broadcast-multiplies + tiny XLU reductions;
    # a 1-column MXU matmul would waste a full systolic fill/drain.
    for nb in range(NB):
        lo, hi = nb * DHW, (nb + 1) * DHW
        r2n = r2[:, lo:hi]
        y = jnp.mean(r2n, axis=1, keepdims=True)                       # (C, 1)
        z = jnp.maximum(
            jnp.sum(wdT_ref[...] * y, axis=0, keepdims=True), 0.0)     # (1, Cr)
        s = jax.nn.sigmoid(
            jnp.sum(wu_ref[...] * z, axis=1, keepdims=True))           # (C, 1)
        out_ref[:, lo:hi] = (r2n * s + x_f32[:, lo:hi]).astype(out_ref.dtype)


# ---------------------------------------------------------------------------
# Wrapper
# ---------------------------------------------------------------------------

def _cab_forward_impl(x, w1_pt, w2_pt, wd, wu, *, use_bf16, fold_batch):
    N, C, D, H, W = x.shape
    k = w1_pt.shape[2]
    Cr = wd.shape[0]
    DHW = D * H * W
    K = k * k * k * C

    # Lane-dense layout assumptions: C rides the sublanes, the flattened
    # (batch, d, h, w) index rides the lanes.
    if C % 8 != 0 or DHW % 128 != 0:
        raise NotImplementedError(
            "cab_forward assumes n_feat % 8 == 0 and D*H*W % 128 == 0 "
            f"(got C={C}, D*H*W={DHW}); pad the inputs to use this kernel.")

    compute_dtype = jnp.bfloat16 if use_bf16 else jnp.float32
    # bf16 im2col rows are stored two taps (16 sublanes) at a time -> round
    # the contraction dim up to a multiple of 2*C (layout alignment only).
    KP = ((K + 2 * C - 1) // (2 * C)) * (2 * C) if use_bf16 else K

    if fold_batch:
        G, NB = 1, N      # single TensorCore: one grid step, batch on lanes
    else:
        G, NB = N, 1      # multi TensorCore: batch is a parallel grid axis
    L = NB * DHW

    # (N, C, D, H, W) -> (G, C, NB*DHW), lanes ordered (batch, d, h, w).
    x_lay = (x.reshape(G, NB, C, DHW)
              .transpose(0, 2, 1, 3)
              .reshape(G, C, L))

    # Conv weights pre-flattened to the exact matmul layout (C_out, k^3*C_in),
    # tap-major / c_in-minor (matches the kernel's im2col row order), padded
    # with zero columns up to KP and cast to the compute dtype.
    def flat_w(w_pt):
        wf = jnp.transpose(w_pt, (0, 2, 3, 4, 1)).reshape(C, K)
        if KP != K:
            wf = jnp.pad(wf, ((0, 0), (0, KP - K)))
        return wf.astype(compute_dtype)

    w1f = flat_w(w1_pt)
    w2f = flat_w(w2_pt)
    wdT = jnp.asarray(wd, jnp.float32).T        # (C, Cr) squeeze, transposed
    wuf = jnp.asarray(wu, jnp.float32)          # (C, Cr) excite

    kernel = functools.partial(
        cab_kernel, D=D, H=H, W=W, k=k, NB=NB,
        compute_dtype=compute_dtype, pair_stores=use_bf16,
        roll_sign=_roll_sign())

    # Total VMEM (<1 MiB) is far below even v7x's 64 MiB, so blocks stay the
    # full (C, L) extent -- no re-tiling.
    grid_spec = pltpu.PrefetchScalarGridSpec(
        num_scalar_prefetch=0,
        grid=(G,),
        in_specs=[
            pl.BlockSpec((None, C, L), lambda g: (g, 0, 0)),
            pl.BlockSpec((C, KP), lambda g: (0, 0)),
            pl.BlockSpec((C, KP), lambda g: (0, 0)),
            pl.BlockSpec((C, Cr), lambda g: (0, 0)),
            pl.BlockSpec((C, Cr), lambda g: (0, 0)),
        ],
        out_specs=pl.BlockSpec((None, C, L), lambda g: (g, 0, 0)),
        scratch_shapes=[
            pltpu.VMEM((KP, L), compute_dtype),   # im2col operand
        ],
    )

    out_lay = pl.pallas_call(
        kernel,
        out_shape=jax.ShapeDtypeStruct((G, C, L), x.dtype),
        grid_spec=grid_spec,
        compiler_params=pltpu.CompilerParams(
            dimension_semantics=("parallel",)),
    )(x_lay, w1f, w2f, wdT, wuf)

    return (out_lay.reshape(G, C, NB, DHW)
                   .transpose(0, 2, 1, 3)
                   .reshape(N, C, D, H, W))


def cab_forward(x, w1_pt, w2_pt, wd, wu, *, use_bf16=None, fold_batch=None):
    """CAB forward.

    x     : (N, C, D, H, W) float32, NCDHW (PyTorch layout).
    w1_pt : (C, C, k, k, k) Conv3d weight, PyTorch (c_out, c_in, kd, kh, kw).
    w2_pt : (C, C, k, k, k)
    wd    : (C//r, C)       CALayer squeeze 1x1x1 conv weight.
    wu    : (C, C//r)       CALayer excite  1x1x1 conv weight.
    """
    kind = _device_kind()
    if use_bf16 is None:
        # bf16 im2col/matmul path only on chips with a native bf16 VPU and a
        # big bf16 MXU (v6e / v7x); v5e/v4 stay f32.
        use_bf16 = any(t in kind for t in ("v6", "v7", "7x"))
    if fold_batch is None:
        # Single-TC chips (v5e, v6e): fold the batch into one grid step.
        # Multi-TC / megacore chips (v7x, v4, v5p): keep batch as a parallel
        # grid axis so the cores split it.
        fold_batch = not any(t in kind for t in ("v7", "7x", "v4", "v5p"))
    try:
        return _cab_forward_impl(x, w1_pt, w2_pt, wd, wu,
                                 use_bf16=use_bf16, fold_batch=fold_batch)
    except Exception:
        if not use_bf16:
            raise
        # TODO(synk): bf16 im2col path failed to lower on this chip/toolchain;
        # fall back to the always-supported f32 path.
        return _cab_forward_impl(x, w1_pt, w2_pt, wd, wu,
                                 use_bf16=False, fold_batch=fold_batch)


# ---------------------------------------------------------------------------
# Pure-JAX reference (matches the PyTorch CAB forward, NCDHW)
# ---------------------------------------------------------------------------

def cab_reference(x, w1_pt, w2_pt, wd, wu):
    dn = ('NCDHW', 'OIDHW', 'NCDHW')
    r = lax.conv_general_dilated(x, w1_pt, (1, 1, 1), 'SAME',
                                 dimension_numbers=dn)
    r = jnp.maximum(r, 0.0)
    r = lax.conv_general_dilated(r, w2_pt, (1, 1, 1), 'SAME',
                                 dimension_numbers=dn)
    y = jnp.mean(r, axis=(2, 3, 4), keepdims=True)
    z = jnp.maximum(jnp.einsum('oc,ncxyz->noxyz', wd, y), 0.0)
    s = jax.nn.sigmoid(jnp.einsum('oc,ncxyz->noxyz', wu, z))
    return r * s + x


if __name__ == "__main__":
    # CAB(n_feat=8, kernel_size=3, reduction=4, bias=False, act=nn.ReLU())
    N, C, D, H, W = 2, 8, 8, 8, 8
    k = 3
    reduction = 4
    Cr = C // reduction

    key = jax.random.PRNGKey(0)
    kx, k1, k2, k3, k4 = jax.random.split(key, 5)

    # Input in NCDHW (PyTorch layout).
    x = jax.random.normal(kx, (N, C, D, H, W), jnp.float32)

    # Deterministic synthetic weights in the native PyTorch layouts.
    w1_pt = 0.1 * jax.random.normal(k1, (C, C, k, k, k), jnp.float32)
    w2_pt = 0.1 * jax.random.normal(k2, (C, C, k, k, k), jnp.float32)
    wd = 0.2 * jax.random.normal(k3, (Cr, C), jnp.float32)   # squeeze 1x1x1
    wu = 0.2 * jax.random.normal(k4, (C, Cr), jnp.float32)   # excite  1x1x1

    out = jax.block_until_ready(cab_forward(x, w1_pt, w2_pt, wd, wu))
    ref = jax.block_until_ready(cab_reference(x, w1_pt, w2_pt, wd, wu))

    np.testing.assert_allclose(np.asarray(out), np.asarray(ref),
                               rtol=5e-2, atol=5e-2)
    print("KERNEL_OK")
</pallas_src>

<mosaic_0001>
module attributes {stable_mosaic.version = 11 : i64} {
  func.func @probe_kernel(%arg0: memref<8x128xf32, #tpu.memory_space<vmem>>, %arg1: memref<8x128xf32, #tpu.memory_space<vmem>>) attributes {dimension_semantics = [], scalar_prefetch = 0 : i64, scratch_operands = 0 : i64, tpu.core_type = #tpu.core_type<tc>} {
    %c0 = arith.constant 0 : index
    %c0_0 = arith.constant 0 : index
    %0 = vector.load %arg0[%c0, %c0_0] : memref<8x128xf32, #tpu.memory_space<vmem>>, vector<8x128xf32>
    %c1_i32 = arith.constant 1 : i32
    %1 = tpu.dynamic_rotate %0 by %c1_i32 dim 1 : vector<8x128xf32>, i32 -> vector<8x128xf32>
    %c0_1 = arith.constant 0 : index
    %c0_2 = arith.constant 0 : index
    %2 = vector.load %arg1[%c0_1, %c0_2] : memref<8x128xf32, #tpu.memory_space<vmem>>, vector<8x128xf32>
    tpu.vector_store %arg1[%c0_1, %c0_2], %1 {strides = array<i32>} : memref<8x128xf32, #tpu.memory_space<vmem>>, vector<8x128xf32>,
    return
  }
}

module attributes {stable_mosaic.version = 11 : i64} {
  func.func @cab_kernel(%arg0: i32, %arg1: memref<1x8x1024xf32, #tpu.memory_space<vmem>>, %arg2: memref<8x216xf32, #tpu.memory_space<vmem>>, %arg3: memref<8x216xf32, #tpu.memory_space<vmem>>, %arg4: memref<8x2xf32, #tpu.memory_space<vmem>>, %arg5: memref<8x2xf32, #tpu.memory_space<vmem>>, %arg6: memref<1x8x1024xf32, #tpu.memory_space<vmem>>, %arg7: memref<216x1024xf32, #tpu.memory_space<vmem>>) attributes {dimension_semantics = [#tpu.dimension_semantics<parallel>], iteration_bounds = array<i64: 1>, scalar_prefetch = 0 : i64, scratch_operands = 1 : i64, tpu.core_type = #tpu.core_type<tc>, window_params = [{transform_indices = @transform_0, window_bounds = array<i64: 1, 8, 1024>}, {pipeline_mode = #tpu.pipeline_mode<synchronous>, transform_indices = @transform_1, window_bounds = array<i64: 8, 216>}, {pipeline_mode = #tpu.pipeline_mode<synchronous>, transform_indices = @transform_2, window_bounds = array<i64: 8, 216>}, {pipeline_mode = #tpu.pipeline_mode<synchronous>, transform_indices = @transform_3, window_bounds = array<i64: 8, 2>}, {pipeline_mode = #tpu.pipeline_mode<synchronous>, transform_indices = @transform_4, window_bounds = array<i64: 8, 2>}, {transform_indices = @transform_5, window_bounds = array<i64: 1, 8, 1024>}]} {
    %0 = tpu.iota {dimensions = array<i32: 1>} : vector<8x1024xi32>
    %c511_i32 = arith.constant 511 : i32
    %1 = vector.broadcast %c511_i32 : i32 to vector<8x1024xi32>
    %2 = arith.andi %0, %1 : vector<8x1024xi32>
    %c6_i32 = arith.constant 6 : i32
    %3 = vector.broadcast %c6_i32 : i32 to vector<8x1024xi32>
    %4 = arith.shrsi %2, %3 : vector<8x1024xi32>
    %c3_i32 = arith.constant 3 : i32
    %5 = vector.broadcast %c3_i32 : i32 to vector<8x1024xi32>
    %6 = arith.shrsi %2, %5 : vector<8x1024xi32>
    %c7_i32 = arith.constant 7 : i32
    %7 = vector.broadcast %c7_i32 : i32 to vector<8x1024xi32>
    %8 = arith.andi %6, %7 : vector<8x1024xi32>
    %c7_i32_0 = arith.constant 7 : i32
    %9 = vector.broadcast %c7_i32_0 : i32 to vector<8x1024xi32>
    %10 = arith.andi %2, %9 : vector<8x1024xi32>
    %c1_i32 = arith.constant 1 : i32
    %11 = vector.broadcast %c1_i32 : i32 to vector<8x1024xi32>
    %12 = arith.cmpi sge, %4, %11 : vector<8x1024xi32>
    %c7_i32_1 = arith.constant 7 : i32
    %13 = vector.broadcast %c7_i32_1 : i32 to vector<8x1024xi32>
    %14 = arith.cmpi slt, %4, %13 : vector<8x1024xi32>
    %c1_i32_2 = arith.constant 1 : i32
    %15 = vector.broadcast %c1_i32_2 : i32 to vector<8x1024xi32>
    %16 = arith.cmpi sge, %8, %15 : vector<8x1024xi32>
    %c7_i32_3 = arith.constant 7 : i32
    %17 = vector.broadcast %c7_i32_3 : i32 to vector<8x1024xi32>
    %18 = arith.cmpi slt, %8, %17 : vector<8x1024xi32>
    %c1_i32_4 = arith.constant 1 : i32
    %19 = vector.broadcast %c1_i32_4 : i32 to vector<8x1024xi32>
    %20 = arith.cmpi sge, %10, %19 : vector<8x1024xi32>
    %c7_i32_5 = arith.constant 7 : i32
    %21 = vector.broadcast %c7_i32_5 : i32 to vector<8x1024xi32>
    %22 = arith.cmpi slt, %10, %21 : vector<8x1024xi32>
    %23 = arith.andi %12, %16 : vector<8x1024xi1>
    %24 = arith.andi %23, %20 : vector<8x1024xi1>
    %25 = arith.andi %12, %16 : vector<8x1024xi1>
    %26 = arith.andi %12, %16 : vector<8x1024xi1>
    %27 = arith.andi %26, %22 : vector<8x1024xi1>
    %28 = arith.andi %12, %20 : vector<8x1024xi1>
    %29 = arith.andi %12, %22 : vector<8x1024xi1>
    %30 = arith.andi %12, %18 : vector<8x1024xi1>
    %31 = arith.andi %30, %20 : vector<8x1024xi1>
    %32 = arith.andi %12, %18 : vector<8x1024xi1>
    %33 = arith.andi %12, %18 : vector<8x1024xi1>
    %34 = arith.andi %33, %22 : vector<8x1024xi1>
    %35 = arith.andi %16, %20 : vector<8x1024xi1>
    %36 = arith.andi %16, %22 : vector<8x1024xi1>
    %37 = arith.andi %18, %20 : vector<8x1024xi1>
    %38 = arith.andi %18, %22 : vector<8x1024xi1>
    %39 = arith.andi %14, %16 : vector<8x1024xi1>
    %40 = arith.andi %39, %20 : vector<8x1024xi1>
    %41 = arith.andi %14, %16 : vector<8x1024xi1>
    %42 = arith.andi %14, %16 : vector<8x1024xi1>
    %43 = arith.andi %42, %22 : vector<8x1024xi1>
    %44 = arith.andi %14, %20 : vector<8x1024xi1>
    %45 = arith.andi %14, %22 : vector<8x1024xi1>
    %46 = arith.andi %14, %18 : vector<8x1024xi1>
    %47 = arith.andi %46, %20 : vector<8x1024xi1>
    %48 = arith.andi %14, %18 : vector<8x1024xi1>
    %49 = arith.andi %14, %18 : vector<8x1024xi1>
    %50 = arith.andi %49, %22 : vector<8x1024xi1>
    %c0 = arith.constant 0 : index
    %c0_6 = arith.constant 0 : index
    %c0_7 = arith.constant 0 : index
    %51 = vector.load %arg1[%c0, %c0_6, %c0_7] : memref<1x8x1024xf32, #tpu.memory_space<vmem>>, vector<1x8x1024xf32>
    %52 = vector.shape_cast %51 : vector<1x8x1024xf32> to vector<8x1024xf32>
    %c73_i32 = arith.constant 73 : i32
    %53 = tpu.dynamic_rotate %52 by %c73_i32 dim 1 : vector<8x1024xf32>, i32 -> vector<8x1024xf32>
    %cst = arith.constant 0.000000e+00 : f32
    %54 = vector.broadcast %cst : f32 to vector<8x1024xf32>
    %55 = arith.select %24, %53, %54 : vector<8x1024xi1>, vector<8x1024xf32>
    %c0_8 = arith.constant 0 : index
    %c0_9 = arith.constant 0 : index
    %56 = vector.load %arg7[%c0_8, %c0_9] : memref<216x1024xf32, #tpu.memory_space<vmem>>, vector<8x1024xf32>
    tpu.vector_store %arg7[%c0_8, %c0_9], %55 {strides = array<i32>} : memref<216x1024xf32, #tpu.memory_space<vmem>>, vector<8x1024xf32>,
    %c72_i32 = arith.constant 72 : i32
    %57 = tpu.dynamic_rotate %52 by %c72_i32 dim 1 : vector<8x1024xf32>, i32 -> vector<8x1024xf32>
    %cst_10 = arith.constant 0.000000e+00 : f32
    %58 = vector.broadcast %cst_10 : f32 to vector<8x1024xf32>
    %59 = arith.select %25, %57, %58 : vector<8x1024xi1>, vector<8x1024xf32>
    %c8 = arith.constant 8 : index
    %c0_11 = arith.constant 0 : index
    %60 = vector.load %arg7[%c8, %c0_11] : memref<216x1024xf32, #tpu.memory_space<vmem>>, vector<8x1024xf32>
    tpu.vector_store %arg7[%c8, %c0_11], %59 {strides = array<i32>} : memref<216x1024xf32, #tpu.memory_space<vmem>>, vector<8x1024xf32>,
    %c71_i32 = arith.constant 71 : i32
    %61 = tpu.dynamic_rotate %52 by %c71_i32 dim 1 : vector<8x1024xf32>, i32 -> vector<8x1024xf32>
    %cst_12 = arith.constant 0.000000e+00 : f32
    %62 = vector.broadcast %cst_12 : f32 to vector<8x1024xf32>
    %63 = arith.select %27, %61, %62 : vector<8x1024xi1>, vector<8x1024xf32>
    %c16 = arith.constant 16 : index
    %c0_13 = arith.constant 0 : index
    %64 = vector.load %arg7[%c16, %c0_13] : memref<216x1024xf32, #tpu.memory_space<vmem>>, vector<8x1024xf32>
    tpu.vector_store %arg7[%c16, %c0_13], %63 {strides = array<i32>} : memref<216x1024xf32, #tpu.memory_space<vmem>>, vector<8x1024xf32>,
    %c65_i32 = arith.constant 65 : i32
    %65 = tpu.dynamic_rotate %52 by %c65_i32 dim 1 : vector<8x1024xf32>, i32 -> vector<8x1024xf32>
    %cst_14 = arith.constant 0.000000e+00 : f32
    %66 = vector.broadcast %cst_14 : f32 to vector<8x1024xf32>
    %67 = arith.select %28, %65, %66 : vector<8x1024xi1>, vector<8x1024xf32>
    %c24 = arith.constant 24 : index
    %c0_15 = arith.constant 0 : index
    %68 = vector.load %arg7[%c24, %c0_15] : memref<216x1024xf32, #tpu.memory_space<vmem>>, vector<8x1024xf32>
    tpu.vector_store %arg7[%c24, %c0_15], %67 {strides = array<i32>} : memref<216x1024xf32, #tpu.memory_space<vmem>>, vector<8x1024xf32>,
    %c64_i32 = arith.constant 64 : i32
    %69 = tpu.dynamic_rotate %52 by %c64_i32 dim 1 : vector<8x1024xf32>, i32 -> vector<8x1024xf32>
    %cst_16 = arith.constant 0.000000e+00 : f32
    %70 = vector.broadcast %cst_16 : f32 to vector<8x1024xf32>
    %71 = arith.select %12, %69, %70 : vector<8x1024xi1>, vector<8x1024xf32>
    %c32 = arith.constant 32 : index
    %c0_17 = arith.constant 0 : index
    %72 = vector.load %arg7[%c32, %c0_17] : memref<216x1024xf32, #tpu.memory_space<vmem>>, vector<8x1024xf32>
    tpu.vector_store %arg7[%c32, %c0_17], %71 {strides = array<i32>} : memref<216x1024xf32, #tpu.memory_space<vmem>>, vector<8x1024xf32>,
    %c63_i32 = arith.constant 63 : i32
    %73 = tpu.dynamic_rotate %52 by %c63_i32 dim 1 : vector<8x1024xf32>, i32 -> vector<8x1024xf32>
    %cst_18 = arith.constant 0.000000e+00 : f32
    %74 = vector.broadcast %cst_18 : f32 to vector<8x1024xf32>
    %75 = arith.select %29, %73, %74 : vector<8x1024xi1>, vector<8x1024xf32>
    %c40 = arith.constant 40 : index
    %c0_19 = arith.constant 0 : index
    %76 = vector.load %arg7[%c40, %c0_19] : memref<216x1024xf32, #tpu.memory_space<vmem>>, vector<8x1024xf32>
    tpu.vector_store %arg7[%c40, %c0_19], %75 {strides = array<i32>} : memref<216x1024xf32, #tpu.memory_space<vmem>>, vector<8x1024xf32>,
    %c57_i32 = arith.constant 57 : i32
    %77 = tpu.dynamic_rotate %52 by %c57_i32 dim 1 : vector<8x1024xf32>, i32 -> vector<8x1024xf32>
    %cst_20 = arith.constant 0.000000e+00 : f32
    %78 = vector.broadcast %cst_20 : f32 to vector<8x1024xf32>
    %79 = arith.select %31, %77, %78 : vector<8x1024xi1>, vector<8x1024xf32>
    %c48 = arith.constant 48 : index
    %c0_21 = arith.constant 0 : index
    %80 = vector.load %arg7[%c48, %c0_21] : memref<216x1024xf32, #tpu.memory_space<vmem>>, vector<8x1024xf32>
    tpu.vector_store %arg7[%c48, %c0_21], %79 {strides = array<i32>} : memref<216x1024xf32, #tpu.memory_space<vmem>>, vector<8x1024xf32>,
    %c56_i32 = arith.constant 56 : i32
    %81 = tpu.dynamic_rotate %52 by %c56_i32 dim 1 : vector<8x1024xf32>, i32 -> vector<8x1024xf32>
    %cst_22 = arith.constant 0.000000e+00 : f32
    %82 = vector.broadcast %cst_22 : f32 to vector<8x1024xf32>
    %83 = arith.select %32, %81, %82 : vector<8x1024xi1>, vector<8x1024xf32>
    %c56 = arith.constant 56 : index
    %c0_23 = arith.constant 0 : index
    %84 = vector.load %arg7[%c56, %c0_23] : memref<216x1024xf32, #tpu.memory_space<vmem>>, vector<8x1024xf32>
    tpu.vector_store %arg7[%c56, %c0_23], %83 {strides = array<i32>} : memref<216x1024xf32, #tpu.memory_space<vmem>>, vector<8x1024xf32>,
    %c55_i32 = arith.constant 55 : i32
    %85 = tpu.dynamic_rotate %52 by %c55_i32 dim 1 : vector<8x1024xf32>, i32 -> vector<8x1024xf32>
    %cst_24 = arith.constant 0.000000e+00 : f32
    %86 = vector.broadcast %cst_24 : f32 to vector<8x1024xf32>
    %87 = arith.select %34, %85, %86 : vector<8x1024xi1>, vector<8x1024xf32>
    %c64 = arith.constant 64 : index
    %c0_25 = arith.constant 0 : index
    %88 = vector.load %arg7[%c64, %c0_25] : memref<216x1024xf32, #tpu.memory_space<vmem>>, vector<8x1024xf32>
    tpu.vector_store %arg7[%c64, %c0_25], %87 {strides = array<i32>} : memref<216x1024xf32, #tpu.memory_space<vmem>>, vector<8x1024xf32>,
    %c9_i32 = arith.constant 9 : i32
    %89 = tpu.dynamic_rotate %52 by %c9_i32 dim 1 : vector<8x1024xf32>, i32 -> vector<8x1024xf32>
    %cst_26 = arith.constant 0.000000e+00 : f32
    %90 = vector.broadcast %cst_26 : f32 to vector<8x1024xf32>
    %91 = arith.select %35, %89, %90 : vector<8x1024xi1>, vector<8x1024xf32>
    %c72 = arith.constant 72 : index
    %c0_27 = arith.constant 0 : index
    %92 = vector.load %arg7[%c72, %c0_27] : memref<216x1024xf32, #tpu.memory_space<vmem>>, vector<8x1024xf32>
    tpu.vector_store %arg7[%c72, %c0_27], %91 {strides = array<i32>} : memref<216x1024xf32, #tpu.memory_space<vmem>>, vector<8x1024xf32>,
    %c8_i32 = arith.constant 8 : i32
    %93 = tpu.dynamic_rotate %52 by %c8_i32 dim 1 : vector<8x1024xf32>, i32 -> vector<8x1024xf32>
    %cst_28 = arith.constant 0.000000e+00 : f32
    %94 = vector.broadcast %cst_28 : f32 to vector<8x1024xf32>
    %95 = arith.select %16, %93, %94 : vector<8x1024xi1>, vector<8x1024xf32>
    %c80 = arith.constant 80 : index
    %c0_29 = arith.constant 0 : index
    %96 = vector.load %arg7[%c80, %c0_29] : memref<216x1024xf32, #tpu.memory_space<vmem>>, vector<8x1024xf32>
    tpu.vector_store %arg7[%c80, %c0_29], %95 {strides = array<i32>} : memref<216x1024xf32, #tpu.memory_space<vmem>>, vector<8x1024xf32>,
    %c7_i32_30 = arith.constant 7 : i32
    %97 = tpu.dynamic_rotate %52 by %c7_i32_30 dim 1 : vector<8x1024xf32>, i32 -> vector<8x1024xf32>
    %cst_31 = arith.constant 0.000000e+00 : f32
    %98 = vector.broadcast %cst_31 : f32 to vector<8x1024xf32>
    %99 = arith.select %36, %97, %98 : vector<8x1024xi1>, vector<8x1024xf32>
    %c88 = arith.constant 88 : index
    %c0_32 = arith.constant 0 : index
    %100 = vector.load %arg7[%c88, %c0_32] : memref<216x1024xf32, #tpu.memory_space<vmem>>, vector<8x1024xf32>
    tpu.vector_store %arg7[%c88, %c0_32], %99 {strides = array<i32>} : memref<216x1024xf32, #tpu.memory_space<vmem>>, vector<8x1024xf32>,
    %c1_i32_33 = arith.constant 1 : i32
    %101 = tpu.dynamic_rotate %52 by %c1_i32_33 dim 1 : vector<8x1024xf32>, i32 -> vector<8x1024xf32>
    %cst_34 = arith.constant 0.000000e+00 : f32
    %102 = vector.broadcast %cst_34 : f32 to vector<8x1024xf32>
    %103 = arith.select %20, %101, %102 : vector<8x1024xi1>, vector<8x1024xf32>
    %c96 = arith.constant 96 : index
    %c0_35 = arith.constant 0 : index
    %104 = vector.load %arg7[%c96, %c0_35] : memref<216x1024xf32, #tpu.memory_space<vmem>>, vector<8x1024xf32>
    tpu.vector_store %arg7[%c96, %c0_35], %103 {strides = array<i32>} : memref<216x1024xf32, #tpu.memory_space<vmem>>, vector<8x1024xf32>,
    %c104 = arith.constant 104 : index
    %c0_36 = arith.constant 0 : index
    %105 = vector.load %arg7[%c104, %c0_36] : memref<216x1024xf32, #tpu.memory_space<vmem>>, vector<8x1024xf32>
    tpu.vector_store %arg7[%c104, %c0_36], %52 {strides = array<i32>} : memref<216x1024xf32, #tpu.memory_space<vmem>>, vector<8x1024xf32>,
    %c1023_i32 = arith.constant 1023 : i32
    %106 = tpu.dynamic_rotate %52 by %c1023_i32 dim 1 : vector<8x1024xf32>, i32 -> vector<8x1024xf32>
    %cst_37 = arith.constant 0.000000e+00 : f32
    %107 = vector.broadcast %cst_37 : f32 to vector<8x1024xf32>
    %108 = arith.select %22, %106, %107 : vector<8x1024xi1>, vector<8x1024xf32>
    %c112 = arith.constant 112 : index
    %c0_38 = arith.constant 0 : index
    %109 = vector.load %arg7[%c112, %c0_38] : memref<216x1024xf32, #tpu.memory_space<vmem>>, vector<8x1024xf32>
    tpu.vector_store %arg7[%c112, %c0_38], %108 {strides = array<i32>} : memref<216x1024xf32, #tpu.memory_space<vmem>>, vector<8x1024xf32>,
    %c1017_i32 = arith.constant 1017 : i32
    %110 = tpu.dynamic_rotate %52 by %c1017_i32 dim 1 : vector<8x1024xf32>, i32 -> vector<8x1024xf32>
    %cst_39 = arith.constant 0.000000e+00 : f32
    %111 = vector.broadcast %cst_39 : f32 to vector<8x1024xf32>
    %112 = arith.select %37, %110, %111 : vector<8x1024xi1>, vector<8x1024xf32>
    %c120 = arith.constant 120 : index
    %c0_40 = arith.constant 0 : index
    %113 = vector.load %arg7[%c120, %c0_40] : memref<216x1024xf32, #tpu.memory_space<vmem>>, vector<8x1024xf32>
    tpu.vector_store %arg7[%c120, %c0_40], %112 {strides = array<i32>} : memref<216x1024xf32, #tpu.memory_space<vmem>>, vector<8x1024xf32>,
    %c1016_i32 = arith.constant 1016 : i32
    %114 = tpu.dynamic_rotate %52 by %c1016_i32 dim 1 : vector<8x1024xf32>, i32 -> vector<8x1024xf32>
    %cst_41 = arith.constant 0.000000e+00 : f32
    %115 = vector.broadcast %cst_41 : f32 to vector<8x1024xf32>
    %116 = arith.select %18, %114, %115 : vector<8x1024xi1>, vector<8x1024xf32>
    %c128 = arith.constant 128 : index
    %c0_42 = arith.constant 0 : index
    %117 = vector.load %arg7[%c128, %c0_42] : memref<216x1024xf32, #tpu.memory_space<vmem>>, vector<8x1024xf32>
    tpu.vector_store %arg7[%c128, %c0_42], %116 {strides = array<i32>} : memref<216x1024xf32, #tpu.memory_space<vmem>>, vector<8x1024xf32>,
    %c1015_i32 = arith.constant 1015 : i32
    %118 = tpu.dynamic_rotate %52 by %c1015_i32 dim 1 : vector<8x1024xf32>, i32 -> vector<8x1024xf32>
    %cst_43 = arith.constant 0.000000e+00 : f32
    %119 = vector.broadcast %cst_43 : f32 to vector<8x1024xf32>
    %120 = arith.select %38, %118, %119 : vector<8x1024xi1>, vector<8x1024xf32>
    %c136 = arith.constant 136 : index
    %c0_44 = arith.constant 0 : index
    %121 = vector.load %arg7[%c136, %c0_44] : memref<216x1024xf32, #tpu.memory_space<vmem>>, vector<8x1024xf32>
    tpu.vector_store %arg7[%c136, %c0_44], %120 {strides = array<i32>} : memref<216x1024xf32, #tpu.memory_space<vmem>>, vector<8x1024xf32>,
    %c969_i32 = arith.constant 969 : i32
    %122 = tpu.dynamic_rotate %52 by %c969_i32 dim 1 : vector<8x1024xf32>, i32 -> vector<8x1024xf32>
    %cst_45 = arith.constant 0.000000e+00 : f32
    %123 = vector.broadcast %cst_45 : f32 to vector<8x1024xf32>
    %124 = arith.select %40, %122, %123 : vector<8x1024xi1>, vector<8x1024xf32>
    %c144 = arith.constant 144 : index
    %c0_46 = arith.constant 0 : index
    %125 = vector.load %arg7[%c144, %c0_46] : memref<216x1024xf32, #tpu.memory_space<vmem>>, vector<8x1024xf32>
    tpu.vector_store %arg7[%c144, %c0_46], %124 {strides = array<i32>} : memref<216x1024xf32, #tpu.memory_space<vmem>>, vector<8x1024xf32>,
    %c968_i32 = arith.constant 968 : i32
    %126 = tpu.dynamic_rotate %52 by %c968_i32 dim 1 : vector<8x1024xf32>, i32 -> vector<8x1024xf32>
    %cst_47 = arith.constant 0.000000e+00 : f32
    %127 = vector.broadcast %cst_47 : f32 to vector<8x1024xf32>
    %128 = arith.select %41, %126, %127 : vector<8x1024xi1>, vector<8x1024xf32>
    %c152 = arith.constant 152 : index
    %c0_48 = arith.constant 0 : index
    %129 = vector.load %arg7[%c152, %c0_48] : memref<216x1024xf32, #tpu.memory_space<vmem>>, vector<8x1024xf32>
    tpu.vector_store %arg7[%c152, %c0_48], %128 {strides = array<i32>} : memref<216x1024xf32, #tpu.memory_space<vmem>>, vector<8x1024xf32>,
    %c967_i32 = arith.constant 967 : i32
    %130 = tpu.dynamic_rotate %52 by %c967_i32 dim 1 : vector<8x1024xf32>, i32 -> vector<8x1024xf32>
    %cst_49 = arith.constant 0.000000e+00 : f32
    %131 = vector.broadcast %cst_49 : f32 to vector<8x1024xf32>
    %132 = arith.select %43, %130, %131 : vector<8x1024xi1>, vector<8x1024xf32>
    %c160 = arith.constant 160 : index
    %c0_50 = arith.constant 0 : index
    %133 = vector.load %arg7[%c160, %c0_50] : memref<216x1024xf32, #tpu.memory_space<vmem>>, vector<8x1024xf32>
    tpu.vector_store %arg7[%c160, %c0_50], %132 {strides = array<i32>} : memref<216x1024xf32, #tpu.memory_space<vmem>>, vector<8x1024xf32>,
    %c961_i32 = arith.constant 961 : i32
    %134 = tpu.dynamic_rotate %52 by %c961_i32 dim 1 : vector<8x1024xf32>, i32 -> vector<8x1024xf32>
    %cst_51 = arith.constant 0.000000e+00 : f32
    %135 = vector.broadcast %cst_51 : f32 to vector<8x1024xf32>
    %136 = arith.select %44, %134, %135 : vector<8x1024xi1>, vector<8x1024xf32>
    %c168 = arith.constant 168 : index
    %c0_52 = arith.constant 0 : index
    %137 = vector.load %arg7[%c168, %c0_52] : memref<216x1024xf32, #tpu.memory_space<vmem>>, vector<8x1024xf32>
    tpu.vector_store %arg7[%c168, %c0_52], %136 {strides = array<i32>} : memref<216x1024xf32, #tpu.memory_space<vmem>>, vector<8x1024xf32>,
    %c960_i32 = arith.constant 960 : i32
    %138 = tpu.dynamic_rotate %52 by %c960_i32 dim 1 : vector<8x1024xf32>, i32 -> vector<8x1024xf32>
    %cst_53 = arith.constant 0.000000e+00 : f32
    %139 = vector.broadcast %cst_53 : f32 to vector<8x1024xf32>
    %140 = arith.select %14, %138, %139 : vector<8x1024xi1>, vector<8x1024xf32>
    %c176 = arith.constant 176 : index
    %c0_54 = arith.constant 0 : index
    %141 = vector.load %arg7[%c176, %c0_54] : memref<216x1024xf32, #tpu.memory_space<vmem>>, vector<8x1024xf32>
    tpu.vector_store %arg7[%c176, %c0_54], %140 {strides = array<i32>} : memref<216x1024xf32, #tpu.memory_space<vmem>>, vector<8x1024xf32>,
    %c959_i32 = arith.constant 959 : i32
    %142 = tpu.dynamic_rotate %52 by %c959_i32 dim 1 : vector<8x1024xf32>, i32 -> vector<8x1024xf32>
    %cst_55 = arith.constant 0.000000e+00 : f32
    %143 = vector.broadcast %cst_55 : f32 to vector<8x1024xf32>
    %144 = arith.select %45, %142, %143 : vector<8x1024xi1>, vector<8x1024xf32>
    %c184 = arith.constant 184 : index
    %c0_56 = arith.constant 0 : index
    %145 = vector.load %arg7[%c184, %c0_56] : memref<216x1024xf32, #tpu.memory_space<vmem>>, vector<8x1024xf32>
    tpu.vector_store %arg7[%c184, %c0_56], %144 {strides = array<i32>} : memref<216x1024xf32, #tpu.memory_space<vmem>>, vector<8x1024xf32>,
    %c953_i32 = arith.constant 953 : i32
    %146 = tpu.dynamic_rotate %52 by %c953_i32 dim 1 : vector<8x1024xf32>, i32 -> vector<8x1024xf32>
    %cst_57 = arith.constant 0.000000e+00 : f32
    %147 = vector.broadcast %cst_57 : f32 to vector<8x1024xf32>
    %148 = arith.select %47, %146, %147 : vector<8x1024xi1>, vector<8x1024xf32>
    %c192 = arith.constant 192 : index
    %c0_58 = arith.constant 0 : index
    %149 = vector.load %arg7[%c192, %c0_58] : memref<216x1024xf32, #tpu.memory_space<vmem>>, vector<8x1024xf32>
    tpu.vector_store %arg7[%c192, %c0_58], %148 {strides = array<i32>} : memref<216x1024xf32, #tpu.memory_space<vmem>>, vector<8x1024xf32>,
    %c952_i32 = arith.constant 952 : i32
    %150 = tpu.dynamic_rotate %52 by %c952_i32 dim 1 : vector<8x1024xf32>, i32 -> vector<8x1024xf32>
    %cst_59 = arith.constant 0.000000e+00 : f32
    %151 = vector.broadcast %cst_59 : f32 to vector<8x1024xf32>
    %152 = arith.select %48, %150, %151 : vector<8x1024xi1>, vector<8x1024xf32>
    %c200 = arith.constant 200 : index
    %c0_60 = arith.constant 0 : index
    %153 = vector.load %arg7[%c200, %c0_60] : memref<216x1024xf32, #tpu.memory_space<vmem>>, vector<8x1024xf32>
    tpu.vector_store %arg7[%c200, %c0_60], %152 {strides = array<i32>} : memref<216x1024xf32, #tpu.memory_space<vmem>>, vector<8x1024xf32>,
    %c951_i32 = arith.constant 951 : i32
    %154 = tpu.dynamic_rotate %52 by %c951_i32 dim 1 : vector<8x1024xf32>, i32 -> vector<8x1024xf32>
    %cst_61 = arith.constant 0.000000e+00 : f32
    %155 = vector.broadcast %cst_61 : f32 to vector<8x1024xf32>
    %156 = arith.select %50, %154, %155 : vector<8x1024xi1>, vector<8x1024xf32>
    %c208 = arith.constant 208 : index
    %c0_62 = arith.constant 0 : index
    %157 = vector.load %arg7[%c208, %c0_62] : memref<216x1024xf32, #tpu.memory_space<vmem>>, vector<8x1024xf32>
    tpu.vector_store %arg7[%c208, %c0_62], %156 {strides = array<i32>} : memref<216x1024xf32, #tpu.memory_space<vmem>>, vector<8x1024xf32>,
    %c0_63 = arith.constant 0 : index
    %c0_64 = arith.constant 0 : index
    %158 = vector.load %arg2[%c0_63, %c0_64] : memref<8x216xf32, #tpu.memory_space<vmem>>, vector<8x216xf32>
    %c0_65 = arith.constant 0 : index
    %c0_66 = arith.constant 0 : index
    %159 = vector.load %arg7[%c0_65, %c0_66] : memref<216x1024xf32, #tpu.memory_space<vmem>>, vector<216x1024xf32>
    %cst_67 = arith.constant dense<0.000000e+00> : vector<8x1024xf32>
    %160 = tpu.matmul %158, %159, %cst_67 {dimension_numbers = #tpu.dot_dimension_numbers<[1], [0], [0], [1], [0, 0, 1, 1], [], []>} : vector<8x216xf32>, vector<216x1024xf32>, vector<8x1024xf32> -> vector<8x1024xf32>
    %cst_68 = arith.constant 0.000000e+00 : f32
    %161 = vector.broadcast %cst_68 : f32 to vector<8x1024xf32>
    %162 = arith.maximumf %160, %161 : vector<8x1024xf32>
    %c73_i32_69 = arith.constant 73 : i32
    %163 = tpu.dynamic_rotate %162 by %c73_i32_69 dim 1 : vector<8x1024xf32>, i32 -> vector<8x1024xf32>
    %cst_70 = arith.constant 0.000000e+00 : f32
    %164 = vector.broadcast %cst_70 : f32 to vector<8x1024xf32>
    %165 = arith.select %24, %163, %164 : vector<8x1024xi1>, vector<8x1024xf32>
    %c0_71 = arith.constant 0 : index
    %c0_72 = arith.constant 0 : index
    %166 = vector.load %arg7[%c0_71, %c0_72] : memref<216x1024xf32, #tpu.memory_space<vmem>>, vector<8x1024xf32>
    tpu.vector_store %arg7[%c0_71, %c0_72], %165 {strides = array<i32>} : memref<216x1024xf32, #tpu.memory_space<vmem>>, vector<8x1024xf32>,
    %c72_i32_73 = arith.constant 72 : i32
    %167 = tpu.dynamic_rotate %162 by %c72_i32_73 dim 1 : vector<8x1024xf32>, i32 -> vector<8x1024xf32>
    %cst_74 = arith.constant 0.000000e+00 : f32
    %168 = vector.broadcast %cst_74 : f32 to vector<8x1024xf32>
    %169 = arith.select %25, %167, %168 : vector<8x1024xi1>, vector<8x1024xf32>
    %c8_75 = arith.constant 8 : index
    %c0_76 = arith.constant 0 : index
    %170 = vector.load %arg7[%c8_75, %c0_76] : memref<216x1024xf32, #tpu.memory_space<vmem>>, vector<8x1024xf32>
    tpu.vector_store %arg7[%c8_75, %c0_76], %169 {strides = array<i32>} : memref<216x1024xf32, #tpu.memory_space<vmem>>, vector<8x1024xf32>,
    %c71_i32_77 = arith.constant 71 : i32
    %171 = tpu.dynamic_rotate %162 by %c71_i32_77 dim 1 : vector<8x1024xf32>, i32 -> vector<8x1024xf32>
    %cst_78 = arith.constant 0.000000e+00 : f32
    %172 = vector.broadcast %cst_78 : f32 to vector<8x1024xf32>
    %173 = arith.select %27, %171, %172 : vector<8x1024xi1>, vector<8x1024xf32>
    %c16_79 = arith.constant 16 : index
    %c0_80 = arith.constant 0 : index
    %174 = vector.load %arg7[%c16_79, %c0_80] : memref<216x1024xf32, #tpu.memory_space<vmem>>, vector<8x1024xf32>
    tpu.vector_store %arg7[%c16_79, %c0_80], %173 {strides = array<i32>} : memref<216x1024xf32, #tpu.memory_space<vmem>>, vector<8x1024xf32>,
    %c65_i32_81 = arith.constant 65 : i32
    %175 = tpu.dynamic_rotate %162 by %c65_i32_81 dim 1 : vector<8x1024xf32>, i32 -> vector<8x1024xf32>
    %cst_82 = arith.constant 0.000000e+00 : f32
    %176 = vector.broadcast %cst_82 : f32 to vector<8x1024xf32>
    %177 = arith.select %28, %175, %176 : vector<8x1024xi1>, vector<8x1024xf32>
    %c24_83 = arith.constant 24 : index
    %c0_84 = arith.constant 0 : index
    %178 = vector.load %arg7[%c24_83, %c0_84] : memref<216x1024xf32, #tpu.memory_space<vmem>>, vector<8x1024xf32>
    tpu.vector_store %arg7[%c24_83, %c0_84], %177 {strides = array<i32>} : memref<216x1024xf32, #tpu.memory_space<vmem>>, vector<8x1024xf32>,
    %c64_i32_85 = arith.constant 64 : i32
    %179 = tpu.dynamic_rotate %162 by %c64_i32_85 dim 1 : vector<8x1024xf32>, i32 -> vector<8x1024xf32>
    %cst_86 = arith.constant 0.000000e+00 : f32
    %180 = vector.broadcast %cst_86 : f32 to vector<8x1024xf32>
    %181 = arith.select %12, %179, %180 : vector<8x1024xi1>, vector<8x1024xf32>
    %c32_87 = arith.constant 32 : index
    %c0_88 = arith.constant 0 : index
    %182 = vector.load %arg7[%c32_87, %c0_88] : memref<216x1024xf32, #tpu.memory_space<vmem>>, vector<8x1024xf32>
    tpu.vector_store %arg7[%c32_87, %c0_88], %181 {strides = array<i32>} : memref<216x1024xf32, #tpu.memory_space<vmem>>, vector<8x1024xf32>,
    %c63_i32_89 = arith.constant 63 : i32
    %183 = tpu.dynamic_rotate %162 by %c63_i32_89 dim 1 : vector<8x1024xf32>, i32 -> vector<8x1024xf32>
    %cst_90 = arith.constant 0.000000e+00 : f32
    %184 = vector.broadcast %cst_90 : f32 to vector<8x1024xf32>
    %185 = arith.select %29, %183, %184 : vector<8x1024xi1>, vector<8x1024xf32>
    %c40_91 = arith.constant 40 : index
    %c0_92 = arith.constant 0 : index
    %186 = vector.load %arg7[%c40_91, %c0_92] : memref<216x1024xf32, #tpu.memory_space<vmem>>, vector<8x1024xf32>
    tpu.vector_store %arg7[%c40_91, %c0_92], %185 {strides = array<i32>} : memref<216x1024xf32, #tpu.memory_space<vmem>>, vector<8x1024xf32>,
    %c57_i32_93 = arith.constant 57 : i32
    %187 = tpu.dynamic_rotate %162 by %c57_i32_93 dim 1 : vector<8x1024xf32>, i32 -> vector<8x1024xf32>
    %cst_94 = arith.constant 0.000000e+00 : f32
    %188 = vector.broadcast %cst_94 : f32 to vector<8x1024xf32>
    %189 = arith.select %31, %187, %188 : vector<8x1024xi1>, vector<8x1024xf32>
    %c48_95 = arith.constant 48 : index
    %c0_96 = arith.constant 0 : index
    %190 = vector.load %arg7[%c48_95, %c0_96] : memref<216x1024xf32, #tpu.memory_space<vmem>>, vector<8x1024xf32>
    tpu.vector_store %arg7[%c48_95, %c0_96], %189 {strides = array<i32>} : memref<216x1024xf32, #tpu.memory_space<vmem>>, vector<8x1024xf32>,
    %c56_i32_97 = arith.constant 56 : i32
    %191 = tpu.dynamic_rotate %162 by %c56_i32_97 dim 1 : vector<8x1024xf32>, i32 -> vector<8x1024xf32>
    %cst_98 = arith.constant 0.000000e+00 : f32
    %192 = vector.broadcast %cst_98 : f32 to vector<8x1024xf32>
    %193 = arith.select %32, %191, %192 : vector<8x1024xi1>, vector<8x1024xf32>
    %c56_99 = arith.constant 56 : index
    %c0_100 = arith.constant 0 : index
    %194 = vector.load %arg7[%c56_99, %c0_100] : memref<216x1024xf32, #tpu.memory_space<vmem>>, vector<8x1024xf32>
    tpu.vector_store %arg7[%c56_99, %c0_100], %193 {strides = array<i32>} : memref<216x1024xf32, #tpu.memory_space<vmem>>, vector<8x1024xf32>,
    %c55_i32_101 = arith.constant 55 : i32
    %195 = tpu.dynamic_rotate %162 by %c55_i32_101 dim 1 : vector<8x1024xf32>, i32 -> vector<8x1024xf32>
    %cst_102 = arith.constant 0.000000e+00 : f32
    %196 = vector.broadcast %cst_102 : f32 to vector<8x1024xf32>
    %197 = arith.select %34, %195, %196 : vector<8x1024xi1>, vector<8x1024xf32>
    %c64_103 = arith.constant 64 : index
    %c0_104 = arith.constant 0 : index
    %198 = vector.load %arg7[%c64_103, %c0_104] : memref<216x1024xf32, #tpu.memory_space<vmem>>, vector<8x1024xf32>
    tpu.vector_store %arg7[%c64_103, %c0_104], %197 {strides = array<i32>} : memref<216x1024xf32, #tpu.memory_space<vmem>>, vector<8x1024xf32>,
    %c9_i32_105 = arith.constant 9 : i32
    %199 = tpu.dynamic_rotate %162 by %c9_i32_105 dim 1 : vector<8x1024xf32>, i32 -> vector<8x1024xf32>
    %cst_106 = arith.constant 0.000000e+00 : f32
    %200 = vector.broadcast %cst_106 : f32 to vector<8x1024xf32>
    %201 = arith.select %35, %199, %200 : vector<8x1024xi1>, vector<8x1024xf32>
    %c72_107 = arith.constant 72 : index
    %c0_108 = arith.constant 0 : index
    %202 = vector.load %arg7[%c72_107, %c0_108] : memref<216x1024xf32, #tpu.memory_space<vmem>>, vector<8x1024xf32>
    tpu.vector_store %arg7[%c72_107, %c0_108], %201 {strides = array<i32>} : memref<216x1024xf32, #tpu.memory_space<vmem>>, vector<8x1024xf32>,
    %c8_i32_109 = arith.constant 8 : i32
    %203 = tpu.dynamic_rotate %162 by %c8_i32_109 dim 1 : vector<8x1024xf32>, i32 -> vector<8x1024xf32>
    %cst_110 = arith.constant 0.000000e+00 : f32
    %204 = vector.broadcast %cst_110 : f32 to vector<8x1024xf32>
    %205 = arith.select %16, %203, %204 : vector<8x1024xi1>, vector<8x1024xf32>
    %c80_111 = arith.constant 80 : index
    %c0_112 = arith.constant 0 : index
    %206 = vector.load %arg7[%c80_111, %c0_112] : memref<216x1024xf32, #tpu.memory_space<vmem>>, vector<8x1024xf32>
    tpu.vector_store %arg7[%c80_111, %c0_112], %205 {strides = array<i32>} : memref<216x1024xf32, #tpu.memory_space<vmem>>, vector<8x1024xf32>,
    %c7_i32_113 = arith.constant 7 : i32
    %207 = tpu.dynamic_rotate %162 by %c7_i32_113 dim 1 : vector<8x1024xf32>, i32 -> vector<8x1024xf32>
    %cst_114 = arith.constant 0.000000e+00 : f32
    %208 = vector.broadcast %cst_114 : f32 to vector<8x1024xf32>
    %209 = arith.select %36, %207, %208 : vector<8x1024xi1>, vector<8x1024xf32>
    %c88_115 = arith.constant 88 : index
    %c0_116 = arith.constant 0 : index
    %210 = vector.load %arg7[%c88_115, %c0_116] : memref<216x1024xf32, #tpu.memory_space<vmem>>, vector<8x1024xf32>
    tpu.vector_store %arg7[%c88_115, %c0_116], %209 {strides = array<i32>} : memref<216x1024xf32, #tpu.memory_space<vmem>>, vector<8x1024xf32>,
    %c1_i32_117 = arith.constant 1 : i32
    %211 = tpu.dynamic_rotate %162 by %c1_i32_117 dim 1 : vector<8x1024xf32>, i32 -> vector<8x1024xf32>
    %cst_118 = arith.constant 0.000000e+00 : f32
    %212 = vector.broadcast %cst_118 : f32 to vector<8x1024xf32>
    %213 = arith.select %20, %211, %212 : vector<8x1024xi1>, vector<8x1024xf32>
    %c96_119 = arith.constant 96 : index
    %c0_120 = arith.constant 0 : index
    %214 = vector.load %arg7[%c96_119, %c0_120] : memref<216x1024xf32, #tpu.memory_space<vmem>>, vector<8x1024xf32>
    tpu.vector_store %arg7[%c96_119, %c0_120], %213 {strides = array<i32>} : memref<216x1024xf32, #tpu.memory_space<vmem>>, vector<8x1024xf32>,
    %c104_121 = arith.constant 104 : index
    %c0_122 = arith.constant 0 : index
    %215 = vector.load %arg7[%c104_121, %c0_122] : memref<216x1024xf32, #tpu.memory_space<vmem>>, vector<8x1024xf32>
    tpu.vector_store %arg7[%c104_121, %c0_122], %162 {strides = array<i32>} : memref<216x1024xf32, #tpu.memory_space<vmem>>, vector<8x1024xf32>,
    %c1023_i32_123 = arith.constant 1023 : i32
    %216 = tpu.dynamic_rotate %162 by %c1023_i32_123 dim 1 : vector<8x1024xf32>, i32 -> vector<8x1024xf32>
    %cst_124 = arith.constant 0.000000e+00 : f32
    %217 = vector.broadcast %cst_124 : f32 to vector<8x1024xf32>
    %218 = arith.select %22, %216, %217 : vector<8x1024xi1>, vector<8x1024xf32>
    %c112_125 = arith.constant 112 : index
    %c0_126 = arith.constant 0 : index
    %219 = vector.load %arg7[%c112_125, %c0_126] : memref<216x1024xf32, #tpu.memory_space<vmem>>, vector<8x1024xf32>
    tpu.vector_store %arg7[%c112_125, %c0_126], %218 {strides = array<i32>} : memref<216x1024xf32, #tpu.memory_space<vmem>>, vector<8x1024xf32>,
    %c1017_i32_127 = arith.constant 1017 : i32
    %220 = tpu.dynamic_rotate %162 by %c1017_i32_127 dim 1 : vector<8x1024xf32>, i32 -> vector<8x1024xf32>
    %cst_128 = arith.constant 0.000000e+00 : f32
    %221 = vector.broadcast %cst_128 : f32 to vector<8x1024xf32>
    %222 = arith.select %37, %220, %221 : vector<8x1024xi1>, vector<8x1024xf32>
    %c120_129 = arith.constant 120 : index
    %c0_130 = arith.constant 0 : index
    %223 = vector.load %arg7[%c120_129, %c0_130] : memref<216x1024xf32, #tpu.memory_space<vmem>>, vector<8x1024xf32>
    tpu.vector_store %arg7[%c120_129, %c0_130], %222 {strides = array<i32>} : memref<216x1024xf32, #tpu.memory_space<vmem>>, vector<8x1024xf32>,
    %c1016_i32_131 = arith.constant 1016 : i32
    %224 = tpu.dynamic_rotate %162 by %c1016_i32_131 dim 1 : vector<8x1024xf32>, i32 -> vector<8x1024xf32>
    %cst_132 = arith.constant 0.000000e+00 : f32
    %225 = vector.broadcast %cst_132 : f32 to vector<8x1024xf32>
    %226 = arith.select %18, %224, %225 : vector<8x1024xi1>, vector<8x1024xf32>
    %c128_133 = arith.constant 128 : index
    %c0_134 = arith.constant 0 : index
    %227 = vector.load %arg7[%c128_133, %c0_134] : memref<216x1024xf32, #tpu.memory_space<vmem>>, vector<8x1024xf32>
    tpu.vector_store %arg7[%c128_133, %c0_134], %226 {strides = array<i32>} : memref<216x1024xf32, #tpu.memory_space<vmem>>, vector<8x1024xf32>,
    %c1015_i32_135 = arith.constant 1015 : i32
    %228 = tpu.dynamic_rotate %162 by %c1015_i32_135 dim 1 : vector<8x1024xf32>, i32 -> vector<8x1024xf32>
    %cst_136 = arith.constant 0.000000e+00 : f32
    %229 = vector.broadcast %cst_136 : f32 to vector<8x1024xf32>
    %230 = arith.select %38, %228, %229 : vector<8x1024xi1>, vector<8x1024xf32>
    %c136_137 = arith.constant 136 : index
    %c0_138 = arith.constant 0 : index
    %231 = vector.load %arg7[%c136_137, %c0_138] : memref<216x1024xf32, #tpu.memory_space<vmem>>, vector<8x1024xf32>
    tpu.vector_store %arg7[%c136_137, %c0_138], %230 {strides = array<i32>} : memref<216x1024xf32, #tpu.memory_space<vmem>>, vector<8x1024xf32>,
    %c969_i32_139 = arith.constant 969 : i32
    %232 = tpu.dynamic_rotate %162 by %c969_i32_139 dim 1 : vector<8x1024xf32>, i32 -> vector<8x1024xf32>
    %cst_140 = arith.constant 0.000000e+00 : f32
    %233 = vector.broadcast %cst_140 : f32 to vector<8x1024xf32>
    %234 = arith.select %40, %232, %233 : vector<8x1024xi1>, vector<8x1024xf32>
    %c144_141 = arith.constant 144 : index
    %c0_142 = arith.constant 0 : index
    %235 = vector.load %arg7[%c144_141, %c0_142] : memref<216x1024xf32, #tpu.memory_space<vmem>>, vector<8x1024xf32>
    tpu.vector_store %arg7[%c144_141, %c0_142], %234 {strides = array<i32>} : memref<216x1024xf32, #tpu.memory_space<vmem>>, vector<8x1024xf32>,
    %c968_i32_143 = arith.constant 968 : i32
    %236 = tpu.dynamic_rotate %162 by %c968_i32_143 dim 1 : vector<8x1024xf32>, i32 -> vector<8x1024xf32>
    %cst_144 = arith.constant 0.000000e+00 : f32
    %237 = vector.broadcast %cst_144 : f32 to vector<8x1024xf32>
    %238 = arith.select %41, %236, %237 : vector<8x1024xi1>, vector<8x1024xf32>
    %c152_145 = arith.constant 152 : index
    %c0_146 = arith.constant 0 : index
    %239 = vector.load %arg7[%c152_145, %c0_146] : memref<216x1024xf32, #tpu.memory_space<vmem>>, vector<8x1024xf32>
    tpu.vector_store %arg7[%c152_145, %c0_146], %238 {strides = array<i32>} : memref<216x1024xf32, #tpu.memory_space<vmem>>, vector<8x1024xf32>,
    %c967_i32_147 = arith.constant 967 : i32
    %240 = tpu.dynamic_rotate %162 by %c967_i32_147 dim 1 : vector<8x1024xf32>, i32 -> vector<8x1024xf32>
    %cst_148 = arith.constant 0.000000e+00 : f32
    %241 = vector.broadcast %cst_148 : f32 to vector<8x1024xf32>
    %242 = arith.select %43, %240, %241 : vector<8x1024xi1>, vector<8x1024xf32>
    %c160_149 = arith.constant 160 : index
    %c0_150 = arith.constant 0 : index
    %243 = vector.load %arg7[%c160_149, %c0_150] : memref<216x1024xf32, #tpu.memory_space<vmem>>, vector<8x1024xf32>
    tpu.vector_store %arg7[%c160_149, %c0_150], %242 {strides = array<i32>} : memref<216x1024xf32, #tpu.memory_space<vmem>>, vector<8x1024xf32>,
    %c961_i32_151 = arith.constant 961 : i32
    %244 = tpu.dynamic_rotate %162 by %c961_i32_151 dim 1 : vector<8x1024xf32>, i32 -> vector<8x1024xf32>
    %cst_152 = arith.constant 0.000000e+00 : f32
    %245 = vector.broadcast %cst_152 : f32 to vector<8x1024xf32>
    %246 = arith.select %44, %244, %245 : vector<8x1024xi1>, vector<8x1024xf32>
    %c168_153 = arith.constant 168 : index
    %c0_154 = arith.constant 0 : index
    %247 = vector.load %arg7[%c168_153, %c0_154] : memref<216x1024xf32, #tpu.memory_space<vmem>>, vector<8x1024xf32>
    tpu.vector_store %arg7[%c168_153, %c0_154], %246 {strides = array<i32>} : memref<216x1024xf32, #tpu.memory_space<vmem>>, vector<8x1024xf32>,
    %c960_i32_155 = arith.constant 960 : i32
    %248 = tpu.dynamic_rotate %162 by %c960_i32_155 dim 1 : vector<8x1024xf32>, i32 -> vector<8x1024xf32>
    %cst_156 = arith.constant 0.000000e+00 : f32
    %249 = vector.broadcast %cst_156 : f32 to vector<8x1024xf32>
    %250 = arith.select %14, %248, %249 : vector<8x1024xi1>, vector<8x1024xf32>
    %c176_157 = arith.constant 176 : index
    %c0_158 = arith.constant 0 : index
    %251 = vector.load %arg7[%c176_157, %c0_158] : memref<216x1024xf32, #tpu.memory_space<vmem>>, vector<8x1024xf32>
    tpu.vector_store %arg7[%c176_157, %c0_158], %250 {strides = array<i32>} : memref<216x1024xf32, #tpu.memory_space<vmem>>, vector<8x1024xf32>,
    %c959_i32_159 = arith.constant 959 : i32
    %252 = tpu.dynamic_rotate %162 by %c959_i32_159 dim 1 : vector<8x1024xf32>, i32 -> vector<8x1024xf32>
    %cst_160 = arith.constant 0.000000e+00 : f32
    %253 = vector.broadcast %cst_160 : f32 to vector<8x1024xf32>
    %254 = arith.select %45, %252, %253 : vector<8x1024xi1>, vector<8x1024xf32>
    %c184_161 = arith.constant 184 : index
    %c0_162 = arith.constant 0 : index
    %255 = vector.load %arg7[%c184_161, %c0_162] : memref<216x1024xf32, #tpu.memory_space<vmem>>, vector<8x1024xf32>
    tpu.vector_store %arg7[%c184_161, %c0_162], %254 {strides = array<i32>} : memref<216x1024xf32, #tpu.memory_space<vmem>>, vector<8x1024xf32>,
    %c953_i32_163 = arith.constant 953 : i32
    %256 = tpu.dynamic_rotate %162 by %c953_i32_163 dim 1 : vector<8x1024xf32>, i32 -> vector<8x1024xf32>
    %cst_164 = arith.constant 0.000000e+00 : f32
    %257 = vector.broadcast %cst_164 : f32 to vector<8x1024xf32>
    %258 = arith.select %47, %256, %257 : vector<8x1024xi1>, vector<8x1024xf32>
    %c192_165 = arith.constant 192 : index
    %c0_166 = arith.constant 0 : index
    %259 = vector.load %arg7[%c192_165, %c0_166] : memref<216x1024xf32, #tpu.memory_space<vmem>>, vector<8x1024xf32>
    tpu.vector_store %arg7[%c192_165, %c0_166], %258 {strides = array<i32>} : memref<216x1024xf32, #tpu.memory_space<vmem>>, vector<8x1024xf32>,
    %c952_i32_167 = arith.constant 952 : i32
    %260 = tpu.dynamic_rotate %162 by %c952_i32_167 dim 1 : vector<8x1024xf32>, i32 -> vector<8x1024xf32>
    %cst_168 = arith.constant 0.000000e+00 : f32
    %261 = vector.broadcast %cst_168 : f32 to vector<8x1024xf32>
    %262 = arith.select %48, %260, %261 : vector<8x1024xi1>, vector<8x1024xf32>
    %c200_169 = arith.constant 200 : index
    %c0_170 = arith.constant 0 : index
    %263 = vector.load %arg7[%c200_169, %c0_170] : memref<216x1024xf32, #tpu.memory_space<vmem>>, vector<8x1024xf32>
    tpu.vector_store %arg7[%c200_169, %c0_170], %262 {strides = array<i32>} : memref<216x1024xf32, #tpu.memory_space<vmem>>, vector<8x1024xf32>,
    %c951_i32_171 = arith.constant 951 : i32
    %264 = tpu.dynamic_rotate %162 by %c951_i32_171 dim 1 : vector<8x1024xf32>, i32 -> vector<8x1024xf32>
    %cst_172 = arith.constant 0.000000e+00 : f32
    %265 = vector.broadcast %cst_172 : f32 to vector<8x1024xf32>
    %266 = arith.select %50, %264, %265 : vector<8x1024xi1>, vector<8x1024xf32>
    %c208_173 = arith.constant 208 : index
    %c0_174 = arith.constant 0 : index
    %267 = vector.load %arg7[%c208_173, %c0_174] : memref<216x1024xf32, #tpu.memory_space<vmem>>, vector<8x1024xf32>
    tpu.vector_store %arg7[%c208_173, %c0_174], %266 {strides = array<i32>} : memref<216x1024xf32, #tpu.memory_space<vmem>>, vector<8x1024xf32>,
    %c0_175 = arith.constant 0 : index
    %c0_176 = arith.constant 0 : index
    %268 = vector.load %arg3[%c0_175, %c0_176] : memref<8x216xf32, #tpu.memory_space<vmem>>, vector<8x216xf32>
    %c0_177 = arith.constant 0 : index
    %c0_178 = arith.constant 0 : index
    %269 = vector.load %arg7[%c0_177, %c0_178] : memref<216x1024xf32, #tpu.memory_space<vmem>>, vector<216x1024xf32>
    %cst_179 = arith.constant dense<0.000000e+00> : vector<8x1024xf32>
    %270 = tpu.matmul %268, %269, %cst_179 {dimension_numbers = #tpu.dot_dimension_numbers<[1], [0], [0], [1], [0, 0, 1, 1], [], []>} : vector<8x216xf32>, vector<216x1024xf32>, vector<8x1024xf32> -> vector<8x1024xf32>
    %271 = vector.extract_strided_slice %270 {offsets = [0, 0], sizes = [8, 512], strides = [1, 1]} : vector<8x1024xf32> to vector<8x512xf32>
    %cst_180 = arith.constant dense<0.000000e+00> : vector<8xf32>
    %272 = vector.multi_reduction <add>, %271, %cst_180 [1] : vector<8x512xf32> to vector<8xf32>
    %273 = vector.shape_cast %272 : vector<8xf32> to vector<8x1xf32>
    %cst_181 = arith.constant 5.120000e+02 : f32
    %274 = vector.broadcast %cst_181 : f32 to vector<8x1xf32>
    %275 = arith.divf %273, %274 : vector<8x1xf32>
    %c0_182 = arith.constant 0 : index
    %c0_183 = arith.constant 0 : index
    %276 = vector.load %arg4[%c0_182, %c0_183] : memref<8x2xf32, #tpu.memory_space<vmem>>, vector<8x2xf32>
    %277 = vector.broadcast %275 : vector<8x1xf32> to vector<8x2xf32>
    %278 = arith.mulf %276, %277 : vector<8x2xf32>
    %cst_184 = arith.constant dense<0.000000e+00> : vector<2xf32>
    %279 = vector.multi_reduction <add>, %278, %cst_184 [0] : vector<8x2xf32> to vector<2xf32>
    %280 = vector.shape_cast %279 : vector<2xf32> to vector<1x2xf32>
    %cst_185 = arith.constant 0.000000e+00 : f32
    %281 = vector.broadcast %cst_185 : f32 to vector<1x2xf32>
    %282 = arith.maximumf %280, %281 : vector<1x2xf32>
    %c0_186 = arith.constant 0 : index
    %c0_187 = arith.constant 0 : index
    %283 = vector.load %arg5[%c0_186, %c0_187] : memref<8x2xf32, #tpu.memory_space<vmem>>, vector<8x2xf32>
    %284 = vector.broadcast %282 : vector<1x2xf32> to vector<8x2xf32>
    %285 = arith.mulf %283, %284 : vector<8x2xf32>
    %cst_188 = arith.constant dense<0.000000e+00> : vector<8xf32>
    %286 = vector.multi_reduction <add>, %285, %cst_188 [1] : vector<8x2xf32> to vector<8xf32>
    %287 = vector.shape_cast %286 : vector<8xf32> to vector<8x1xf32>
    %288 = arith.negf %287 : vector<8x1xf32>
    %289 = math.exp %288 : vector<8x1xf32>
    %cst_189 = arith.constant 1.000000e+00 : f32
    %290 = vector.broadcast %cst_189 : f32 to vector<8x1xf32>
    %291 = arith.addf %290, %289 : vector<8x1xf32>
    %292 = arith.divf %290, %291 : vector<8x1xf32>
    %293 = vector.broadcast %292 : vector<8x1xf32> to vector<8x512xf32>
    %294 = arith.mulf %271, %293 : vector<8x512xf32>
    %295 = vector.extract_strided_slice %52 {offsets = [0, 0], sizes = [8, 512], strides = [1, 1]} : vector<8x1024xf32> to vector<8x512xf32>
    %296 = arith.addf %294, %295 : vector<8x512xf32>
    %c0_190 = arith.constant 0 : index
    %c0_191 = arith.constant 0 : index
    %c0_192 = arith.constant 0 : index
    %297 = vector.load %arg6[%c0_190, %c0_191, %c0_192] : memref<1x8x1024xf32, #tpu.memory_space<vmem>>, vector<1x8x512xf32>
    %298 = vector.shape_cast %297 : vector<1x8x512xf32> to vector<8x512xf32>
    %299 = vector.shape_cast %296 : vector<8x512xf32> to vector<1x8x512xf32>
    tpu.vector_store %arg6[%c0_190, %c0_191, %c0_192], %299 {strides = array<i32>} : memref<1x8x1024xf32, #tpu.memory_space<vmem>>, vector<1x8x512xf32>,
    %300 = vector.extract_strided_slice %270 {offsets = [0, 512], sizes = [8, 512], strides = [1, 1]} : vector<8x1024xf32> to vector<8x512xf32>
    %cst_193 = arith.constant dense<0.000000e+00> : vector<8xf32>
    %301 = vector.multi_reduction <add>, %300, %cst_193 [1] : vector<8x512xf32> to vector<8xf32>
    %302 = vector.shape_cast %301 : vector<8xf32> to vector<8x1xf32>
    %cst_194 = arith.constant 5.120000e+02 : f32
    %303 = vector.broadcast %cst_194 : f32 to vector<8x1xf32>
    %304 = arith.divf %302, %303 : vector<8x1xf32>
    %c0_195 = arith.constant 0 : index
    %c0_196 = arith.constant 0 : index
    %305 = vector.load %arg4[%c0_195, %c0_196] : memref<8x2xf32, #tpu.memory_space<vmem>>, vector<8x2xf32>
    %306 = vector.broadcast %304 : vector<8x1xf32> to vector<8x2xf32>
    %307 = arith.mulf %305, %306 : vector<8x2xf32>
    %cst_197 = arith.constant dense<0.000000e+00> : vector<2xf32>
    %308 = vector.multi_reduction <add>, %307, %cst_197 [0] : vector<8x2xf32> to vector<2xf32>
    %309 = vector.shape_cast %308 : vector<2xf32> to vector<1x2xf32>
    %cst_198 = arith.constant 0.000000e+00 : f32
    %310 = vector.broadcast %cst_198 : f32 to vector<1x2xf32>
    %311 = arith.maximumf %309, %310 : vector<1x2xf32>
    %c0_199 = arith.constant 0 : index
    %c0_200 = arith.constant 0 : index
    %312 = vector.load %arg5[%c0_199, %c0_200] : memref<8x2xf32, #tpu.memory_space<vmem>>, vector<8x2xf32>
    %313 = vector.broadcast %311 : vector<1x2xf32> to vector<8x2xf32>
    %314 = arith.mulf %312, %313 : vector<8x2xf32>
    %cst_201 = arith.constant dense<0.000000e+00> : vector<8xf32>
    %315 = vector.multi_reduction <add>, %314, %cst_201 [1] : vector<8x2xf32> to vector<8xf32>
    %316 = vector.shape_cast %315 : vector<8xf32> to vector<8x1xf32>
    %317 = arith.negf %316 : vector<8x1xf32>
    %318 = math.exp %317 : vector<8x1xf32>
    %cst_202 = arith.constant 1.000000e+00 : f32
    %319 = vector.broadcast %cst_202 : f32 to vector<8x1xf32>
    %320 = arith.addf %319, %318 : vector<8x1xf32>
    %321 = arith.divf %319, %320 : vector<8x1xf32>
    %322 = vector.broadcast %321 : vector<8x1xf32> to vector<8x512xf32>
    %323 = arith.mulf %300, %322 : vector<8x512xf32>
    %324 = vector.extract_strided_slice %52 {offsets = [0, 512], sizes = [8, 512], strides = [1, 1]} : vector<8x1024xf32> to vector<8x512xf32>
    %325 = arith.addf %323, %324 : vector<8x512xf32>
    %c0_203 = arith.constant 0 : index
    %c0_204 = arith.constant 0 : index
    %c512 = arith.constant 512 : index
    %326 = vector.load %arg6[%c0_203, %c0_204, %c512] : memref<1x8x1024xf32, #tpu.memory_space<vmem>>, vector<1x8x512xf32>
    %327 = vector.shape_cast %326 : vector<1x8x512xf32> to vector<8x512xf32>
    %328 = vector.shape_cast %325 : vector<8x512xf32> to vector<1x8x512xf32>
    tpu.vector_store %arg6[%c0_203, %c0_204, %c512], %328 {strides = array<i32>} : memref<1x8x1024xf32, #tpu.memory_space<vmem>>, vector<1x8x512xf32>,
    return
  }
  func.func @transform_0(%arg0: i32) -> (i32, i32, i32) {
    %c0_i32 = arith.constant 0 : i32
    %c0_i32_0 = arith.constant 0 : i32
    %c0_i32_1 = arith.constant 0 : i32
    return %arg0, %c0_i32, %c0_i32_0 : i32, i32, i32
  }
  func.func @transform_1(%arg0: i32) -> (i32, i32) {
    %c0_i32 = arith.constant 0 : i32
    %c0_i32_0 = arith.constant 0 : i32
    %c0_i32_1 = arith.constant 0 : i32
    return %c0_i32, %c0_i32_0 : i32, i32
  }
  func.func @transform_2(%arg0: i32) -> (i32, i32) {
    %c0_i32 = arith.constant 0 : i32
    %c0_i32_0 = arith.constant 0 : i32
    %c0_i32_1 = arith.constant 0 : i32
    return %c0_i32, %c0_i32_0 : i32, i32
  }
  func.func @transform_3(%arg0: i32) -> (i32, i32) {
    %c0_i32 = arith.constant 0 : i32
    %c0_i32_0 = arith.constant 0 : i32
    %c0_i32_1 = arith.constant 0 : i32
    return %c0_i32, %c0_i32_0 : i32, i32
  }
  func.func @transform_4(%arg0: i32) -> (i32, i32) {
    %c0_i32 = arith.constant 0 : i32
    %c0_i32_0 = arith.constant 0 : i32
    %c0_i32_1 = arith.constant 0 : i32
    return %c0_i32, %c0_i32_0 : i32, i32
  }
  func.func @transform_5(%arg0: i32) -> (i32, i32, i32) {
    %c0_i32 = arith.constant 0 : i32
    %c0_i32_0 = arith.constant 0 : i32
    %c0_i32_1 = arith.constant 0 : i32
    return %arg0, %c0_i32, %c0_i32_0 : i32, i32, i32
  }
}

</mosaic_0001>

<llo_original>
// kernel: tpu_custom_call.1
$region0: #{tpu_custom_call.1}
  #allocation0 [shape = 'u32[]', space=smem, size = 0x4, offset = 0x4, fixed_abs, tag = 'smem constant byte address 0x4 - core index']
  #allocation1 [shape = 'u32[72,128]{1,0:T(1,128)}', space=vmem, size = 0x9000, scoped, tag = 'internal scratch']
  %s0 = inlined_call_operand.hbm [shape: f32[8,128], index: 0, kind: input, shape index: {}]
  %s1 = inlined_call_operand.hbm [shape: f32[8,128], index: 1, kind: output, shape index: {}]
  %s2 = sld [smem:[#allocation0]]
  $region18: #{tpu_custom_call.1} parent=0
    _
  %s4 = ssub.s32 1, %s2
  %s5 = scalar_select 0, %s4, %s2
  $region1: #{tpu_custom_call.1} parent=0
    #allocation2 [shape = 'u8[4096]{0}', space=vmem, size = 0x1000, scoped, tag = 'input window, operand 0, single buffered']
    #allocation3 [shape = 's32[1]{0}', space=sflag, size = 0x4, scoped, tag = 'scoped memory for tpu_custom_call.1']
    #allocation4 [shape = 's32[1]{0}', space=sflag, size = 0x4, scoped, tag = 'scoped memory for tpu_custom_call.1']
    #allocation5 [shape = 'u8[4096]{0}', space=vmem, size = 0x1000, scoped, tag = 'output window, operand 0, single buffered']
    %6 = vsyncpa [#allocation3], 0
    %7 = vsyncpa [#allocation4], 0
    // Predicated region
    $region2: #{tpu_custom_call.1} parent=1 // pred_check
      _
    $region3: #{tpu_custom_call.1} parent=1 // pred_check_branch
      %9 = sbr.rel (0) target = $region5
    $region4: #{tpu_custom_call.1} parent=1 // pred_region
      %11 = vsyncadd [#allocation3], 0
      %s13 = sshll.u32 %s0, 4
      %s14 = int_to_ptr.hbm [resolvable:$true] %s13
      %s15 = sshll.u32 [#allocation2], 4
      %s16 = int_to_ptr.vmem [resolvable:$true] %s15
      %18 = dma.hbm_to_vmem [thread:$0]  %s14, 128, %s16, [#allocation3]
    $region5: #{tpu_custom_call.1} parent=1 // pred_fallthru
      _
    // Predicated region
    $region6: #{tpu_custom_call.1} parent=1 // pred_check
      _
    $region7: #{tpu_custom_call.1} parent=1 // pred_check_branch
      %20 = sbr.rel (0) target = $region9
    $region8: #{tpu_custom_call.1} parent=1 // pred_region
      %22 = dma.done [#allocation3], 128
    $region9: #{tpu_custom_call.1} parent=1 // pred_fallthru
      _
    %v23 = vld [vmem:[#allocation2] sm:$0xff]
    %24 = vrot.lane.b32.xlu0 %v23, 1
    %v25 = vpop.permute.xlu0 %24
    %26 = vst [vmem:[#allocation5] sm:$0xff] %v25
    // Predicated region
    $region10: #{tpu_custom_call.1} parent=1 // pred_check
      _
    $region11: #{tpu_custom_call.1} parent=1 // pred_check_branch
      %28 = sbr.rel (0) target = $region13
    $region12: #{tpu_custom_call.1} parent=1 // pred_region
      %30 = vsyncadd [#allocation4], 0
      %s32 = sshll.u32 [#allocation5], 4
      %s33 = int_to_ptr.vmem [resolvable:$true] %s32
      %s34 = sshll.u32 %s1, 4
      %s35 = int_to_ptr.hbm [resolvable:$true] %s34
      %37 = dma.vmem_to_hbm [thread:$0]  %s33, 128, %s35, [#allocation4]
    $region13: #{tpu_custom_call.1} parent=1 // pred_fallthru
      _
    // Predicated region
    $region14: #{tpu_custom_call.1} parent=1 // pred_check
      _
    $region15: #{tpu_custom_call.1} parent=1 // pred_check_branch
      %39 = sbr.rel (0) target = $region17
    $region16: #{tpu_custom_call.1} parent=1 // pred_region
      %41 = dma.done [#allocation4], 128
    $region17: #{tpu_custom_call.1} parent=1 // pred_fallthru
      _
    %42 = vsyncpa [#allocation3], 1
    %43 = vsyncpa [#allocation4], 1

// kernel: tpu_custom_call.1
$region0: #{tpu_custom_call.1}
  #allocation0 [shape = 'u32[]', space=smem, size = 0x4, offset = 0x4, fixed_abs, tag = 'smem constant byte address 0x4 - core index']
  #allocation1 [shape = 'u32[72,128]{1,0:T(1,128)}', space=vmem, size = 0x9000, scoped, tag = 'internal scratch']
  #allocation2 [shape = 'f32[216,1024]{1,0:T(8,128)}', space=vmem, size = 0xd8000, scoped, tag = 'scratch operand']
  %s0 = inlined_call_operand.hbm [shape: f32[1,8,1024], index: 0, kind: input, shape index: {}]
  %s1 = inlined_call_operand.vmem [shape: f32[8,216], index: 1, kind: input, shape index: {}]
  %s2 = inlined_call_operand.hbm [shape: f32[8,216], index: 2, kind: input, shape index: {}]
  %s3 = inlined_call_operand.vmem [shape: f32[8,2], index: 3, kind: input, shape index: {}]
  %s4 = inlined_call_operand.vmem [shape: f32[8,2], index: 4, kind: input, shape index: {}]
  %s5 = inlined_call_operand.hbm [shape: f32[1,8,1024], index: 5, kind: output, shape index: {}]
  %s6 = sld [smem:[#allocation0]]
  $region38: #{tpu_custom_call.1} parent=0
    _
  %s8 = ssub.s32 1, %s6
  %s9 = scalar_select 0, %s8, %s6
  $region1: #{tpu_custom_call.1} parent=0
    #allocation3 [shape = 'u8[32768]{0}', space=vmem, size = 0x8000, scoped, tag = 'input window, operand 0, single buffered']
    #allocation4 [shape = 's32[1]{0}', space=sflag, size = 0x4, scoped, tag = 'scoped memory for tpu_custom_call.1']
    #allocation5 [shape = 's32[1]{0}', space=sflag, size = 0x4, scoped, tag = 'scoped memory for tpu_custom_call.1']
    #allocation6 [shape = 'u8[8192]{0}', space=vmem, size = 0x2000, scoped, tag = 'input window, operand 2, single buffered']
    #allocation7 [shape = 's32[1]{0}', space=sflag, size = 0x4, scoped, tag = 'scoped memory for tpu_custom_call.1']
    #allocation8 [shape = 'u8[32768]{0}', space=vmem, size = 0x8000, scoped, tag = 'output window, operand 0, single buffered']
    %10 = vsyncpa [#allocation4], 0
    %11 = vsyncpa [#allocation7], 0
    %12 = vsyncpa [#allocation5], 0
    // Predicated region
    $region2: #{tpu_custom_call.1} parent=1 // pred_check
      _
    $region3: #{tpu_custom_call.1} parent=1 // pred_check_branch
      %14 = sbr.rel (0) target = $region5
    $region4: #{tpu_custom_call.1} parent=1 // pred_region
      %16 = vsyncadd [#allocation4], 0
      %s18 = sshll.u32 %s0, 4
      %s19 = int_to_ptr.hbm [resolvable:$true] %s18
      %s20 = sshll.u32 [#allocation3], 4
      %s21 = int_to_ptr.vmem [resolvable:$true] %s20
      %23 = dma.hbm_to_vmem [thread:$0]  %s19, 1024, %s21, [#allocation4]
    $region5: #{tpu_custom_call.1} parent=1 // pred_fallthru
      _
    // Predicated region
    $region6: #{tpu_custom_call.1} parent=1 // pred_check
      _
    $region7: #{tpu_custom_call.1} parent=1 // pred_check_branch
      %25 = sbr.rel (0) target = $region9
    $region8: #{tpu_custom_call.1} parent=1 // pred_region
      _
    $region9: #{tpu_custom_call.1} parent=1 // pred_fallthru
      _
    // Predicated region
    $region10: #{tpu_custom_call.1} parent=1 // pred_check
      _
    $region11: #{tpu_custom_call.1} parent=1 // pred_check_branch
      %27 = sbr.rel (0) target = $region13
    $region12: #{tpu_custom_call.1} parent=1 // pred_region
      %29 = vsyncadd [#allocation7], 0
      %s31 = sshll.u32 %s2, 4
      %s32 = int_to_ptr.hbm [resolvable:$true] %s31
      %s33 = sshll.u32 [#allocation6], 4
      %s34 = int_to_ptr.vmem [resolvable:$true] %s33
      %36 = dma.hbm_to_vmem [thread:$0]  %s32, 256, %s34, [#allocation7]
    $region13: #{tpu_custom_call.1} parent=1 // pred_fallthru
      _
    // Predicated region
    $region14: #{tpu_custom_call.1} parent=1 // pred_check
      _
    $region15: #{tpu_custom_call.1} parent=1 // pred_check_branch
      %38 = sbr.rel (0) target = $region17
    $region16: #{tpu_custom_call.1} parent=1 // pred_region
      _
    $region17: #{tpu_custom_call.1} parent=1 // pred_fallthru
      _
    // Predicated region
    $region18: #{tpu_custom_call.1} parent=1 // pred_check
      _
    $region19: #{tpu_custom_call.1} parent=1 // pred_check_branch
      %40 = sbr.rel (0) target = $region21
    $region20: #{tpu_custom_call.1} parent=1 // pred_region
      _
    $region21: #{tpu_custom_call.1} parent=1 // pred_fallthru
      _
    // Predicated region
    $region22: #{tpu_custom_call.1} parent=1 // pred_check
      _
    $region23: #{tpu_custom_call.1} parent=1 // pred_check_branch
      %42 = sbr.rel (0) target = $region25
    $region24: #{tpu_custom_call.1} parent=1 // pred_region
      %44 = dma.done [#allocation4], 1024
    $region25: #{tpu_custom_call.1} parent=1 // pred_fallthru
      _
    // Predicated region
    $region26: #{tpu_custom_call.1} parent=1 // pred_check
      _
    $region27: #{tpu_custom_call.1} parent=1 // pred_check_branch
      %46 = sbr.rel (0) target = $region29
    $region28: #{tpu_custom_call.1} parent=1 // pred_region
      %48 = dma.done [#allocation7], 256
    $region29: #{tpu_custom_call.1} parent=1 // pred_fallthru
      _
    %v49 = vlaneseq
    %v50 = vand.u32 %v49, 127
    %v51 = vadd.s32 %v50, 128
    %v52 = vadd.s32 %v50, 256
    %v53 = vadd.s32 %v50, 384
    %v54 = vadd.s32 %v50, 512
    %v55 = vadd.s32 %v50, 640
    %v56 = vadd.s32 %v50, 768
    %v57 = vadd.s32 %v50, 896
    %v58 = vand.u32 %v50, 511
    %v59 = vand.u32 %v51, 511
    %v60 = vand.u32 %v52, 511
    %v61 = vand.u32 %v53, 511
    %v62 = vand.u32 %v54, 511
    %v63 = vand.u32 %v55, 511
    %v64 = vand.u32 %v56, 511
    %v65 = vand.u32 %v57, 511
    %v66 = vshra.s32 %v58, 6
    %v67 = vshra.s32 %v59, 6
    %v68 = vshra.s32 %v60, 6
    %v69 = vshra.s32 %v61, 6
    %v70 = vshra.s32 %v62, 6
    %v71 = vshra.s32 %v63, 6
    %v72 = vshra.s32 %v64, 6
    %v73 = vshra.s32 %v65, 6
    %v74 = vshra.s32 %v58, 3
    %v75 = vshra.s32 %v59, 3
    %v76 = vshra.s32 %v60, 3
    %v77 = vshra.s32 %v61, 3
    %v78 = vshra.s32 %v62, 3
    %v79 = vshra.s32 %v63, 3
    %v80 = vshra.s32 %v64, 3
    %v81 = vshra.s32 %v65, 3
    %v82 = vand.u32 %v74, 7
    %v83 = vand.u32 %v75, 7
    %v84 = vand.u32 %v76, 7
    %v85 = vand.u32 %v77, 7
    %v86 = vand.u32 %v78, 7
    %v87 = vand.u32 %v79, 7
    %v88 = vand.u32 %v80, 7
    %v89 = vand.u32 %v81, 7
    %v90 = vand.u32 %v58, 7
    %v91 = vand.u32 %v59, 7
    %v92 = vand.u32 %v60, 7
    %v93 = vand.u32 %v61, 7
    %v94 = vand.u32 %v62, 7
    %v95 = vand.u32 %v63, 7
    %v96 = vand.u32 %v64, 7
    %v97 = vand.u32 %v65, 7
    %vm98 = vcmp.ge.s32.totalorder %v66, 1
    %vm99 = vcmp.ge.s32.totalorder %v67, 1
    %vm100 = vcmp.ge.s32.totalorder %v68, 1
    %vm101 = vcmp.ge.s32.totalorder %v69, 1
    %vm102 = vcmp.ge.s32.totalorder %v70, 1
    %vm103 = vcmp.ge.s32.totalorder %v71, 1
    %vm104 = vcmp.ge.s32.totalorder %v72, 1
    %vm105 = vcmp.ge.s32.totalorder %v73, 1
    %vm106 = vcmp.lt.s32.totalorder %v66, 7
    %vm107 = vcmp.lt.s32.totalorder %v67, 7
    %vm108 = vcmp.lt.s32.totalorder %v68, 7
    %vm109 = vcmp.lt.s32.totalorder %v69, 7
    %vm110 = vcmp.lt.s32.totalorder %v70, 7
    %vm111 = vcmp.lt.s32.totalorder %v71, 7
    %vm112 = vcmp.lt.s32.totalorder %v72, 7
    %vm113 = vcmp.lt.s32.totalorder %v73, 7
    %vm114 = vcmp.ge.s32.totalorder %v82, 1
    %vm115 = vcmp.ge.s32.totalorder %v83, 1
    %vm116 = vcmp.ge.s32.totalorder %v84, 1
    %vm117 = vcmp.ge.s32.totalorder %v85, 1
    %vm118 = vcmp.ge.s32.totalorder %v86, 1
    %vm119 = vcmp.ge.s32.totalorder %v87, 1
    %vm120 = vcmp.ge.s32.totalorder %v88, 1
    %vm121 = vcmp.ge.s32.totalorder %v89, 1
    %vm122 = vcmp.lt.s32.totalorder %v82, 7
    %vm123 = vcmp.lt.s32.totalorder %v83, 7
    %vm124 = vcmp.lt.s32.totalorder %v84, 7
    %vm125 = vcmp.lt.s32.totalorder %v85, 7
    %vm126 = vcmp.lt.s32.totalorder %v86, 7
    %vm127 = vcmp.lt.s32.totalorder %v87, 7
    %vm128 = vcmp.lt.s32.totalorder %v88, 7
    %vm129 = vcmp.lt.s32.totalorder %v89, 7
    %vm130 = vcmp.ge.s32.totalorder %v90, 1
    %vm131 = vcmp.ge.s32.totalorder %v91, 1
    %vm132 = vcmp.ge.s32.totalorder %v92, 1
    %vm133 = vcmp.ge.s32.totalorder %v93, 1
    %vm134 = vcmp.ge.s32.totalorder %v94, 1
    %vm135 = vcmp.ge.s32.totalorder %v95, 1
    %vm136 = vcmp.ge.s32.totalorder %v96, 1
    %vm137 = vcmp.ge.s32.totalorder %v97, 1
    %vm138 = vcmp.lt.s32.totalorder %v90, 7
    %vm139 = vcmp.lt.s32.totalorder %v91, 7
    %vm140 = vcmp.lt.s32.totalorder %v92, 7
    %vm141 = vcmp.lt.s32.totalorder %v93, 7
    %vm142 = vcmp.lt.s32.totalorder %v94, 7
    %vm143 = vcmp.lt.s32.totalorder %v95, 7
    %vm144 = vcmp.lt.s32.totalorder %v96, 7
    %vm145 = vcmp.lt.s32.totalorder %v97, 7
    %vm146 = vmand %vm98, %vm114
    %vm147 = vmand %vm99, %vm115
    %vm148 = vmand %vm100, %vm116
    %vm149 = vmand %vm101, %vm117
    %vm150 = vmand %vm102, %vm118
    %vm151 = vmand %vm103, %vm119
    %vm152 = vmand %vm104, %vm120
    %vm153 = vmand %vm105, %vm121
    %vm154 = vmand %vm146, %vm130
    %vm155 = vmand %vm147, %vm131
    %vm156 = vmand %vm148, %vm132
    %vm157 = vmand %vm149, %vm133
    %vm158 = vmand %vm150, %vm134
    %vm159 = vmand %vm151, %vm135
    %vm160 = vmand %vm152, %vm136
    %vm161 = vmand %vm153, %vm137
    %vm162 = vmand %vm146, %vm138
    %vm163 = vmand %vm147, %vm139
    %vm164 = vmand %vm148, %vm140
    %vm165 = vmand %vm149, %vm141
    %vm166 = vmand %vm150, %vm142
    %vm167 = vmand %vm151, %vm143
    %vm168 = vmand %vm152, %vm144
    %vm169 = vmand %vm153, %vm145
    %vm170 = vmand %vm98, %vm130
    %vm171 = vmand %vm99, %vm131
    %vm172 = vmand %vm100, %vm132
    %vm173 = vmand %vm101, %vm133
    %vm174 = vmand %vm102, %vm134
    %vm175 = vmand %vm103, %vm135
    %vm176 = vmand %vm104, %vm136
    %vm177 = vmand %vm105, %vm137
    %vm178 = vmand %vm98, %vm138
    %vm179 = vmand %vm99, %vm139
    %vm180 = vmand %vm100, %vm140
    %vm181 = vmand %vm101, %vm141
    %vm182 = vmand %vm102, %vm142
    %vm183 = vmand %vm103, %vm143
    %vm184 = vmand %vm104, %vm144
    %vm185 = vmand %vm105, %vm145
    %vm186 = vmand %vm98, %vm122
    %vm187 = vmand %vm99, %vm123
    %vm188 = vmand %vm100, %vm124
    %vm189 = vmand %vm101, %vm125
    %vm190 = vmand %vm102, %vm126
    %vm191 = vmand %vm103, %vm127
    %vm192 = vmand %vm104, %vm128
    %vm193 = vmand %vm105, %vm129
    %vm194 = vmand %vm186, %vm130
    %vm195 = vmand %vm187, %vm131
    %vm196 = vmand %vm188, %vm132
    %vm197 = vmand %vm189, %vm133
    %vm198 = vmand %vm190, %vm134
    %vm199 = vmand %vm191, %vm135
    %vm200 = vmand %vm192, %vm136
    %vm201 = vmand %vm193, %vm137
    %vm202 = vmand %vm186, %vm138
    %vm203 = vmand %vm187, %vm139
    %vm204 = vmand %vm188, %vm140
    %vm205 = vmand %vm189, %vm141
    %vm206 = vmand %vm190, %vm142
    %vm207 = vmand %vm191, %vm143
    %vm208 = vmand %vm192, %vm144
    %vm209 = vmand %vm193, %vm145
    %vm210 = vmand %vm114, %vm130
    %vm211 = vmand %vm115, %vm131
    %vm212 = vmand %vm116, %vm132
    %vm213 = vmand %vm117, %vm133
    %vm214 = vmand %vm118, %vm134
    %vm215 = vmand %vm119, %vm135
    %vm216 = vmand %vm120, %vm136
    %vm217 = vmand %vm121, %vm137
    %vm218 = vmand %vm114, %vm138
    %vm219 = vmand %vm115, %vm139
    %vm220 = vmand %vm116, %vm140
    %vm221 = vmand %vm117, %vm141
    %vm222 = vmand %vm118, %vm142
    %vm223 = vmand %vm119, %vm143
    %vm224 = vmand %vm120, %vm144
    %vm225 = vmand %vm121, %vm145
    %vm226 = vmand %vm122, %vm130
    %vm227 = vmand %vm123, %vm131
    %vm228 = vmand %vm124, %vm132
    %vm229 = vmand %vm125, %vm133
    %vm230 = vmand %vm126, %vm134
    %vm231 = vmand %vm127, %vm135
    %vm232 = vmand %vm128, %vm136
    %vm233 = vmand %vm129, %vm137
    %vm234 = vmand %vm122, %vm138
    %vm235 = vmand %vm123, %vm139
    %vm236 = vmand %vm124, %vm140
    %vm237 = vmand %vm125, %vm141
    %vm238 = vmand %vm126, %vm142
    %vm239 = vmand %vm127, %vm143
    %vm240 = vmand %vm128, %vm144
    %vm241 = vmand %vm129, %vm145
    %vm242 = vmand %vm106, %vm114
    %vm243 = vmand %vm107, %vm115
    %vm244 = vmand %vm108, %vm116
    %vm245 = vmand %vm109, %vm117
    %vm246 = vmand %vm110, %vm118
    %vm247 = vmand %vm111, %vm119
    %vm248 = vmand %vm112, %vm120
    %vm249 = vmand %vm113, %vm121
    %vm250 = vmand %vm242, %vm130
    %vm251 = vmand %vm243, %vm131
    %vm252 = vmand %vm244, %vm132
    %vm253 = vmand %vm245, %vm133
    %vm254 = vmand %vm246, %vm134
    %vm255 = vmand %vm247, %vm135
    %vm256 = vmand %vm248, %vm136
    %vm257 = vmand %vm249, %vm137
    %vm258 = vmand %vm242, %vm138
    %vm259 = vmand %vm243, %vm139
    %vm260 = vmand %vm244, %vm140
    %vm261 = vmand %vm245, %vm141
    %vm262 = vmand %vm246, %vm142
    %vm263 = vmand %vm247, %vm143
    %vm264 = vmand %vm248, %vm144
    %vm265 = vmand %vm249, %vm145
    %vm266 = vmand %vm106, %vm130
    %vm267 = vmand %vm107, %vm131
    %vm268 = vmand %vm108, %vm132
    %vm269 = vmand %vm109, %vm133
    %vm270 = vmand %vm110, %vm134
    %vm271 = vmand %vm111, %vm135
    %vm272 = vmand %vm112, %vm136
    %vm273 = vmand %vm113, %vm137
    %vm274 = vmand %vm106, %vm138
    %vm275 = vmand %vm107, %vm139
    %vm276 = vmand %vm108, %vm140
    %vm277 = vmand %vm109, %vm141
    %vm278 = vmand %vm110, %vm142
    %vm279 = vmand %vm111, %vm143
    %vm280 = vmand %vm112, %vm144
    %vm281 = vmand %vm113, %vm145
    %vm282 = vmand %vm106, %vm122
    %vm283 = vmand %vm107, %vm123
    %vm284 = vmand %vm108, %vm124
    %vm285 = vmand %vm109, %vm125
    %vm286 = vmand %vm110, %vm126
    %vm287 = vmand %vm111, %vm127
    %vm288 = vmand %vm112, %vm128
    %vm289 = vmand %vm113, %vm129
    %vm290 = vmand %vm282, %vm130
    %vm291 = vmand %vm283, %vm131
    %vm292 = vmand %vm284, %vm132
    %vm293 = vmand %vm285, %vm133
    %vm294 = vmand %vm286, %vm134
    %vm295 = vmand %vm287, %vm135
    %vm296 = vmand %vm288, %vm136
    %vm297 = vmand %vm289, %vm137
    %vm298 = vmand %vm282, %vm138
    %vm299 = vmand %vm283, %vm139
    %vm300 = vmand %vm284, %vm140
    %vm301 = vmand %vm285, %vm141
    %vm302 = vmand %vm286, %vm142
    %vm303 = vmand %vm287, %vm143
    %vm304 = vmand %vm288, %vm144
    %vm305 = vmand %vm289, %vm145
    %v306 = vld [vmem:[#allocation3] sm:$0xff]
    %v307 = vld [vmem:[#allocation3 + $0x8] sm:$0xff]
    %v308 = vld [vmem:[#allocation3 + $0x10] sm:$0xff]
    %v309 = vld [vmem:[#allocation3 + $0x18] sm:$0xff]
    %v310 = vld [vmem:[#allocation3 + $0x20] sm:$0xff]
    %v311 = vld [vmem:[#allocation3 + $0x28] sm:$0xff]
    %v312 = vld [vmem:[#allocation3 + $0x30] sm:$0xff]
    %v313 = vld [vmem:[#allocation3 + $0x38] sm:$0xff]
    %314 = vrot.lane.b32.xlu0 %v306, 73
    %v315 = vpop.permute.xlu0 %314
    %316 = vrot.lane.b32.xlu0 %v307, 73
    %v317 = vpop.permute.xlu0 %316
    %318 = vrot.lane.b32.xlu0 %v308, 73
    %v319 = vpop.permute.xlu0 %318
    %320 = vrot.lane.b32.xlu0 %v309, 73
    %v321 = vpop.permute.xlu0 %320
    %322 = vrot.lane.b32.xlu0 %v310, 73
    %v323 = vpop.permute.xlu0 %322
    %324 = vrot.lane.b32.xlu0 %v311, 73
    %v325 = vpop.permute.xlu0 %324
    %326 = vrot.lane.b32.xlu0 %v312, 73
    %v327 = vpop.permute.xlu0 %326
    %328 = vrot.lane.b32.xlu0 %v313, 73
    %v329 = vpop.permute.xlu0 %328
    %vm330 = vcmp.lt.s32.totalorder %v50, 73
    %v331 = vsel %vm330, %v327, %v329
    %v332 = vsel %vm330, %v325, %v327
    %v333 = vsel %vm330, %v323, %v325
    %v334 = vsel %vm330, %v321, %v323
    %v335 = vsel %vm330, %v319, %v321
    %v336 = vsel %vm330, %v317, %v319
    %v337 = vsel %vm330, %v315, %v317
    %v338 = vsel %vm330, %v329, %v315
    %v339 = vsel %vm154, %v338, 0.0
    %v340 = vsel %vm155, %v337, 0.0
    %v341 = vsel %vm156, %v336, 0.0
    %v342 = vsel %vm157, %v335, 0.0
    %v343 = vsel %vm158, %v334, 0.0
    %v344 = vsel %vm159, %v333, 0.0
    %v345 = vsel %vm160, %v332, 0.0
    %v346 = vsel %vm161, %v331, 0.0
    %347 = vst [vmem:[#allocation2] sm:$0xff] %v339
    %348 = vst [vmem:[#allocation2 + $0x8] sm:$0xff] %v340
    %349 = vst [vmem:[#allocation2 + $0x10] sm:$0xff] %v341
    %350 = vst [vmem:[#allocation2 + $0x18] sm:$0xff] %v342
    %351 = vst [vmem:[#allocation2 + $0x20] sm:$0xff] %v343
    %352 = vst [vmem:[#allocation2 + $0x28] sm:$0xff] %v344
    %353 = vst [vmem:[#allocation2 + $0x30] sm:$0xff] %v345
    %354 = vst [vmem:[#allocation2 + $0x38] sm:$0xff] %v346
    %355 = vrot.lane.b32.xlu0 %v306, 72
    %v356 = vpop.permute.xlu0 %355
    %357 = vrot.lane.b32.xlu0 %v307, 72
    %v358 = vpop.permute.xlu0 %357
    %359 = vrot.lane.b32.xlu0 %v308, 72
    %v360 = vpop.permute.xlu0 %359
    %361 = vrot.lane.b32.xlu0 %v309, 72
    %v362 = vpop.permute.xlu0 %361
    %363 = vrot.lane.b32.xlu0 %v310, 72
    %v364 = vpop.permute.xlu0 %363
    %365 = vrot.lane.b32.xlu0 %v311, 72
    %v366 = vpop.permute.xlu0 %365
    %367 = vrot.lane.b32.xlu0 %v312, 72
    %v368 = vpop.permute.xlu0 %367
    %369 = vrot.lane.b32.xlu0 %v313, 72
    %v370 = vpop.permute.xlu0 %369
    %vm371 = vcmp.lt.s32.totalorder %v50, 72
    %v372 = vsel %vm371, %v368, %v370
    %v373 = vsel %vm371, %v366, %v368
    %v374 = vsel %vm371, %v364, %v366
    %v375 = vsel %vm371, %v362, %v364
    %v376 = vsel %vm371, %v360, %v362
    %v377 = vsel %vm371, %v358, %v360
    %v378 = vsel %vm371, %v356, %v358
    %v379 = vsel %vm371, %v370, %v356
    %v380 = vsel %vm146, %v379, 0.0
    %v381 = vsel %vm147, %v378, 0.0
    %v382 = vsel %vm148, %v377, 0.0
    %v383 = vsel %vm149, %v376, 0.0
    %v384 = vsel %vm150, %v375, 0.0
    %v385 = vsel %vm151, %v374, 0.0
    %v386 = vsel %vm152, %v373, 0.0
    %v387 = vsel %vm153, %v372, 0.0
    %388 = vst [vmem:[#allocation2 + $0x40] sm:$0xff] %v380
    %389 = vst [vmem:[#allocation2 + $0x48] sm:$0xff] %v381
    %390 = vst [vmem:[#allocation2 + $0x50] sm:$0xff] %v382
    %391 = vst [vmem:[#allocation2 + $0x58] sm:$0xff] %v383
    %392 = vst [vmem:[#allocation2 + $0x60] sm:$0xff] %v384
    %393 = vst [vmem:[#allocation2 + $0x68] sm:$0xff] %v385
    %394 = vst [vmem:[#allocation2 + $0x70] sm:$0xff] %v386
    %395 = vst [vmem:[#allocation2 + $0x78] sm:$0xff] %v387
    %396 = vrot.lane.b32.xlu0 %v306, 71
    %v397 = vpop.permute.xlu0 %396
    %398 = vrot.lane.b32.xlu0 %v307, 71
    %v399 = vpop.permute.xlu0 %398
    %400 = vrot.lane.b32.xlu0 %v308, 71
    %v401 = vpop.permute.xlu0 %400
    %402 = vrot.lane.b32.xlu0 %v309, 71
    %v403 = vpop.permute.xlu0 %402
    %404 = vrot.lane.b32.xlu0 %v310, 71
    %v405 = vpop.permute.xlu0 %404
    %406 = vrot.lane.b32.xlu0 %v311, 71
    %v407 = vpop.permute.xlu0 %406
    %408 = vrot.lane.b32.xlu0 %v312, 71
    %v409 = vpop.permute.xlu0 %408
    %410 = vrot.lane.b32.xlu0 %v313, 71
    %v411 = vpop.permute.xlu0 %410
    %vm412 = vcmp.lt.s32.totalorder %v50, 71
    %v413 = vsel %vm412, %v409, %v411
    %v414 = vsel %vm412, %v407, %v409
    %v415 = vsel %vm412, %v405, %v407
    %v416 = vsel %vm412, %v403, %v405
    %v417 = vsel %vm412, %v401, %v403
    %v418 = vsel %vm412, %v399, %v401
    %v419 = vsel %vm412, %v397, %v399
    %v420 = vsel %vm412, %v411, %v397
    %v421 = vsel %vm162, %v420, 0.0
    %v422 = vsel %vm163, %v419, 0.0
    %v423 = vsel %vm164, %v418, 0.0
    %v424 = vsel %vm165, %v417, 0.0
    %v425 = vsel %vm166, %v416, 0.0
    %v426 = vsel %vm167, %v415, 0.0
    %v427 = vsel %vm168, %v414, 0.0
    %v428 = vsel %vm169, %v413, 0.0
    %429 = vst [vmem:[#allocation2 + $0x80] sm:$0xff] %v421
    %430 = vst [vmem:[#allocation2 + $0x88] sm:$0xff] %v422
    %431 = vst [vmem:[#allocation2 + $0x90] sm:$0xff] %v423
    %432 = vst [vmem:[#allocation2 + $0x98] sm:$0xff] %v424
    %433 = vst [vmem:[#allocation2 + $0xa0] sm:$0xff] %v425
    %434 = vst [vmem:[#allocation2 + $0xa8] sm:$0xff] %v426
    %435 = vst [vmem:[#allocation2 + $0xb0] sm:$0xff] %v427
    %436 = vst [vmem:[#allocation2 + $0xb8] sm:$0xff] %v428
    %437 = vrot.lane.b32.xlu0 %v306, 65
    %v438 = vpop.permute.xlu0 %437
    %439 = vrot.lane.b32.xlu0 %v307, 65
    %v440 = vpop.permute.xlu0 %439
    %441 = vrot.lane.b32.xlu0 %v308, 65
    %v442 = vpop.permute.xlu0 %441
    %443 = vrot.lane.b32.xlu0 %v309, 65
    %v444 = vpop.permute.xlu0 %443
    %445 = vrot.lane.b32.xlu0 %v310, 65
    %v446 = vpop.permute.xlu0 %445
    %447 = vrot.lane.b32.xlu0 %v311, 65
    %v448 = vpop.permute.xlu0 %447
    %449 = vrot.lane.b32.xlu0 %v312, 65
    %v450 = vpop.permute.xlu0 %449
    %451 = vrot.lane.b32.xlu0 %v313, 65
    %v452 = vpop.permute.xlu0 %451
    %vm453 = vcmp.lt.s32.totalorder %v50, 65
    %v454 = vsel %vm453, %v450, %v452
    %v455 = vsel %vm453, %v448, %v450
    %v456 = vsel %vm453, %v446, %v448
    %v457 = vsel %vm453, %v444, %v446
    %v458 = vsel %vm453, %v442, %v444
    %v459 = vsel %vm453, %v440, %v442
    %v460 = vsel %vm453, %v438, %v440
    %v461 = vsel %vm453, %v452, %v438
    %v462 = vsel %vm170, %v461, 0.0
    %v463 = vsel %vm171, %v460, 0.0
    %v464 = vsel %vm172, %v459, 0.0
    %v465 = vsel %vm173, %v458, 0.0
    %v466 = vsel %vm174, %v457, 0.0
    %v467 = vsel %vm175, %v456, 0.0
    %v468 = vsel %vm176, %v455, 0.0
    %v469 = vsel %vm177, %v454, 0.0
    %470 = vst [vmem:[#allocation2 + $0xc0] sm:$0xff] %v462
    %471 = vst [vmem:[#allocation2 + $0xc8] sm:$0xff] %v463
    %472 = vst [vmem:[#allocation2 + $0xd0] sm:$0xff] %v464
    %473 = vst [vmem:[#allocation2 + $0xd8] sm:$0xff] %v465
    %474 = vst [vmem:[#allocation2 + $0xe0] sm:$0xff] %v466
    %475 = vst [vmem:[#allocation2 + $0xe8] sm:$0xff] %v467
    %476 = vst [vmem:[#allocation2 + $0xf0] sm:$0xff] %v468
    %477 = vst [vmem:[#allocation2 + $0xf8] sm:$0xff] %v469
    %478 = vrot.lane.b32.xlu0 %v306, 64
    %v479 = vpop.permute.xlu0 %478
    %480 = vrot.lane.b32.xlu0 %v307, 64
    %v481 = vpop.permute.xlu0 %480
    %482 = vrot.lane.b32.xlu0 %v308, 64
    %v483 = vpop.permute.xlu0 %482
    %484 = vrot.lane.b32.xlu0 %v309, 64
    %v485 = vpop.permute.xlu0 %484
    %486 = vrot.lane.b32.xlu0 %v310, 64
    %v487 = vpop.permute.xlu0 %486
    %488 = vrot.lane.b32.xlu0 %v311, 64
    %v489 = vpop.permute.xlu0 %488
    %490 = vrot.lane.b32.xlu0 %v312, 64
    %v491 = vpop.permute.xlu0 %490
    %492 = vrot.lane.b32.xlu0 %v313, 64
    %v493 = vpop.permute.xlu0 %492
    %vm494 = vcmp.lt.s32.totalorder %v50, 64
    %v495 = vsel %vm494, %v491, %v493
    %v496 = vsel %vm494, %v489, %v491
    %v497 = vsel %vm494, %v487, %v489
    %v498 = vsel %vm494, %v485, %v487
    %v499 = vsel %vm494, %v483, %v485
    %v500 = vsel %vm494, %v481, %v483
    %v501 = vsel %vm494, %v479, %v481
    %v502 = vsel %vm494, %v493, %v479
    %v503 = vsel %vm98, %v502, 0.0
    %v504 = vsel %vm99, %v501, 0.0
    %v505 = vsel %vm100, %v500, 0.0
    %v506 = vsel %vm101, %v499, 0.0
    %v507 = vsel %vm102, %v498, 0.0
    %v508 = vsel %vm103, %v497, 0.0
    %v509 = vsel %vm104, %v496, 0.0
    %v510 = vsel %vm105, %v495, 0.0
    %511 = vst [vmem:[#allocation2 + $0x100] sm:$0xff] %v503
    %512 = vst [vmem:[#allocation2 + $0x108] sm:$0xff] %v504
    %513 = vst [vmem:[#allocation2 + $0x110] sm:$0xff] %v505
    %514 = vst [vmem:[#allocation2 + $0x118] sm:$0xff] %v506
    %515 = vst [vmem:[#allocation2 + $0x120] sm:$0xff] %v507
    %516 = vst [vmem:[#allocation2 + $0x128] sm:$0xff] %v508
    %517 = vst [vmem:[#allocation2 + $0x130] sm:$0xff] %v509
    %518 = vst [vmem:[#allocation2 + $0x138] sm:$0xff] %v510
    %519 = vrot.lane.b32.xlu0 %v306, 63
    %v520 = vpop.permute.xlu0 %519
    %521 = vrot.lane.b32.xlu0 %v307, 63
    %v522 = vpop.permute.xlu0 %521
    %523 = vrot.lane.b32.xlu0 %v308, 63
    %v524 = vpop.permute.xlu0 %523
    %525 = vrot.lane.b32.xlu0 %v309, 63
    %v526 = vpop.permute.xlu0 %525
    %527 = vrot.lane.b32.xlu0 %v310, 63
    %v528 = vpop.permute.xlu0 %527
    %529 = vrot.lane.b32.xlu0 %v311, 63
    %v530 = vpop.permute.xlu0 %529
    %531 = vrot.lane.b32.xlu0 %v312, 63
    %v532 = vpop.permute.xlu0 %531
    %533 = vrot.lane.b32.xlu0 %v313, 63
    %v534 = vpop.permute.xlu0 %533
    %vm535 = vcmp.lt.s32.totalorder %v50, 63
    %v536 = vsel %vm535, %v532, %v534
    %v537 = vsel %vm535, %v530, %v532
    %v538 = vsel %vm535, %v528, %v530
    %v539 = vsel %vm535, %v526, %v528
    %v540 = vsel %vm535, %v524, %v526
    %v541 = vsel %vm535, %v522, %v524
    %v542 = vsel %vm535, %v520, %v522
    %v543 = vsel %vm535, %v534, %v520
    %v544 = vsel %vm178, %v543, 0.0
    %v545 = vsel %vm179, %v542, 0.0
    %v546 = vsel %vm180, %v541, 0.0
    %v547 = vsel %vm181, %v540, 0.0
    %v548 = vsel %vm182, %v539, 0.0
    %v549 = vsel %vm183, %v538, 0.0
    %v550 = vsel %vm184, %v537, 0.0
    %v551 = vsel %vm185, %v536, 0.0
    %552 = vst [vmem:[#allocation2 + $0x140] sm:$0xff] %v544
    %553 = vst [vmem:[#allocation2 + $0x148] sm:$0xff] %v545
    %554 = vst [vmem:[#allocation2 + $0x150] sm:$0xff] %v546
    %555 = vst [vmem:[#allocation2 + $0x158] sm:$0xff] %v547
    %556 = vst [vmem:[#allocation2 + $0x160] sm:$0xff] %v548
    %557 = vst [vmem:[#allocation2 + $0x168] sm:$0xff] %v549
    %558 = vst [vmem:[#allocation2 + $0x170] sm:$0xff] %v550
    %559 = vst [vmem:[#allocation2 + $0x178] sm:$0xff] %v551
    %560 = vrot.lane.b32.xlu0 %v306, 57
    %v561 = vpop.permute.xlu0 %560
    %562 = vrot.lane.b32.xlu0 %v307, 57
    %v563 = vpop.permute.xlu0 %562
    %564 = vrot.lane.b32.xlu0 %v308, 57
    %v565 = vpop.permute.xlu0 %564
    %566 = vrot.lane.b32.xlu0 %v309, 57
    %v567 = vpop.permute.xlu0 %566
    %568 = vrot.lane.b32.xlu0 %v310, 57
    %v569 = vpop.permute.xlu0 %568
    %570 = vrot.lane.b32.xlu0 %v311, 57
    %v571 = vpop.permute.xlu0 %570
    %572 = vrot.lane.b32.xlu0 %v312, 57
    %v573 = vpop.permute.xlu0 %572
    %574 = vrot.lane.b32.xlu0 %v313, 57
    %v575 = vpop.permute.xlu0 %574
    %vm576 = vcmp.lt.s32.totalorder %v50, 57
    %v577 = vsel %vm576, %v573, %v575
    %v578 = vsel %vm576, %v571, %v573
    %v579 = vsel %vm576, %v569, %v571
    %v580 = vsel %vm576, %v567, %v569
    %v581 = vsel %vm576, %v565, %v567
    %v582 = vsel %vm576, %v563, %v565
    %v583 = vsel %vm576, %v561, %v563
    %v584 = vsel %vm576, %v575, %v561
    %v585 = vsel %vm194, %v584, 0.0
    %v586 = vsel %vm195, %v583, 0.0
    %v587 = vsel %vm196, %v582, 0.0
    %v588 = vsel %vm197, %v581, 0.0
    %v589 = vsel %vm198, %v580, 0.0
    %v590 = vsel %vm199, %v579, 0.0
    %v591 = vsel %vm200, %v578, 0.0
    %v592 = vsel %vm201, %v577, 0.0
    %593 = vst [vmem:[#allocation2 + $0x180] sm:$0xff] %v585
    %594 = vst [vmem:[#allocation2 + $0x188] sm:$0xff] %v586
    %595 = vst [vmem:[#allocation2 + $0x190] sm:$0xff] %v587
    %596 = vst [vmem:[#allocation2 + $0x198] sm:$0xff] %v588
    %597 = vst [vmem:[#allocation2 + $0x1a0] sm:$0xff] %v589
    %598 = vst [vmem:[#allocation2 + $0x1a8] sm:$0xff] %v590
    %599 = vst [vmem:[#allocation2 + $0x1b0] sm:$0xff] %v591
    %600 = vst [vmem:[#allocation2 + $0x1b8] sm:$0xff] %v592
    %601 = vrot.lane.b32.xlu0 %v306, 56
    %v602 = vpop.permute.xlu0 %601
    %603 = vrot.lane.b32.xlu0 %v307, 56
    %v604 = vpop.permute.xlu0 %603
    %605 = vrot.lane.b32.xlu0 %v308, 56
    %v606 = vpop.permute.xlu0 %605
    %607 = vrot.lane.b32.xlu0 %v309, 56
    %v608 = vpop.permute.xlu0 %607
    %609 = vrot.lane.b32.xlu0 %v310, 56
    %v610 = vpop.permute.xlu0 %609
    %611 = vrot.lane.b32.xlu0 %v311, 56
    %v612 = vpop.permute.xlu0 %611
    %613 = vrot.lane.b32.xlu0 %v312, 56
    %v614 = vpop.permute.xlu0 %613
    %615 = vrot.lane.b32.xlu0 %v313, 56
    %v616 = vpop.permute.xlu0 %615
    %vm617 = vcmp.lt.s32.totalorder %v50, 56
    %v618 = vsel %vm617, %v614, %v616
    %v619 = vsel %vm617, %v612, %v614
    %v620 = vsel %vm617, %v610, %v612
    %v621 = vsel %vm617, %v608, %v610
    %v622 = vsel %vm617, %v606, %v608
    %v623 = vsel %vm617, %v604, %v606
    %v624 = vsel %vm617, %v602, %v604
    %v625 = vsel %vm617, %v616, %v602
    %v626 = vsel %vm186, %v625, 0.0
    %v627 = vsel %vm187, %v624, 0.0
    %v628 = vsel %vm188, %v623, 0.0
    %v629 = vsel %vm189, %v622, 0.0
    %v630 = vsel %vm190, %v621, 0.0
    %v631 = vsel %vm191, %v620, 0.0
    %v632 = vsel %vm192, %v619, 0.0
    %v633 = vsel %vm193, %v618, 0.0
    %634 = vst [vmem:[#allocation2 + $0x1c0] sm:$0xff] %v626
    %635 = vst [vmem:[#allocation2 + $0x1c8] sm:$0xff] %v627
    %636 = vst [vmem:[#allocation2 + $0x1d0] sm:$0xff] %v628
    %637 = vst [vmem:[#allocation2 + $0x1d8] sm:$0xff] %v629
    %638 = vst [vmem:[#allocation2 + $0x1e0] sm:$0xff] %v630
    %639 = vst [vmem:[#allocation2 + $0x1e8] sm:$0xff] %v631
    %640 = vst [vmem:[#allocation2 + $0x1f0] sm:$0xff] %v632
    %641 = vst [vmem:[#allocation2 + $0x1f8] sm:$0xff] %v633
    %642 = vrot.lane.b32.xlu0 %v306, 55
    %v643 = vpop.permute.xlu0 %642
    %644 = vrot.lane.b32.xlu0 %v307, 55
    %v645 = vpop.permute.xlu0 %644
    %646 = vrot.lane.b32.xlu0 %v308, 55
    %v647 = vpop.permute.xlu0 %646
    %648 = vrot.lane.b32.xlu0 %v309, 55
    %v649 = vpop.permute.xlu0 %648
    %650 = vrot.lane.b32.xlu0 %v310, 55
    %v651 = vpop.permute.xlu0 %650
    %652 = vrot.lane.b32.xlu0 %v311, 55
    %v653 = vpop.permute.xlu0 %652
    %654 = vrot.lane.b32.xlu0 %v312, 55
    %v655 = vpop.permute.xlu0 %654
    %656 = vrot.lane.b32.xlu0 %v313, 55
    %v657 = vpop.permute.xlu0 %656
    %vm658 = vcmp.lt.s32.totalorder %v50, 55
    %v659 = vsel %vm658, %v655, %v657
    %v660 = vsel %vm658, %v653, %v655
    %v661 = vsel %vm658, %v651, %v653
    %v662 = vsel %vm658, %v649, %v651
    %v663 = vsel %vm658, %v647, %v649
    %v664 = vsel %vm658, %v645, %v647
    %v665 = vsel %vm658, %v643, %v645
    %v666 = vsel %vm658, %v657, %v643
    %v667 = vsel %vm202, %v666, 0.0
    %v668 = vsel %vm203, %v665, 0.0
    %v669 = vsel %vm204, %v664, 0.0
    %v670 = vsel %vm205, %v663, 0.0
    %v671 = vsel %vm206, %v662, 0.0
    %v672 = vsel %vm207, %v661, 0.0
    %v673 = vsel %vm208, %v660, 0.0
    %v674 = vsel %vm209, %v659, 0.0
    %675 = vst [vmem:[#allocation2 + $0x200] sm:$0xff] %v667
    %676 = vst [vmem:[#allocation2 + $0x208] sm:$0xff] %v668
    %677 = vst [vmem:[#allocation2 + $0x210] sm:$0xff] %v669
    %678 = vst [vmem:[#allocation2 + $0x218] sm:$0xff] %v670
    %679 = vst [vmem:[#allocation2 + $0x220] sm:$0xff] %v671
    %680 = vst [vmem:[#allocation2 + $0x228] sm:$0xff] %v672
    %681 = vst [vmem:[#allocation2 + $0x230] sm:$0xff] %v673
    %682 = vst [vmem:[#allocation2 + $0x238] sm:$0xff] %v674
    %683 = vrot.lane.b32.xlu0 %v306, 9
    %v684 = vpop.permute.xlu0 %683
    %685 = vrot.lane.b32.xlu0 %v307, 9
    %v686 = vpop.permute.xlu0 %685
    %687 = vrot.lane.b32.xlu0 %v308, 9
    %v688 = vpop.permute.xlu0 %687
    %689 = vrot.lane.b32.xlu0 %v309, 9
    %v690 = vpop.permute.xlu0 %689
    %691 = vrot.lane.b32.xlu0 %v310, 9
    %v692 = vpop.permute.xlu0 %691
    %693 = vrot.lane.b32.xlu0 %v311, 9
    %v694 = vpop.permute.xlu0 %693
    %695 = vrot.lane.b32.xlu0 %v312, 9
    %v696 = vpop.permute.xlu0 %695
    %697 = vrot.lane.b32.xlu0 %v313, 9
    %v698 = vpop.permute.xlu0 %697
    %vm699 = vcmp.lt.s32.totalorder %v50, 9
    %v700 = vsel %vm699, %v696, %v698
    %v701 = vsel %vm699, %v694, %v696
    %v702 = vsel %vm699, %v692, %v694
    %v703 = vsel %vm699, %v690, %v692
    %v704 = vsel %vm699, %v688, %v690
    %v705 = vsel %vm699, %v686, %v688
    %v706 = vsel %vm699, %v684, %v686
    %v707 = vsel %vm699, %v698, %v684
    %v708 = vsel %vm210, %v707, 0.0
    %v709 = vsel %vm211, %v706, 0.0
    %v710 = vsel %vm212, %v705, 0.0
    %v711 = vsel %vm213, %v704, 0.0
    %v712 = vsel %vm214, %v703, 0.0
    %v713 = vsel %vm215, %v702, 0.0
    %v714 = vsel %vm216, %v701, 0.0
    %v715 = vsel %vm217, %v700, 0.0
    %716 = vst [vmem:[#allocation2 + $0x240] sm:$0xff] %v708
    %717 = vst [vmem:[#allocation2 + $0x248] sm:$0xff] %v709
    %718 = vst [vmem:[#allocation2 + $0x250] sm:$0xff] %v710
    %719 = vst [vmem:[#allocation2 + $0x258] sm:$0xff] %v711
    %720 = vst [vmem:[#allocation2 + $0x260] sm:$0xff] %v712
    %721 = vst [vmem:[#allocation2 + $0x268] sm:$0xff] %v713
    %722 = vst [vmem:[#allocation2 + $0x270] sm:$0xff] %v714
    %723 = vst [vmem:[#allocation2 + $0x278] sm:$0xff] %v715
    %724 = vrot.lane.b32.xlu0 %v306, 8
    %v725 = vpop.permute.xlu0 %724
    %726 = vrot.lane.b32.xlu0 %v307, 8
    %v727 = vpop.permute.xlu0 %726
    %728 = vrot.lane.b32.xlu0 %v308, 8
    %v729 = vpop.permute.xlu0 %728
    %730 = vrot.lane.b32.xlu0 %v309, 8
    %v731 = vpop.permute.xlu0 %730
    %732 = vrot.lane.b32.xlu0 %v310, 8
    %v733 = vpop.permute.xlu0 %732
    %734 = vrot.lane.b32.xlu0 %v311, 8
    %v735 = vpop.permute.xlu0 %734
    %736 = vrot.lane.b32.xlu0 %v312, 8
    %v737 = vpop.permute.xlu0 %736
    %738 = vrot.lane.b32.xlu0 %v313, 8
    %v739 = vpop.permute.xlu0 %738
    %vm740 = vcmp.lt.s32.totalorder %v50, 8
    %v741 = vsel %vm740, %v737, %v739
    %v742 = vsel %vm740, %v735, %v737
    %v743 = vsel %vm740, %v733, %v735
    %v744 = vsel %vm740, %v731, %v733
    %v745 = vsel %vm740, %v729, %v731
    %v746 = vsel %vm740, %v727, %v729
    %v747 = vsel %vm740, %v725, %v727
    %v748 = vsel %vm740, %v739, %v725
    %v749 = vsel %vm114, %v748, 0.0
    %v750 = vsel %vm115, %v747, 0.0
    %v751 = vsel %vm116, %v746, 0.0
    %v752 = vsel %vm117, %v745, 0.0
    %v753 = vsel %vm118, %v744, 0.0
    %v754 = vsel %vm119, %v743, 0.0
    %v755 = vsel %vm120, %v742, 0.0
    %v756 = vsel %vm121, %v741, 0.0
    %757 = vst [vmem:[#allocation2 + $0x280] sm:$0xff] %v749
    %758 = vst [vmem:[#allocation2 + $0x288] sm:$0xff] %v750
    %759 = vst [vmem:[#allocation2 + $0x290] sm:$0xff] %v751
    %760 = vst [vmem:[#allocation2 + $0x298] sm:$0xff] %v752
    %761 = vst [vmem:[#allocation2 + $0x2a0] sm:$0xff] %v753
    %762 = vst [vmem:[#allocation2 + $0x2a8] sm:$0xff] %v754
    %763 = vst [vmem:[#allocation2 + $0x2b0] sm:$0xff] %v755
    %764 = vst [vmem:[#allocation2 + $0x2b8] sm:$0xff] %v756
    %765 = vrot.lane.b32.xlu0 %v306, 7
    %v766 = vpop.permute.xlu0 %765
    %767 = vrot.lane.b32.xlu0 %v307, 7
    %v768 = vpop.permute.xlu0 %767
    %769 = vrot.lane.b32.xlu0 %v308, 7
    %v770 = vpop.permute.xlu0 %769
    %771 = vrot.lane.b32.xlu0 %v309, 7
    %v772 = vpop.permute.xlu0 %771
    %773 = vrot.lane.b32.xlu0 %v310, 7
    %v774 = vpop.permute.xlu0 %773
    %775 = vrot.lane.b32.xlu0 %v311, 7
    %v776 = vpop.permute.xlu0 %775
    %777 = vrot.lane.b32.xlu0 %v312, 7
    %v778 = vpop.permute.xlu0 %777
    %779 = vrot.lane.b32.xlu0 %v313, 7
    %v780 = vpop.permute.xlu0 %779
    %vm781 = vcmp.lt.s32.totalorder %v50, 7
    %v782 = vsel %vm781, %v778, %v780
    %v783 = vsel %vm781, %v776, %v778
    %v784 = vsel %vm781, %v774, %v776
    %v785 = vsel %vm781, %v772, %v774
    %v786 = vsel %vm781, %v770, %v772
    %v787 = vsel %vm781, %v768, %v770
    %v788 = vsel %vm781, %v766, %v768
    %v789 = vsel %vm781, %v780, %v766
    %v790 = vsel %vm218, %v789, 0.0
    %v791 = vsel %vm219, %v788, 0.0
    %v792 = vsel %vm220, %v787, 0.0
    %v793 = vsel %vm221, %v786, 0.0
    %v794 = vsel %vm222, %v785, 0.0
    %v795 = vsel %vm223, %v784, 0.0
    %v796 = vsel %vm224, %v783, 0.0
    %v797 = vsel %vm225, %v782, 0.0
    %798 = vst [vmem:[#allocation2 + $0x2c0] sm:$0xff] %v790
    %799 = vst [vmem:[#allocation2 + $0x2c8] sm:$0xff] %v791
    %800 = vst [vmem:[#allocation2 + $0x2d0] sm:$0xff] %v792
    %801 = vst [vmem:[#allocation2 + $0x2d8] sm:$0xff] %v793
    %802 = vst [vmem:[#allocation2 + $0x2e0] sm:$0xff] %v794
    %803 = vst [vmem:[#allocation2 + $0x2e8] sm:$0xff] %v795
    %804 = vst [vmem:[#allocation2 + $0x2f0] sm:$0xff] %v796
    %805 = vst [vmem:[#allocation2 + $0x2f8] sm:$0xff] %v797
    %806 = vrot.lane.b32.xlu0 %v306, 1
    %v807 = vpop.permute.xlu0 %806
    %808 = vrot.lane.b32.xlu0 %v307, 1
    %v809 = vpop.permute.xlu0 %808
    %810 = vrot.lane.b32.xlu0 %v308, 1
    %v811 = vpop.permute.xlu0 %810
    %812 = vrot.lane.b32.xlu0 %v309, 1
    %v813 = vpop.permute.xlu0 %812
    %814 = vrot.lane.b32.xlu0 %v310, 1
    %v815 = vpop.permute.xlu0 %814
    %816 = vrot.lane.b32.xlu0 %v311, 1
    %v817 = vpop.permute.xlu0 %816
    %818 = vrot.lane.b32.xlu0 %v312, 1
    %v819 = vpop.permute.xlu0 %818
    %820 = vrot.lane.b32.xlu0 %v313, 1
    %v821 = vpop.permute.xlu0 %820
    %vm822 = vcmp.lt.s32.totalorder %v50, 1
    %v823 = vsel %vm822, %v819, %v821
    %v824 = vsel %vm822, %v817, %v819
    %v825 = vsel %vm822, %v815, %v817
    %v826 = vsel %vm822, %v813, %v815
    %v827 = vsel %vm822, %v811, %v813
    %v828 = vsel %vm822, %v809, %v811
    %v829 = vsel %vm822, %v807, %v809
    %v830 = vsel %vm822, %v821, %v807
    %v831 = vsel %vm130, %v830, 0.0
    %v832 = vsel %vm131, %v829, 0.0
    %v833 = vsel %vm132, %v828, 0.0
    %v834 = vsel %vm133, %v827, 0.0
    %v835 = vsel %vm134, %v826, 0.0
    %v836 = vsel %vm135, %v825, 0.0
    %v837 = vsel %vm136, %v824, 0.0
    %v838 = vsel %vm137, %v823, 0.0
    %839 = vst [vmem:[#allocation2 + $0x300] sm:$0xff] %v831
    %840 = vst [vmem:[#allocation2 + $0x308] sm:$0xff] %v832
    %841 = vst [vmem:[#allocation2 + $0x310] sm:$0xff] %v833
    %842 = vst [vmem:[#allocation2 + $0x318] sm:$0xff] %v834
    %843 = vst [vmem:[#allocation2 + $0x320] sm:$0xff] %v835
    %844 = vst [vmem:[#allocation2 + $0x328] sm:$0xff] %v836
    %845 = vst [vmem:[#allocation2 + $0x330] sm:$0xff] %v837
    %846 = vst [vmem:[#allocation2 + $0x338] sm:$0xff] %v838
    %847 = vst [vmem:[#allocation2 + $0x340] sm:$0xff] %v306
    %848 = vst [vmem:[#allocation2 + $0x348] sm:$0xff] %v307
    %849 = vst [vmem:[#allocation2 + $0x350] sm:$0xff] %v308
    %850 = vst [vmem:[#allocation2 + $0x358] sm:$0xff] %v309
    %851 = vst [vmem:[#allocation2 + $0x360] sm:$0xff] %v310
    %852 = vst [vmem:[#allocation2 + $0x368] sm:$0xff] %v311
    %853 = vst [vmem:[#allocation2 + $0x370] sm:$0xff] %v312
    %854 = vst [vmem:[#allocation2 + $0x378] sm:$0xff] %v313
    %855 = vrot.lane.b32.xlu0 %v306, 127
    %v856 = vpop.permute.xlu0 %855
    %857 = vrot.lane.b32.xlu0 %v307, 127
    %v858 = vpop.permute.xlu0 %857
    %859 = vrot.lane.b32.xlu0 %v308, 127
    %v860 = vpop.permute.xlu0 %859
    %861 = vrot.lane.b32.xlu0 %v309, 127
    %v862 = vpop.permute.xlu0 %861
    %863 = vrot.lane.b32.xlu0 %v310, 127
    %v864 = vpop.permute.xlu0 %863
    %865 = vrot.lane.b32.xlu0 %v311, 127
    %v866 = vpop.permute.xlu0 %865
    %867 = vrot.lane.b32.xlu0 %v312, 127
    %v868 = vpop.permute.xlu0 %867
    %869 = vrot.lane.b32.xlu0 %v313, 127
    %v870 = vpop.permute.xlu0 %869
    %vm871 = vcmp.lt.s32.totalorder %v50, 127
    %v872 = vsel %vm871, %v868, %v870
    %v873 = vsel %vm871, %v866, %v868
    %v874 = vsel %vm871, %v864, %v866
    %v875 = vsel %vm871, %v862, %v864
    %v876 = vsel %vm871, %v860, %v862
    %v877 = vsel %vm871, %v858, %v860
    %v878 = vsel %vm871, %v856, %v858
    %v879 = vsel %vm871, %v870, %v856
    %v880 = vsel %vm138, %v878, 0.0
    %v881 = vsel %vm139, %v877, 0.0
    %v882 = vsel %vm140, %v876, 0.0
    %v883 = vsel %vm141, %v875, 0.0
    %v884 = vsel %vm142, %v874, 0.0
    %v885 = vsel %vm143, %v873, 0.0
    %v886 = vsel %vm144, %v872, 0.0
    %v887 = vsel %vm145, %v879, 0.0
    %888 = vst [vmem:[#allocation2 + $0x380] sm:$0xff] %v880
    %889 = vst [vmem:[#allocation2 + $0x388] sm:$0xff] %v881
    %890 = vst [vmem:[#allocation2 + $0x390] sm:$0xff] %v882
    %891 = vst [vmem:[#allocation2 + $0x398] sm:$0xff] %v883
    %892 = vst [vmem:[#allocation2 + $0x3a0] sm:$0xff] %v884
    %893 = vst [vmem:[#allocation2 + $0x3a8] sm:$0xff] %v885
    %894 = vst [vmem:[#allocation2 + $0x3b0] sm:$0xff] %v886
    %895 = vst [vmem:[#allocation2 + $0x3b8] sm:$0xff] %v887
    %896 = vrot.lane.b32.xlu0 %v306, 121
    %v897 = vpop.permute.xlu0 %896
    %898 = vrot.lane.b32.xlu0 %v307, 121
    %v899 = vpop.permute.xlu0 %898
    %900 = vrot.lane.b32.xlu0 %v308, 121
    %v901 = vpop.permute.xlu0 %900
    %902 = vrot.lane.b32.xlu0 %v309, 121
    %v903 = vpop.permute.xlu0 %902
    %904 = vrot.lane.b32.xlu0 %v310, 121
    %v905 = vpop.permute.xlu0 %904
    %906 = vrot.lane.b32.xlu0 %v311, 121
    %v907 = vpop.permute.xlu0 %906
    %908 = vrot.lane.b32.xlu0 %v312, 121
    %v909 = vpop.permute.xlu0 %908
    %910 = vrot.lane.b32.xlu0 %v313, 121
    %v911 = vpop.permute.xlu0 %910
    %vm912 = vcmp.lt.s32.totalorder %v50, 121
    %v913 = vsel %vm912, %v909, %v911
    %v914 = vsel %vm912, %v907, %v909
    %v915 = vsel %vm912, %v905, %v907
    %v916 = vsel %vm912, %v903, %v905
    %v917 = vsel %vm912, %v901, %v903
    %v918 = vsel %vm912, %v899, %v901
    %v919 = vsel %vm912, %v897, %v899
    %v920 = vsel %vm912, %v911, %v897
    %v921 = vsel %vm226, %v919, 0.0
    %v922 = vsel %vm227, %v918, 0.0
    %v923 = vsel %vm228, %v917, 0.0
    %v924 = vsel %vm229, %v916, 0.0
    %v925 = vsel %vm230, %v915, 0.0
    %v926 = vsel %vm231, %v914, 0.0
    %v927 = vsel %vm232, %v913, 0.0
    %v928 = vsel %vm233, %v920, 0.0
    %929 = vst [vmem:[#allocation2 + $0x3c0] sm:$0xff] %v921
    %930 = vst [vmem:[#allocation2 + $0x3c8] sm:$0xff] %v922
    %931 = vst [vmem:[#allocation2 + $0x3d0] sm:$0xff] %v923
    %932 = vst [vmem:[#allocation2 + $0x3d8] sm:$0xff] %v924
    %933 = vst [vmem:[#allocation2 + $0x3e0] sm:$0xff] %v925
    %934 = vst [vmem:[#allocation2 + $0x3e8] sm:$0xff] %v926
    %935 = vst [vmem:[#allocation2 + $0x3f0] sm:$0xff] %v927
    %936 = vst [vmem:[#allocation2 + $0x3f8] sm:$0xff] %v928
    %937 = vrot.lane.b32.xlu0 %v306, 120
    %v938 = vpop.permute.xlu0 %937
    %939 = vrot.lane.b32.xlu0 %v307, 120
    %v940 = vpop.permute.xlu0 %939
    %941 = vrot.lane.b32.xlu0 %v308, 120
    %v942 = vpop.permute.xlu0 %941
    %943 = vrot.lane.b32.xlu0 %v309, 120
    %v944 = vpop.permute.xlu0 %943
    %945 = vrot.lane.b32.xlu0 %v310, 120
    %v946 = vpop.permute.xlu0 %945
    %947 = vrot.lane.b32.xlu0 %v311, 120
    %v948 = vpop.permute.xlu0 %947
    %949 = vrot.lane.b32.xlu0 %v312, 120
    %v950 = vpop.permute.xlu0 %949
    %951 = vrot.lane.b32.xlu0 %v313, 120
    %v952 = vpop.permute.xlu0 %951
    %vm953 = vcmp.lt.s32.totalorder %v50, 120
    %v954 = vsel %vm953, %v950, %v952
    %v955 = vsel %vm953, %v948, %v950
    %v956 = vsel %vm953, %v946, %v948
    %v957 = vsel %vm953, %v944, %v946
    %v958 = vsel %vm953, %v942, %v944
    %v959 = vsel %vm953, %v940, %v942
    %v960 = vsel %vm953, %v938, %v940
    %v961 = vsel %vm953, %v952, %v938
    %v962 = vsel %vm122, %v960, 0.0
    %v963 = vsel %vm123, %v959, 0.0
    %v964 = vsel %vm124, %v958, 0.0
    %v965 = vsel %vm125, %v957, 0.0
    %v966 = vsel %vm126, %v956, 0.0
    %v967 = vsel %vm127, %v955, 0.0
    %v968 = vsel %vm128, %v954, 0.0
    %v969 = vsel %vm129, %v961, 0.0
    %970 = vst [vmem:[#allocation2 + $0x400] sm:$0xff] %v962
    %971 = vst [vmem:[#allocation2 + $0x408] sm:$0xff] %v963
    %972 = vst [vmem:[#allocation2 + $0x410] sm:$0xff] %v964
    %973 = vst [vmem:[#allocation2 + $0x418] sm:$0xff] %v965
    %974 = vst [vmem:[#allocation2 + $0x420] sm:$0xff] %v966
    %975 = vst [vmem:[#allocation2 + $0x428] sm:$0xff] %v967
    %976 = vst [vmem:[#allocation2 + $0x430] sm:$0xff] %v968
    %977 = vst [vmem:[#allocation2 + $0x438] sm:$0xff] %v969
    %978 = vrot.lane.b32.xlu0 %v306, 119
    %v979 = vpop.permute.xlu0 %978
    %980 = vrot.lane.b32.xlu0 %v307, 119
    %v981 = vpop.permute.xlu0 %980
    %982 = vrot.lane.b32.xlu0 %v308, 119
    %v983 = vpop.permute.xlu0 %982
    %984 = vrot.lane.b32.xlu0 %v309, 119
    %v985 = vpop.permute.xlu0 %984
    %986 = vrot.lane.b32.xlu0 %v310, 119
    %v987 = vpop.permute.xlu0 %986
    %988 = vrot.lane.b32.xlu0 %v311, 119
    %v989 = vpop.permute.xlu0 %988
    %990 = vrot.lane.b32.xlu0 %v312, 119
    %v991 = vpop.permute.xlu0 %990
    %992 = vrot.lane.b32.xlu0 %v313, 119
    %v993 = vpop.permute.xlu0 %992
    %vm994 = vcmp.lt.s32.totalorder %v50, 119
    %v995 = vsel %vm994, %v991, %v993
    %v996 = vsel %vm994, %v989, %v991
    %v997 = vsel %vm994, %v987, %v989
    %v998 = vsel %vm994, %v985, %v987
    %v999 = vsel %vm994, %v983, %v985
    %v1000 = vsel %vm994, %v981, %v983
    %v1001 = vsel %vm994, %v979, %v981
    %v1002 = vsel %vm994, %v993, %v979
    %v1003 = vsel %vm234, %v1001, 0.0
    %v1004 = vsel %vm235, %v1000, 0.0
    %v1005 = vsel %vm236, %v999, 0.0
    %v1006 = vsel %vm237, %v998, 0.0
    %v1007 = vsel %vm238, %v997, 0.0
    %v1008 = vsel %vm239, %v996, 0.0
    %v1009 = vsel %vm240, %v995, 0.0
    %v1010 = vsel %vm241, %v1002, 0.0
    %1011 = vst [vmem:[#allocation2 + $0x440] sm:$0xff] %v1003
    %1012 = vst [vmem:[#allocation2 + $0x448] sm:$0xff] %v1004
    %1013 = vst [vmem:[#allocation2 + $0x450] sm:$0xff] %v1005
    %1014 = vst [vmem:[#allocation2 + $0x458] sm:$0xff] %v1006
    %1015 = vst [vmem:[#allocation2 + $0x460] sm:$0xff] %v1007
    %1016 = vst [vmem:[#allocation2 + $0x468] sm:$0xff] %v1008
    %1017 = vst [vmem:[#allocation2 + $0x470] sm:$0xff] %v1009
    %1018 = vst [vmem:[#allocation2 + $0x478] sm:$0xff] %v1010
    %v1019 = vsel %vm250, %v337, 0.0
    %v1020 = vsel %vm251, %v336, 0.0
    %v1021 = vsel %vm252, %v335, 0.0
    %v1022 = vsel %vm253, %v334, 0.0
    %v1023 = vsel %vm254, %v333, 0.0
    %v1024 = vsel %vm255, %v332, 0.0
    %v1025 = vsel %vm256, %v331, 0.0
    %v1026 = vsel %vm257, %v338, 0.0
    %1027 = vst [vmem:[#allocation2 + $0x480] sm:$0xff] %v1019
    %1028 = vst [vmem:[#allocation2 + $0x488] sm:$0xff] %v1020
    %1029 = vst [vmem:[#allocation2 + $0x490] sm:$0xff] %v1021
    %1030 = vst [vmem:[#allocation2 + $0x498] sm:$0xff] %v1022
    %1031 = vst [vmem:[#allocation2 + $0x4a0] sm:$0xff] %v1023
    %1032 = vst [vmem:[#allocation2 + $0x4a8] sm:$0xff] %v1024
    %1033 = vst [vmem:[#allocation2 + $0x4b0] sm:$0xff] %v1025
    %1034 = vst [vmem:[#allocation2 + $0x4b8] sm:$0xff] %v1026
    %v1035 = vsel %vm242, %v378, 0.0
    %v1036 = vsel %vm243, %v377, 0.0
    %v1037 = vsel %vm244, %v376, 0.0
    %v1038 = vsel %vm245, %v375, 0.0
    %v1039 = vsel %vm246, %v374, 0.0
    %v1040 = vsel %vm247, %v373, 0.0
    %v1041 = vsel %vm248, %v372, 0.0
    %v1042 = vsel %vm249, %v379, 0.0
    %1043 = vst [vmem:[#allocation2 + $0x4c0] sm:$0xff] %v1035
    %1044 = vst [vmem:[#allocation2 + $0x4c8] sm:$0xff] %v1036
    %1045 = vst [vmem:[#allocation2 + $0x4d0] sm:$0xff] %v1037
    %1046 = vst [vmem:[#allocation2 + $0x4d8] sm:$0xff] %v1038
    %1047 = vst [vmem:[#allocation2 + $0x4e0] sm:$0xff] %v1039
    %1048 = vst [vmem:[#allocation2 + $0x4e8] sm:$0xff] %v1040
    %1049 = vst [vmem:[#allocation2 + $0x4f0] sm:$0xff] %v1041
    %1050 = vst [vmem:[#allocation2 + $0x4f8] sm:$0xff] %v1042
    %v1051 = vsel %vm258, %v419, 0.0
    %v1052 = vsel %vm259, %v418, 0.0
    %v1053 = vsel %vm260, %v417, 0.0
    %v1054 = vsel %vm261, %v416, 0.0
    %v1055 = vsel %vm262, %v415, 0.0
    %v1056 = vsel %vm263, %v414, 0.0
    %v1057 = vsel %vm264, %v413, 0.0
    %v1058 = vsel %vm265, %v420, 0.0
    %1059 = vst [vmem:[#allocation2 + $0x500] sm:$0xff] %v1051
    %1060 = vst [vmem:[#allocation2 + $0x508] sm:$0xff] %v1052
    %1061 = vst [vmem:[#allocation2 + $0x510] sm:$0xff] %v1053
    %1062 = vst [vmem:[#allocation2 + $0x518] sm:$0xff] %v1054
    %1063 = vst [vmem:[#allocation2 + $0x520] sm:$0xff] %v1055
    %1064 = vst [vmem:[#allocation2 + $0x528] sm:$0xff] %v1056
    %1065 = vst [vmem:[#allocation2 + $0x530] sm:$0xff] %v1057
    %1066 = vst [vmem:[#allocation2 + $0x538] sm:$0xff] %v1058
    %v1067 = vsel %vm266, %v460, 0.0
    %v1068 = vsel %vm267, %v459, 0.0
    %v1069 = vsel %vm268, %v458, 0.0
    %v1070 = vsel %vm269, %v457, 0.0
    %v1071 = vsel %vm270, %v456, 0.0
    %v1072 = vsel %vm271, %v455, 0.0
    %v1073 = vsel %vm272, %v454, 0.0
    %v1074 = vsel %vm273, %v461, 0.0
    %1075 = vst [vmem:[#allocation2 + $0x540] sm:$0xff] %v1067
    %1076 = vst [vmem:[#allocation2 + $0x548] sm:$0xff] %v1068
    %1077 = vst [vmem:[#allocation2 + $0x550] sm:$0xff] %v1069
    %1078 = vst [vmem:[#allocation2 + $0x558] sm:$0xff] %v1070
    %1079 = vst [vmem:[#allocation2 + $0x560] sm:$0xff] %v1071
    %1080 = vst [vmem:[#allocation2 + $0x568] sm:$0xff] %v1072
    %1081 = vst [vmem:[#allocation2 + $0x570] sm:$0xff] %v1073
    %1082 = vst [vmem:[#allocation2 + $0x578] sm:$0xff] %v1074
    %v1083 = vsel %vm106, %v501, 0.0
    %v1084 = vsel %vm107, %v500, 0.0
    %v1085 = vsel %vm108, %v499, 0.0
    %v1086 = vsel %vm109, %v498, 0.0
    %v1087 = vsel %vm110, %v497, 0.0
    %v1088 = vsel %vm111, %v496, 0.0
    %v1089 = vsel %vm112, %v495, 0.0
    %v1090 = vsel %vm113, %v502, 0.0
    %1091 = vst [vmem:[#allocation2 + $0x580] sm:$0xff] %v1083
    %1092 = vst [vmem:[#allocation2 + $0x588] sm:$0xff] %v1084
    %1093 = vst [vmem:[#allocation2 + $0x590] sm:$0xff] %v1085
    %1094 = vst [vmem:[#allocation2 + $0x598] sm:$0xff] %v1086
    %1095 = vst [vmem:[#allocation2 + $0x5a0] sm:$0xff] %v1087
    %1096 = vst [vmem:[#allocation2 + $0x5a8] sm:$0xff] %v1088
    %1097 = vst [vmem:[#allocation2 + $0x5b0] sm:$0xff] %v1089
    %1098 = vst [vmem:[#allocation2 + $0x5b8] sm:$0xff] %v1090
    %v1099 = vsel %vm274, %v542, 0.0
    %v1100 = vsel %vm275, %v541, 0.0
    %v1101 = vsel %vm276, %v540, 0.0
    %v1102 = vsel %vm277, %v539, 0.0
    %v1103 = vsel %vm278, %v538, 0.0
    %v1104 = vsel %vm279, %v537, 0.0
    %v1105 = vsel %vm280, %v536, 0.0
    %v1106 = vsel %vm281, %v543, 0.0
    %1107 = vst [vmem:[#allocation2 + $0x5c0] sm:$0xff] %v1099
    %1108 = vst [vmem:[#allocation2 + $0x5c8] sm:$0xff] %v1100
    %1109 = vst [vmem:[#allocation2 + $0x5d0] sm:$0xff] %v1101
    %1110 = vst [vmem:[#allocation2 + $0x5d8] sm:$0xff] %v1102
    %1111 = vst [vmem:[#allocation2 + $0x5e0] sm:$0xff] %v1103
    %1112 = vst [vmem:[#allocation2 + $0x5e8] sm:$0xff] %v1104
    %1113 = vst [vmem:[#allocation2 + $0x5f0] sm:$0xff] %v1105
    %1114 = vst [vmem:[#allocation2 + $0x5f8] sm:$0xff] %v1106
    %v1115 = vsel %vm290, %v583, 0.0
    %v1116 = vsel %vm291, %v582, 0.0
    %v1117 = vsel %vm292, %v581, 0.0
    %v1118 = vsel %vm293, %v580, 0.0
    %v1119 = vsel %vm294, %v579, 0.0
    %v1120 = vsel %vm295, %v578, 0.0
    %v1121 = vsel %vm296, %v577, 0.0
    %v1122 = vsel %vm297, %v584, 0.0
    %1123 = vst [vmem:[#allocation2 + $0x600] sm:$0xff] %v1115
    %1124 = vst [vmem:[#allocation2 + $0x608] sm:$0xff] %v1116
    %1125 = vst [vmem:[#allocation2 + $0x610] sm:$0xff] %v1117
    %1126 = vst [vmem:[#allocation2 + $0x618] sm:$0xff] %v1118
    %1127 = vst [vmem:[#allocation2 + $0x620] sm:$0xff] %v1119
    %1128 = vst [vmem:[#allocation2 + $0x628] sm:$0xff] %v1120
    %1129 = vst [vmem:[#allocation2 + $0x630] sm:$0xff] %v1121
    %1130 = vst [vmem:[#allocation2 + $0x638] sm:$0xff] %v1122
    %v1131 = vsel %vm282, %v624, 0.0
    %v1132 = vsel %vm283, %v623, 0.0
    %v1133 = vsel %vm284, %v622, 0.0
    %v1134 = vsel %vm285, %v621, 0.0
    %v1135 = vsel %vm286, %v620, 0.0
    %v1136 = vsel %vm287, %v619, 0.0
    %v1137 = vsel %vm288, %v618, 0.0
    %v1138 = vsel %vm289, %v625, 0.0
    %1139 = vst [vmem:[#allocation2 + $0x640] sm:$0xff] %v1131
    %1140 = vst [vmem:[#allocation2 + $0x648] sm:$0xff] %v1132
    %1141 = vst [vmem:[#allocation2 + $0x650] sm:$0xff] %v1133
    %1142 = vst [vmem:[#allocation2 + $0x658] sm:$0xff] %v1134
    %1143 = vst [vmem:[#allocation2 + $0x660] sm:$0xff] %v1135
    %1144 = vst [vmem:[#allocation2 + $0x668] sm:$0xff] %v1136
    %1145 = vst [vmem:[#allocation2 + $0x670] sm:$0xff] %v1137
    %1146 = vst [vmem:[#allocation2 + $0x678] sm:$0xff] %v1138
    %v1147 = vsel %vm298, %v665, 0.0
    %v1148 = vsel %vm299, %v664, 0.0
    %v1149 = vsel %vm300, %v663, 0.0
    %v1150 = vsel %vm301, %v662, 0.0
    %v1151 = vsel %vm302, %v661, 0.0
    %v1152 = vsel %vm303, %v660, 0.0
    %v1153 = vsel %vm304, %v659, 0.0
    %v1154 = vsel %vm305, %v666, 0.0
    %1155 = vst [vmem:[#allocation2 + $0x680] sm:$0xff] %v1147
    %1156 = vst [vmem:[#allocation2 + $0x688] sm:$0xff] %v1148
    %1157 = vst [vmem:[#allocation2 + $0x690] sm:$0xff] %v1149
    %1158 = vst [vmem:[#allocation2 + $0x698] sm:$0xff] %v1150
    %1159 = vst [vmem:[#allocation2 + $0x6a0] sm:$0xff] %v1151
    %1160 = vst [vmem:[#allocation2 + $0x6a8] sm:$0xff] %v1152
    %1161 = vst [vmem:[#allocation2 + $0x6b0] sm:$0xff] %v1153
    %1162 = vst [vmem:[#allocation2 + $0x6b8] sm:$0xff] %v1154
    %v1163 = vld [vmem:[%s1] sm:$0xff]
    %v1164 = vld [vmem:[%s1 + $0x8] sm:$0xff]
    %v1165 = vld [vmem:[#allocation2] sm:$0xff]
    %v1166 = vld [vmem:[#allocation2 + $0x8] sm:$0xff]
    %v1167 = vld [vmem:[#allocation2 + $0x10] sm:$0xff]
    %v1168 = vld [vmem:[#allocation2 + $0x18] sm:$0xff]
    %v1169 = vld [vmem:[#allocation2 + $0x20] sm:$0xff]
    %v1170 = vld [vmem:[#allocation2 + $0x28] sm:$0xff]
    %v1171 = vld [vmem:[#allocation2 + $0x30] sm:$0xff]
    %v1172 = vld [vmem:[#allocation2 + $0x38] sm:$0xff]
    %v1173 = vld [vmem:[#allocation2 + $0x40] sm:$0xff]
    %v1174 = vld [vmem:[#allocation2 + $0x48] sm:$0xff]
    %v1175 = vld [vmem:[#allocation2 + $0x50] sm:$0xff]
    %v1176 = vld [vmem:[#allocation2 + $0x58] sm:$0xff]
    %v1177 = vld [vmem:[#allocation2 + $0x60] sm:$0xff]
    %v1178 = vld [vmem:[#allocation2 + $0x68] sm:$0xff]
    %v1179 = vld [vmem:[#allocation2 + $0x70] sm:$0xff]
    %v1180 = vld [vmem:[#allocation2 + $0x78] sm:$0xff]
    %v1181 = vld [vmem:[#allocation2 + $0x80] sm:$0xff]
    %v1182 = vld [vmem:[#allocation2 + $0x88] sm:$0xff]
    %v1183 = vld [vmem:[#allocation2 + $0x90] sm:$0xff]
    %v1184 = vld [vmem:[#allocation2 + $0x98] sm:$0xff]
    %v1185 = vld [vmem:[#allocation2 + $0xa0] sm:$0xff]
    %v1186 = vld [vmem:[#allocation2 + $0xa8] sm:$0xff]
    %v1187 = vld [vmem:[#allocation2 + $0xb0] sm:$0xff]
    %v1188 = vld [vmem:[#allocation2 + $0xb8] sm:$0xff]
    %v1189 = vld [vmem:[#allocation2 + $0xc0] sm:$0xff]
    %v1190 = vld [vmem:[#allocation2 + $0xc8] sm:$0xff]
    %v1191 = vld [vmem:[#allocation2 + $0xd0] sm:$0xff]
    %v1192 = vld [vmem:[#allocation2 + $0xd8] sm:$0xff]
    %v1193 = vld [vmem:[#allocation2 + $0xe0] sm:$0xff]
    %v1194 = vld [vmem:[#allocation2 + $0xe8] sm:$0xff]
    %v1195 = vld [vmem:[#allocation2 + $0xf0] sm:$0xff]
    %v1196 = vld [vmem:[#allocation2 + $0xf8] sm:$0xff]
    %v1197 = vld [vmem:[#allocation2 + $0x100] sm:$0xff]
    %v1198 = vld [vmem:[#allocation2 + $0x108] sm:$0xff]
    %v1199 = vld [vmem:[#allocation2 + $0x110] sm:$0xff]
    %v1200 = vld [vmem:[#allocation2 + $0x118] sm:$0xff]
    %v1201 = vld [vmem:[#allocation2 + $0x120] sm:$0xff]
    %v1202 = vld [vmem:[#allocation2 + $0x128] sm:$0xff]
    %v1203 = vld [vmem:[#allocation2 + $0x130] sm:$0xff]
    %v1204 = vld [vmem:[#allocation2 + $0x138] sm:$0xff]
    %v1205 = vld [vmem:[#allocation2 + $0x140] sm:$0xff]
    %v1206 = vld [vmem:[#allocation2 + $0x148] sm:$0xff]
    %v1207 = vld [vmem:[#allocation2 + $0x150] sm:$0xff]
    %v1208 = vld [vmem:[#allocation2 + $0x158] sm:$0xff]
    %v1209 = vld [vmem:[#allocation2 + $0x160] sm:$0xff]
    %v1210 = vld [vmem:[#allocation2 + $0x168] sm:$0xff]
    %v1211 = vld [vmem:[#allocation2 + $0x170] sm:$0xff]
    %v1212 = vld [vmem:[#allocation2 + $0x178] sm:$0xff]
    %v1213 = vld [vmem:[#allocation2 + $0x180] sm:$0xff]
    %v1214 = vld [vmem:[#allocation2 + $0x188] sm:$0xff]
    %v1215 = vld [vmem:[#allocation2 + $0x190] sm:$0xff]
    %v1216 = vld [vmem:[#allocation2 + $0x198] sm:$0xff]
    %v1217 = vld [vmem:[#allocation2 + $0x1a0] sm:$0xff]
    %v1218 = vld [vmem:[#allocation2 + $0x1a8] sm:$0xff]
    %v1219 = vld [vmem:[#allocation2 + $0x1b0] sm:$0xff]
    %v1220 = vld [vmem:[#allocation2 + $0x1b8] sm:$0xff]
    %v1221 = vld [vmem:[#allocation2 + $0x1c0] sm:$0xff]
    %v1222 = vld [vmem:[#allocation2 + $0x1c8] sm:$0xff]
    %v1223 = vld [vmem:[#allocation2 + $0x1d0] sm:$0xff]
    %v1224 = vld [vmem:[#allocation2 + $0x1d8] sm:$0xff]
    %v1225 = vld [vmem:[#allocation2 + $0x1e0] sm:$0xff]
    %v1226 = vld [vmem:[#allocation2 + $0x1e8] sm:$0xff]
    %v1227 = vld [vmem:[#allocation2 + $0x1f0] sm:$0xff]
    %v1228 = vld [vmem:[#allocation2 + $0x1f8] sm:$0xff]
    %v1229 = vld [vmem:[#allocation2 + $0x200] sm:$0xff]
    %v1230 = vld [vmem:[#allocation2 + $0x208] sm:$0xff]
    %v1231 = vld [vmem:[#allocation2 + $0x210] sm:$0xff]
    %v1232 = vld [vmem:[#allocation2 + $0x218] sm:$0xff]
    %v1233 = vld [vmem:[#allocation2 + $0x220] sm:$0xff]
    %v1234 = vld [vmem:[#allocation2 + $0x228] sm:$0xff]
    %v1235 = vld [vmem:[#allocation2 + $0x230] sm:$0xff]
    %v1236 = vld [vmem:[#allocation2 + $0x238] sm:$0xff]
    %v1237 = vld [vmem:[#allocation2 + $0x240] sm:$0xff]
    %v1238 = vld [vmem:[#allocation2 + $0x248] sm:$0xff]
    %v1239 = vld [vmem:[#allocation2 + $0x250] sm:$0xff]
    %v1240 = vld [vmem:[#allocation2 + $0x258] sm:$0xff]
    %v1241 = vld [vmem:[#allocation2 + $0x260] sm:$0xff]
    %v1242 = vld [vmem:[#allocation2 + $0x268] sm:$0xff]
    %v1243 = vld [vmem:[#allocation2 + $0x270] sm:$0xff]
    %v1244 = vld [vmem:[#allocation2 + $0x278] sm:$0xff]
    %v1245 = vld [vmem:[#allocation2 + $0x280] sm:$0xff]
    %v1246 = vld [vmem:[#allocation2 + $0x288] sm:$0xff]
    %v1247 = vld [vmem:[#allocation2 + $0x290] sm:$0xff]
    %v1248 = vld [vmem:[#allocation2 + $0x298] sm:$0xff]
    %v1249 = vld [vmem:[#allocation2 + $0x2a0] sm:$0xff]
    %v1250 = vld [vmem:[#allocation2 + $0x2a8] sm:$0xff]
    %v1251 = vld [vmem:[#allocation2 + $0x2b0] sm:$0xff]
    %v1252 = vld [vmem:[#allocation2 + $0x2b8] sm:$0xff]
    %v1253 = vld [vmem:[#allocation2 + $0x2c0] sm:$0xff]
    %v1254 = vld [vmem:[#allocation2 + $0x2c8] sm:$0xff]
    %v1255 = vld [vmem:[#allocation2 + $0x2d0] sm:$0xff]
    %v1256 = vld [vmem:[#allocation2 + $0x2d8] sm:$0xff]
    %v1257 = vld [vmem:[#allocation2 + $0x2e0] sm:$0xff]
    %v1258 = vld [vmem:[#allocation2 + $0x2e8] sm:$0xff]
    %v1259 = vld [vmem:[#allocation2 + $0x2f0] sm:$0xff]
    %v1260 = vld [vmem:[#allocation2 + $0x2f8] sm:$0xff]
    %v1261 = vld [vmem:[#allocation2 + $0x300] sm:$0xff]
    %v1262 = vld [vmem:[#allocation2 + $0x308] sm:$0xff]
    %v1263 = vld [vmem:[#allocation2 + $0x310] sm:$0xff]
    %v1264 = vld [vmem:[#allocation2 + $0x318] sm:$0xff]
    %v1265 = vld [vmem:[#allocation2 + $0x320] sm:$0xff]
    %v1266 = vld [vmem:[#allocation2 + $0x328] sm:$0xff]
    %v1267 = vld [vmem:[#allocation2 + $0x330] sm:$0xff]
    %v1268 = vld [vmem:[#allocation2 + $0x338] sm:$0xff]
    %v1269 = vld [vmem:[#allocation2 + $0x340] sm:$0xff]
    %v1270 = vld [vmem:[#allocation2 + $0x348] sm:$0xff]
    %v1271 = vld [vmem:[#allocation2 + $0x350] sm:$0xff]
    %v1272 = vld [vmem:[#allocation2 + $0x358] sm:$0xff]
    %v1273 = vld [vmem:[#allocation2 + $0x360] sm:$0xff]
    %v1274 = vld [vmem:[#allocation2 + $0x368] sm:$0xff]
    %v1275 = vld [vmem:[#allocation2 + $0x370] sm:$0xff]
    %v1276 = vld [vmem:[#allocation2 + $0x378] sm:$0xff]
    %v1277 = vld [vmem:[#allocation2 + $0x380] sm:$0xff]
    %v1278 = vld [vmem:[#allocation2 + $0x388] sm:$0xff]
    %v1279 = vld [vmem:[#allocation2 + $0x390] sm:$0xff]
    %v1280 = vld [vmem:[#allocation2 + $0x398] sm:$0xff]
    %v1281 = vld [vmem:[#allocation2 + $0x3a0] sm:$0xff]
    %v1282 = vld [vmem:[#allocation2 + $0x3a8] sm:$0xff]
    %v1283 = vld [vmem:[#allocation2 + $0x3b0] sm:$0xff]
    %v1284 = vld [vmem:[#allocation2 + $0x3b8] sm:$0xff]
    %v1285 = vld [vmem:[#allocation2 + $0x3c0] sm:$0xff]
    %v1286 = vld [vmem:[#allocation2 + $0x3c8] sm:$0xff]
    %v1287 = vld [vmem:[#allocation2 + $0x3d0] sm:$0xff]
    %v1288 = vld [vmem:[#allocation2 + $0x3d8] sm:$0xff]
    %v1289 = vld [vmem:[#allocation2 + $0x3e0] sm:$0xff]
    %v1290 = vld [vmem:[#allocation2 + $0x3e8] sm:$0xff]
    %v1291 = vld [vmem:[#allocation2 + $0x3f0] sm:$0xff]
    %v1292 = vld [vmem:[#allocation2 + $0x3f8] sm:$0xff]
    %v1293 = vld [vmem:[#allocation2 + $0x400] sm:$0xff]
    %v1294 = vld [vmem:[#allocation2 + $0x408] sm:$0xff]
    %v1295 = vld [vmem:[#allocation2 + $0x410] sm:$0xff]
    %v1296 = vld [vmem:[#allocation2 + $0x418] sm:$0xff]
    %v1297 = vld [vmem:[#allocation2 + $0x420] sm:$0xff]
    %v1298 = vld [vmem:[#allocation2 + $0x428] sm:$0xff]
    %v1299 = vld [vmem:[#allocation2 + $0x430] sm:$0xff]
    %v1300 = vld [vmem:[#allocation2 + $0x438] sm:$0xff]
    %v1301 = vld [vmem:[#allocation2 + $0x440] sm:$0xff]
    %v1302 = vld [vmem:[#allocation2 + $0x448] sm:$0xff]
    %v1303 = vld [vmem:[#allocation2 + $0x450] sm:$0xff]
    %v1304 = vld [vmem:[#allocation2 + $0x458] sm:$0xff]
    %v1305 = vld [vmem:[#allocation2 + $0x460] sm:$0xff]
    %v1306 = vld [vmem:[#allocation2 + $0x468] sm:$0xff]
    %v1307 = vld [vmem:[#allocation2 + $0x470] sm:$0xff]
    %v1308 = vld [vmem:[#allocation2 + $0x478] sm:$0xff]
    %v1309 = vld [vmem:[#allocation2 + $0x480] sm:$0xff]
    %v1310 = vld [vmem:[#allocation2 + $0x488] sm:$0xff]
    %v1311 = vld [vmem:[#allocation2 + $0x490] sm:$0xff]
    %v1312 = vld [vmem:[#allocation2 + $0x498] sm:$0xff]
    %v1313 = vld [vmem:[#allocation2 + $0x4a0] sm:$0xff]
    %v1314 = vld [vmem:[#allocation2 + $0x4a8] sm:$0xff]
    %v1315 = vld [vmem:[#allocation2 + $0x4b0] sm:$0xff]
    %v1316 = vld [vmem:[#allocation2 + $0x4b8] sm:$0xff]
    %v1317 = vld [vmem:[#allocation2 + $0x4c0] sm:$0xff]
    %v1318 = vld [vmem:[#allocation2 + $0x4c8] sm:$0xff]
    %v1319 = vld [vmem:[#allocation2 + $0x4d0] sm:$0xff]
    %v1320 = vld [vmem:[#allocation2 + $0x4d8] sm:$0xff]
    %v1321 = vld [vmem:[#allocation2 + $0x4e0] sm:$0xff]
    %v1322 = vld [vmem:[#allocation2 + $0x4e8] sm:$0xff]
    %v1323 = vld [vmem:[#allocation2 + $0x4f0] sm:$0xff]
    %v1324 = vld [vmem:[#allocation2 + $0x4f8] sm:$0xff]
    %v1325 = vld [vmem:[#allocation2 + $0x500] sm:$0xff]
    %v1326 = vld [vmem:[#allocation2 + $0x508] sm:$0xff]
    %v1327 = vld [vmem:[#allocation2 + $0x510] sm:$0xff]
    %v1328 = vld [vmem:[#allocation2 + $0x518] sm:$0xff]
    %v1329 = vld [vmem:[#allocation2 + $0x520] sm:$0xff]
    %v1330 = vld [vmem:[#allocation2 + $0x528] sm:$0xff]
    %v1331 = vld [vmem:[#allocation2 + $0x530] sm:$0xff]
    %v1332 = vld [vmem:[#allocation2 + $0x538] sm:$0xff]
    %v1333 = vld [vmem:[#allocation2 + $0x540] sm:$0xff]
    %v1334 = vld [vmem:[#allocation2 + $0x548] sm:$0xff]
    %v1335 = vld [vmem:[#allocation2 + $0x550] sm:$0xff]
    %v1336 = vld [vmem:[#allocation2 + $0x558] sm:$0xff]
    %v1337 = vld [vmem:[#allocation2 + $0x560] sm:$0xff]
    %v1338 = vld [vmem:[#allocation2 + $0x568] sm:$0xff]
    %v1339 = vld [vmem:[#allocation2 + $0x570] sm:$0xff]
    %v1340 = vld [vmem:[#allocation2 + $0x578] sm:$0xff]
    %v1341 = vld [vmem:[#allocation2 + $0x580] sm:$0xff]
    %v1342 = vld [vmem:[#allocation2 + $0x588] sm:$0xff]
    %v1343 = vld [vmem:[#allocation2 + $0x590] sm:$0xff]
    %v1344 = vld [vmem:[#allocation2 + $0x598] sm:$0xff]
    %v1345 = vld [vmem:[#allocation2 + $0x5a0] sm:$0xff]
    %v1346 = vld [vmem:[#allocation2 + $0x5a8] sm:$0xff]
    %v1347 = vld [vmem:[#allocation2 + $0x5b0] sm:$0xff]
    %v1348 = vld [vmem:[#allocation2 + $0x5b8] sm:$0xff]
    %v1349 = vld [vmem:[#allocation2 + $0x5c0] sm:$0xff]
    %v1350 = vld [vmem:[#allocation2 + $0x5c8] sm:$0xff]
    %v1351 = vld [vmem:[#allocation2 + $0x5d0] sm:$0xff]
    %v1352 = vld [vmem:[#allocation2 + $0x5d8] sm:$0xff]
    %v1353 = vld [vmem:[#allocation2 + $0x5e0] sm:$0xff]
    %v1354 = vld [vmem:[#allocation2 + $0x5e8] sm:$0xff]
    %v1355 = vld [vmem:[#allocation2 + $0x5f0] sm:$0xff]
    %v1356 = vld [vmem:[#allocation2 + $0x5f8] sm:$0xff]
    %v1357 = vld [vmem:[#allocation2 + $0x600] sm:$0xff]
    %v1358 = vld [vmem:[#allocation2 + $0x608] sm:$0xff]
    %v1359 = vld [vmem:[#allocation2 + $0x610] sm:$0xff]
    %v1360 = vld [vmem:[#allocation2 + $0x618] sm:$0xff]
    %v1361 = vld [vmem:[#allocation2 + $0x620] sm:$0xff]
    %v1362 = vld [vmem:[#allocation2 + $0x628] sm:$0xff]
    %v1363 = vld [vmem:[#allocation2 + $0x630] sm:$0xff]
    %v1364 = vld [vmem:[#allocation2 + $0x638] sm:$0xff]
    %v1365 = vld [vmem:[#allocation2 + $0x640] sm:$0xff]
    %v1366 = vld [vmem:[#allocation2 + $0x648] sm:$0xff]
    %v1367 = vld [vmem:[#allocation2 + $0x650] sm:$0xff]
    %v1368 = vld [vmem:[#allocation2 + $0x658] sm:$0xff]
    %v1369 = vld [vmem:[#allocation2 + $0x660] sm:$0xff]
    %v1370 = vld [vmem:[#allocation2 + $0x668] sm:$0xff]
    %v1371 = vld [vmem:[#allocation2 + $0x670] sm:$0xff]
    %v1372 = vld [vmem:[#allocation2 + $0x678] sm:$0xff]
    %v1373 = vld [vmem:[#allocation2 + $0x680] sm:$0xff]
    %v1374 = vld [vmem:[#allocation2 + $0x688] sm:$0xff]
    %v1375 = vld [vmem:[#allocation2 + $0x690] sm:$0xff]
    %v1376 = vld [vmem:[#allocation2 + $0x698] sm:$0xff]
    %v1377 = vld [vmem:[#allocation2 + $0x6a0] sm:$0xff]
    %v1378 = vld [vmem:[#allocation2 + $0x6a8] sm:$0xff]
    %v1379 = vld [vmem:[#allocation2 + $0x6b0] sm:$0xff]
    %v1380 = vld [vmem:[#allocation2 + $0x6b8] sm:$0xff]
    %vm1381 = vcmask 719872
    %v1383 = vsel %vm1381, %v1164, 0
    %1385 = vmatpush.msra.mxu0 %v1285
    %1386 = vmatpush.msra.mxu0 %v1277
    %1387 = vmatpush.msra.mxu0 %v1269
    %1388 = vmatpush.msra.mxu0 %v1261
    %1389 = vmatpush.msra.mxu0 %v1253
    %1390 = vmatpush.msra.mxu0 %v1245
    %1391 = vmatpush.msra.mxu0 %v1237
    %1392 = vmatpush.msra.mxu0 %v1229
    %1393 = vmatpush.msra.mxu0 %v1221
    %1394 = vmatpush.msra.mxu0 %v1213
    %1395 = vmatpush.msra.mxu0 %v1205
    %1396 = vmatpush.msra.mxu0 %v1197
    %1397 = vmatpush.msra.mxu0 %v1189
    %1398 = vmatpush.msra.mxu0 %v1181
    %1399 = vmatpush.msra.mxu0 %v1173
    %1400 = vmatpush.msra.mxu0 %v1165
    %1401 = vmatmul.f32.gmra.mxu0 %v1163
    %v1402 = vpop.f32.mrf.mxu0
    %v1403 = vadd.f32 0.0, %v1402
    %1404 = vdwg.mxu0
    %1405 = vmatpush.msra.mxu0 0.0
    %1406 = vmatpush.msra.mxu0 0.0
    %1407 = vmatpush.msra.mxu0 0.0
    %1408 = vmatpush.msra.mxu0 0.0
    %1409 = vmatpush.msra.mxu0 0.0
    %1410 = vmatpush.msra.mxu0 %v1373
    %1411 = vmatpush.msra.mxu0 %v1365
    %1412 = vmatpush.msra.mxu0 %v1357
    %1413 = vmatpush.msra.mxu0 %v1349
    %1414 = vmatpush.msra.mxu0 %v1341
    %1415 = vmatpush.msra.mxu0 %v1333
    %1416 = vmatpush.msra.mxu0 %v1325
    %1417 = vmatpush.msra.mxu0 %v1317
    %1418 = vmatpush.msra.mxu0 %v1309
    %1419 = vmatpush.msra.mxu0 %v1301
    %1420 = vmatpush.msra.mxu0 %v1293
    %1421 = vmatmul.f32.gmra.mxu0 %v1383
    %v1422 = vpop.f32.mrf.mxu0
    %v1423 = vadd.f32 %v1403, %v1422
    %1424 = vdwg.mxu0
    %1425 = vmatpush.msra.mxu0 %v1286
    %1426 = vmatpush.msra.mxu0 %v1278
    %1427 = vmatpush.msra.mxu0 %v1270
    %1428 = vmatpush.msra.mxu0 %v1262
    %1429 = vmatpush.msra.mxu0 %v1254
    %1430 = vmatpush.msra.mxu0 %v1246
    %1431 = vmatpush.msra.mxu0 %v1238
    %1432 = vmatpush.msra.mxu0 %v1230
    %1433 = vmatpush.msra.mxu0 %v1222
    %1434 = vmatpush.msra.mxu0 %v1214
    %1435 = vmatpush.msra.mxu0 %v1206
    %1436 = vmatpush.msra.mxu0 %v1198
    %1437 = vmatpush.msra.mxu0 %v1190
    %1438 = vmatpush.msra.mxu0 %v1182
    %1439 = vmatpush.msra.mxu0 %v1174
    %1440 = vmatpush.msra.mxu0 %v1166
    %1441 = vmatmul.f32.gmra.mxu0 %v1163
    %v1442 = vpop.f32.mrf.mxu0
    %v1443 = vadd.f32 0.0, %v1442
    %1444 = vdwg.mxu0
    %1445 = vmatpush.msra.mxu0 0.0
    %1446 = vmatpush.msra.mxu0 0.0
    %1447 = vmatpush.msra.mxu0 0.0
    %1448 = vmatpush.msra.mxu0 0.0
    %1449 = vmatpush.msra.mxu0 0.0
    %1450 = vmatpush.msra.mxu0 %v1374
    %1451 = vmatpush.msra.mxu0 %v1366
    %1452 = vmatpush.msra.mxu0 %v1358
    %1453 = vmatpush.msra.mxu0 %v1350
    %1454 = vmatpush.msra.mxu0 %v1342
    %1455 = vmatpush.msra.mxu0 %v1334
    %1456 = vmatpush.msra.mxu0 %v1326
    %1457 = vmatpush.msra.mxu0 %v1318
    %1458 = vmatpush.msra.mxu0 %v1310
    %1459 = vmatpush.msra.mxu0 %v1302
    %1460 = vmatpush.msra.mxu0 %v1294
    %1461 = vmatmul.f32.gmra.mxu0 %v1383
    %v1462 = vpop.f32.mrf.mxu0
    %v1463 = vadd.f32 %v1443, %v1462
    %1464 = vdwg.mxu0
    %1465 = vmatpush.msra.mxu0 %v1287
    %1466 = vmatpush.msra.mxu0 %v1279
    %1467 = vmatpush.msra.mxu0 %v1271
    %1468 = vmatpush.msra.mxu0 %v1263
    %1469 = vmatpush.msra.mxu0 %v1255
    %1470 = vmatpush.msra.mxu0 %v1247
    %1471 = vmatpush.msra.mxu0 %v1239
    %1472 = vmatpush.msra.mxu0 %v1231
    %1473 = vmatpush.msra.mxu0 %v1223
    %1474 = vmatpush.msra.mxu0 %v1215
    %1475 = vmatpush.msra.mxu0 %v1207
    %1476 = vmatpush.msra.mxu0 %v1199
    %1477 = vmatpush.msra.mxu0 %v1191
    %1478 = vmatpush.msra.mxu0 %v1183
    %1479 = vmatpush.msra.mxu0 %v1175
    %1480 = vmatpush.msra.mxu0 %v1167
    %1481 = vmatmul.f32.gmra.mxu0 %v1163
    %v1482 = vpop.f32.mrf.mxu0
    %v1483 = vadd.f32 0.0, %v1482
    %1484 = vdwg.mxu0
    %1485 = vmatpush.msra.mxu0 0.0
    %1486 = vmatpush.msra.mxu0 0.0
    %1487 = vmatpush.msra.mxu0 0.0
    %1488 = vmatpush.msra.mxu0 0.0
    %1489 = vmatpush.msra.mxu0 0.0
    %1490 = vmatpush.msra.mxu0 %v1375
    %1491 = vmatpush.msra.mxu0 %v1367
    %1492 = vmatpush.msra.mxu0 %v1359
    %1493 = vmatpush.msra.mxu0 %v1351
    %1494 = vmatpush.msra.mxu0 %v1343
    %1495 = vmatpush.msra.mxu0 %v1335
    %1496 = vmatpush.msra.mxu0 %v1327
    %1497 = vmatpush.msra.mxu0 %v1319
    %1498 = vmatpush.msra.mxu0 %v1311
    %1499 = vmatpush.msra.mxu0 %v1303
    %1500 = vmatpush.msra.mxu0 %v1295
    %1501 = vmatmul.f32.gmra.mxu0 %v1383
    %v1502 = vpop.f32.mrf.mxu0
    %v1503 = vadd.f32 %v1483, %v1502
    %1504 = vdwg.mxu0
    %1505 = vmatpush.msra.mxu0 %v1288
    %1506 = vmatpush.msra.mxu0 %v1280
    %1507 = vmatpush.msra.mxu0 %v1272
    %1508 = vmatpush.msra.mxu0 %v1264
    %1509 = vmatpush.msra.mxu0 %v1256
    %1510 = vmatpush.msra.mxu0 %v1248
    %1511 = vmatpush.msra.mxu0 %v1240
    %1512 = vmatpush.msra.mxu0 %v1232
    %1513 = vmatpush.msra.mxu0 %v1224
    %1514 = vmatpush.msra.mxu0 %v1216
    %1515 = vmatpush.msra.mxu0 %v1208
    %1516 = vmatpush.msra.mxu0 %v1200
    %1517 = vmatpush.msra.mxu0 %v1192
    %1518 = vmatpush.msra.mxu0 %v1184
    %1519 = vmatpush.msra.mxu0 %v1176
    %1520 = vmatpush.msra.mxu0 %v1168
    %1521 = vmatmul.f32.gmra.mxu0 %v1163
    %v1522 = vpop.f32.mrf.mxu0
    %v1523 = vadd.f32 0.0, %v1522
    %1524 = vdwg.mxu0
    %1525 = vmatpush.msra.mxu0 0.0
    %1526 = vmatpush.msra.mxu0 0.0
    %1527 = vmatpush.msra.mxu0 0.0
    %1528 = vmatpush.msra.mxu0 0.0
    %1529 = vmatpush.msra.mxu0 0.0
    %1530 = vmatpush.msra.mxu0 %v1376
    %1531 = vmatpush.msra.mxu0 %v1368
    %1532 = vmatpush.msra.mxu0 %v1360
    %1533 = vmatpush.msra.mxu0 %v1352
    %1534 = vmatpush.msra.mxu0 %v1344
    %1535 = vmatpush.msra.mxu0 %v1336
    %1536 = vmatpush.msra.mxu0 %v1328
    %1537 = vmatpush.msra.mxu0 %v1320
    %1538 = vmatpush.msra.mxu0 %v1312
    %1539 = vmatpush.msra.mxu0 %v1304
    %1540 = vmatpush.msra.mxu0 %v1296
    %1541 = vmatmul.f32.gmra.mxu0 %v1383
    %v1542 = vpop.f32.mrf.mxu0
    %v1543 = vadd.f32 %v1523, %v1542
    %1544 = vdwg.mxu0
    %1545 = vmatpush.msra.mxu0 %v1289
    %1546 = vmatpush.msra.mxu0 %v1281
    %1547 = vmatpush.msra.mxu0 %v1273
    %1548 = vmatpush.msra.mxu0 %v1265
    %1549 = vmatpush.msra.mxu0 %v1257
    %1550 = vmatpush.msra.mxu0 %v1249
    %1551 = vmatpush.msra.mxu0 %v1241
    %1552 = vmatpush.msra.mxu0 %v1233
    %1553 = vmatpush.msra.mxu0 %v1225
    %1554 = vmatpush.msra.mxu0 %v1217
    %1555 = vmatpush.msra.mxu0 %v1209
    %1556 = vmatpush.msra.mxu0 %v1201
    %1557 = vmatpush.msra.mxu0 %v1193
    %1558 = vmatpush.msra.mxu0 %v1185
    %1559 = vmatpush.msra.mxu0 %v1177
    %1560 = vmatpush.msra.mxu0 %v1169
    %1561 = vmatmul.f32.gmra.mxu0 %v1163
    %v1562 = vpop.f32.mrf.mxu0
    %v1563 = vadd.f32 0.0, %v1562
    %1564 = vdwg.mxu0
    %1565 = vmatpush.msra.mxu0 0.0
    %1566 = vmatpush.msra.mxu0 0.0
    %1567 = vmatpush.msra.mxu0 0.0
    %1568 = vmatpush.msra.mxu0 0.0
    %1569 = vmatpush.msra.mxu0 0.0
    %1570 = vmatpush.msra.mxu0 %v1377
    %1571 = vmatpush.msra.mxu0 %v1369
    %1572 = vmatpush.msra.mxu0 %v1361
    %1573 = vmatpush.msra.mxu0 %v1353
    %1574 = vmatpush.msra.mxu0 %v1345
    %1575 = vmatpush.msra.mxu0 %v1337
    %1576 = vmatpush.msra.mxu0 %v1329
    %1577 = vmatpush.msra.mxu0 %v1321
    %1578 = vmatpush.msra.mxu0 %v1313
    %1579 = vmatpush.msra.mxu0 %v1305
    %1580 = vmatpush.msra.mxu0 %v1297
    %1581 = vmatmul.f32.gmra.mxu0 %v1383
    %v1582 = vpop.f32.mrf.mxu0
    %v1583 = vadd.f32 %v1563, %v1582
    %1584 = vdwg.mxu0
    %1585 = vmatpush.msra.mxu0 %v1290
    %1586 = vmatpush.msra.mxu0 %v1282
    %1587 = vmatpush.msra.mxu0 %v1274
    %1588 = vmatpush.msra.mxu0 %v1266
    %1589 = vmatpush.msra.mxu0 %v1258
    %1590 = vmatpush.msra.mxu0 %v1250
    %1591 = vmatpush.msra.mxu0 %v1242
    %1592 = vmatpush.msra.mxu0 %v1234
    %1593 = vmatpush.msra.mxu0 %v1226
    %1594 = vmatpush.msra.mxu0 %v1218
    %1595 = vmatpush.msra.mxu0 %v1210
    %1596 = vmatpush.msra.mxu0 %v1202
    %1597 = vmatpush.msra.mxu0 %v1194
    %1598 = vmatpush.msra.mxu0 %v1186
    %1599 = vmatpush.msra.mxu0 %v1178
    %1600 = vmatpush.msra.mxu0 %v1170
    %1601 = vmatmul.f32.gmra.mxu0 %v1163
    %v1602 = vpop.f32.mrf.mxu0
    %v1603 = vadd.f32 0.0, %v1602
    %1604 = vdwg.mxu0
    %1605 = vmatpush.msra.mxu0 0.0
    %1606 = vmatpush.msra.mxu0 0.0
    %1607 = vmatpush.msra.mxu0 0.0
    %1608 = vmatpush.msra.mxu0 0.0
    %1609 = vmatpush.msra.mxu0 0.0
    %1610 = vmatpush.msra.mxu0 %v1378
    %1611 = vmatpush.msra.mxu0 %v1370
    %1612 = vmatpush.msra.mxu0 %v1362
    %1613 = vmatpush.msra.mxu0 %v1354
    %1614 = vmatpush.msra.mxu0 %v1346
    %1615 = vmatpush.msra.mxu0 %v1338
    %1616 = vmatpush.msra.mxu0 %v1330
    %1617 = vmatpush.msra.mxu0 %v1322
    %1618 = vmatpush.msra.mxu0 %v1314
    %1619 = vmatpush.msra.mxu0 %v1306
    %1620 = vmatpush.msra.mxu0 %v1298
    %1621 = vmatmul.f32.gmra.mxu0 %v1383
    %v1622 = vpop.f32.mrf.mxu0
    %v1623 = vadd.f32 %v1603, %v1622
    %1624 = vdwg.mxu0
    %1625 = vmatpush.msra.mxu0 %v1291
    %1626 = vmatpush.msra.mxu0 %v1283
    %1627 = vmatpush.msra.mxu0 %v1275
    %1628 = vmatpush.msra.mxu0 %v1267
    %1629 = vmatpush.msra.mxu0 %v1259
    %1630 = vmatpush.msra.mxu0 %v1251
    %1631 = vmatpush.msra.mxu0 %v1243
    %1632 = vmatpush.msra.mxu0 %v1235
    %1633 = vmatpush.msra.mxu0 %v1227
    %1634 = vmatpush.msra.mxu0 %v1219
    %1635 = vmatpush.msra.mxu0 %v1211
    %1636 = vmatpush.msra.mxu0 %v1203
    %1637 = vmatpush.msra.mxu0 %v1195
    %1638 = vmatpush.msra.mxu0 %v1187
    %1639 = vmatpush.msra.mxu0 %v1179
    %1640 = vmatpush.msra.mxu0 %v1171
    %1641 = vmatmul.f32.gmra.mxu0 %v1163
    %v1642 = vpop.f32.mrf.mxu0
    %v1643 = vadd.f32 0.0, %v1642
    %1644 = vdwg.mxu0
    %1645 = vmatpush.msra.mxu0 0.0
    %1646 = vmatpush.msra.mxu0 0.0
    %1647 = vmatpush.msra.mxu0 0.0
    %1648 = vmatpush.msra.mxu0 0.0
    %1649 = vmatpush.msra.mxu0 0.0
    %1650 = vmatpush.msra.mxu0 %v1379
    %1651 = vmatpush.msra.mxu0 %v1371
    %1652 = vmatpush.msra.mxu0 %v1363
    %1653 = vmatpush.msra.mxu0 %v1355
    %1654 = vmatpush.msra.mxu0 %v1347
    %1655 = vmatpush.msra.mxu0 %v1339
    %1656 = vmatpush.msra.mxu0 %v1331
    %1657 = vmatpush.msra.mxu0 %v1323
    %1658 = vmatpush.msra.mxu0 %v1315
    %1659 = vmatpush.msra.mxu0 %v1307
    %1660 = vmatpush.msra.mxu0 %v1299
    %1661 = vmatmul.f32.gmra.mxu0 %v1383
    %v1662 = vpop.f32.mrf.mxu0
    %v1663 = vadd.f32 %v1643, %v1662
    %1664 = vdwg.mxu0
    %1665 = vmatpush.msra.mxu0 %v1292
    %1666 = vmatpush.msra.mxu0 %v1284
    %1667 = vmatpush.msra.mxu0 %v1276
    %1668 = vmatpush.msra.mxu0 %v1268
    %1669 = vmatpush.msra.mxu0 %v1260
    %1670 = vmatpush.msra.mxu0 %v1252
    %1671 = vmatpush.msra.mxu0 %v1244
    %1672 = vmatpush.msra.mxu0 %v1236
    %1673 = vmatpush.msra.mxu0 %v1228
    %1674 = vmatpush.msra.mxu0 %v1220
    %1675 = vmatpush.msra.mxu0 %v1212
    %1676 = vmatpush.msra.mxu0 %v1204
    %1677 = vmatpush.msra.mxu0 %v1196
    %1678 = vmatpush.msra.mxu0 %v1188
    %1679 = vmatpush.msra.mxu0 %v1180
    %1680 = vmatpush.msra.mxu0 %v1172
    %1681 = vmatmul.f32.gmra.mxu0 %v1163
    %v1682 = vpop.f32.mrf.mxu0
    %v1683 = vadd.f32 0.0, %v1682
    %1684 = vdwg.mxu0
    %1685 = vmatpush.msra.mxu0 0.0
    %1686 = vmatpush.msra.mxu0 0.0
    %1687 = vmatpush.msra.mxu0 0.0
    %1688 = vmatpush.msra.mxu0 0.0
    %1689 = vmatpush.msra.mxu0 0.0
    %1690 = vmatpush.msra.mxu0 %v1380
    %1691 = vmatpush.msra.mxu0 %v1372
    %1692 = vmatpush.msra.mxu0 %v1364
    %1693 = vmatpush.msra.mxu0 %v1356
    %1694 = vmatpush.msra.mxu0 %v1348
    %1695 = vmatpush.msra.mxu0 %v1340
    %1696 = vmatpush.msra.mxu0 %v1332
    %1697 = vmatpush.msra.mxu0 %v1324
    %1698 = vmatpush.msra.mxu0 %v1316
    %1699 = vmatpush.msra.mxu0 %v1308
    %1700 = vmatpush.msra.mxu0 %v1300
    %1701 = vmatmul.f32.gmra.mxu0 %v1383
    %v1702 = vpop.f32.mrf.mxu0
    %v1703 = vadd.f32 %v1683, %v1702
    %1704 = vdwg.mxu0
    %v1705 = vmax.f32 %v1423, 0.0
    %v1706 = vmax.f32 %v1463, 0.0
    %v1707 = vmax.f32 %v1503, 0.0
    %v1708 = vmax.f32 %v1543, 0.0
    %v1709 = vmax.f32 %v1583, 0.0
    %v1710 = vmax.f32 %v1623, 0.0
    %v1711 = vmax.f32 %v1663, 0.0
    %v1712 = vmax.f32 %v1703, 0.0
    %1713 = vrot.lane.b32.xlu0 %v1705, 73
    %v1714 = vpop.permute.xlu0 %1713
    %1715 = vrot.lane.b32.xlu0 %v1706, 73
    %v1716 = vpop.permute.xlu0 %1715
    %1717 = vrot.lane.b32.xlu0 %v1707, 73
    %v1718 = vpop.permute.xlu0 %1717
    %1719 = vrot.lane.b32.xlu0 %v1708, 73
    %v1720 = vpop.permute.xlu0 %1719
    %1721 = vrot.lane.b32.xlu0 %v1709, 73
    %v1722 = vpop.permute.xlu0 %1721
    %1723 = vrot.lane.b32.xlu0 %v1710, 73
    %v1724 = vpop.permute.xlu0 %1723
    %1725 = vrot.lane.b32.xlu0 %v1711, 73
    %v1726 = vpop.permute.xlu0 %1725
    %1727 = vrot.lane.b32.xlu0 %v1712, 73
    %v1728 = vpop.permute.xlu0 %1727
    %v1729 = vsel %vm330, %v1726, %v1728
    %v1730 = vsel %vm330, %v1724, %v1726
    %v1731 = vsel %vm330, %v1722, %v1724
    %v1732 = vsel %vm330, %v1720, %v1722
    %v1733 = vsel %vm330, %v1718, %v1720
    %v1734 = vsel %vm330, %v1716, %v1718
    %v1735 = vsel %vm330, %v1714, %v1716
    %v1736 = vsel %vm330, %v1728, %v1714
    %v1737 = vsel %vm154, %v1736, 0.0
    %v1738 = vsel %vm155, %v1735, 0.0
    %v1739 = vsel %vm156, %v1734, 0.0
    %v1740 = vsel %vm157, %v1733, 0.0
    %v1741 = vsel %vm158, %v1732, 0.0
    %v1742 = vsel %vm159, %v1731, 0.0
    %v1743 = vsel %vm160, %v1730, 0.0
    %v1744 = vsel %vm161, %v1729, 0.0
    %1745 = vst [vmem:[#allocation2] sm:$0xff] %v1737
    %1746 = vst [vmem:[#allocation2 + $0x8] sm:$0xff] %v1738
    %1747 = vst [vmem:[#allocation2 + $0x10] sm:$0xff] %v1739
    %1748 = vst [vmem:[#allocation2 + $0x18] sm:$0xff] %v1740
    %1749 = vst [vmem:[#allocation2 + $0x20] sm:$0xff] %v1741
    %1750 = vst [vmem:[#allocation2 + $0x28] sm:$0xff] %v1742
    %1751 = vst [vmem:[#allocation2 + $0x30] sm:$0xff] %v1743
    %1752 = vst [vmem:[#allocation2 + $0x38] sm:$0xff] %v1744
    %1753 = vrot.lane.b32.xlu0 %v1705, 72
    %v1754 = vpop.permute.xlu0 %1753
    %1755 = vrot.lane.b32.xlu0 %v1706, 72
    %v1756 = vpop.permute.xlu0 %1755
    %1757 = vrot.lane.b32.xlu0 %v1707, 72
    %v1758 = vpop.permute.xlu0 %1757
    %1759 = vrot.lane.b32.xlu0 %v1708, 72
    %v1760 = vpop.permute.xlu0 %1759
    %1761 = vrot.lane.b32.xlu0 %v1709, 72
    %v1762 = vpop.permute.xlu0 %1761
    %1763 = vrot.lane.b32.xlu0 %v1710, 72
    %v1764 = vpop.permute.xlu0 %1763
    %1765 = vrot.lane.b32.xlu0 %v1711, 72
    %v1766 = vpop.permute.xlu0 %1765
    %1767 = vrot.lane.b32.xlu0 %v1712, 72
    %v1768 = vpop.permute.xlu0 %1767
    %v1769 = vsel %vm371, %v1766, %v1768
    %v1770 = vsel %vm371, %v1764, %v1766
    %v1771 = vsel %vm371, %v1762, %v1764
    %v1772 = vsel %vm371, %v1760, %v1762
    %v1773 = vsel %vm371, %v1758, %v1760
    %v1774 = vsel %vm371, %v1756, %v1758
    %v1775 = vsel %vm371, %v1754, %v1756
    %v1776 = vsel %vm371, %v1768, %v1754
    %v1777 = vsel %vm146, %v1776, 0.0
    %v1778 = vsel %vm147, %v1775, 0.0
    %v1779 = vsel %vm148, %v1774, 0.0
    %v1780 = vsel %vm149, %v1773, 0.0
    %v1781 = vsel %vm150, %v1772, 0.0
    %v1782 = vsel %vm151, %v1771, 0.0
    %v1783 = vsel %vm152, %v1770, 0.0
    %v1784 = vsel %vm153, %v1769, 0.0
    %1785 = vst [vmem:[#allocation2 + $0x40] sm:$0xff] %v1777
    %1786 = vst [vmem:[#allocation2 + $0x48] sm:$0xff] %v1778
    %1787 = vst [vmem:[#allocation2 + $0x50] sm:$0xff] %v1779
    %1788 = vst [vmem:[#allocation2 + $0x58] sm:$0xff] %v1780
    %1789 = vst [vmem:[#allocation2 + $0x60] sm:$0xff] %v1781
    %1790 = vst [vmem:[#allocation2 + $0x68] sm:$0xff] %v1782
    %1791 = vst [vmem:[#allocation2 + $0x70] sm:$0xff] %v1783
    %1792 = vst [vmem:[#allocation2 + $0x78] sm:$0xff] %v1784
    %1793 = vrot.lane.b32.xlu0 %v1705, 71
    %v1794 = vpop.permute.xlu0 %1793
    %1795 = vrot.lane.b32.xlu0 %v1706, 71
    %v1796 = vpop.permute.xlu0 %1795
    %1797 = vrot.lane.b32.xlu0 %v1707, 71
    %v1798 = vpop.permute.xlu0 %1797
    %1799 = vrot.lane.b32.xlu0 %v1708, 71
    %v1800 = vpop.permute.xlu0 %1799
    %1801 = vrot.lane.b32.xlu0 %v1709, 71
    %v1802 = vpop.permute.xlu0 %1801
    %1803 = vrot.lane.b32.xlu0 %v1710, 71
    %v1804 = vpop.permute.xlu0 %1803
    %1805 = vrot.lane.b32.xlu0 %v1711, 71
    %v1806 = vpop.permute.xlu0 %1805
    %1807 = vrot.lane.b32.xlu0 %v1712, 71
    %v1808 = vpop.permute.xlu0 %1807
    %v1809 = vsel %vm412, %v1806, %v1808
    %v1810 = vsel %vm412, %v1804, %v1806
    %v1811 = vsel %vm412, %v1802, %v1804
    %v1812 = vsel %vm412, %v1800, %v1802
    %v1813 = vsel %vm412, %v1798, %v1800
    %v1814 = vsel %vm412, %v1796, %v1798
    %v1815 = vsel %vm412, %v1794, %v1796
    %v1816 = vsel %vm412, %v1808, %v1794
    %v1817 = vsel %vm162, %v1816, 0.0
    %v1818 = vsel %vm163, %v1815, 0.0
    %v1819 = vsel %vm164, %v1814, 0.0
    %v1820 = vsel %vm165, %v1813, 0.0
    %v1821 = vsel %vm166, %v1812, 0.0
    %v1822 = vsel %vm167, %v1811, 0.0
    %v1823 = vsel %vm168, %v1810, 0.0
    %v1824 = vsel %vm169, %v1809, 0.0
    %1825 = vst [vmem:[#allocation2 + $0x80] sm:$0xff] %v1817
    %1826 = vst [vmem:[#allocation2 + $0x88] sm:$0xff] %v1818
    %1827 = vst [vmem:[#allocation2 + $0x90] sm:$0xff] %v1819
    %1828 = vst [vmem:[#allocation2 + $0x98] sm:$0xff] %v1820
    %1829 = vst [vmem:[#allocation2 + $0xa0] sm:$0xff] %v1821
    %1830 = vst [vmem:[#allocation2 + $0xa8] sm:$0xff] %v1822
    %1831 = vst [vmem:[#allocation2 + $0xb0] sm:$0xff] %v1823
    %1832 = vst [vmem:[#allocation2 + $0xb8] sm:$0xff] %v1824
    %1833 = vrot.lane.b32.xlu0 %v1705, 65
    %v1834 = vpop.permute.xlu0 %1833
    %1835 = vrot.lane.b32.xlu0 %v1706, 65
    %v1836 = vpop.permute.xlu0 %1835
    %1837 = vrot.lane.b32.xlu0 %v1707, 65
    %v1838 = vpop.permute.xlu0 %1837
    %1839 = vrot.lane.b32.xlu0 %v1708, 65
    %v1840 = vpop.permute.xlu0 %1839
    %1841 = vrot.lane.b32.xlu0 %v1709, 65
    %v1842 = vpop.permute.xlu0 %1841
    %1843 = vrot.lane.b32.xlu0 %v1710, 65
    %v1844 = vpop.permute.xlu0 %1843
    %1845 = vrot.lane.b32.xlu0 %v1711, 65
    %v1846 = vpop.permute.xlu0 %1845
    %1847 = vrot.lane.b32.xlu0 %v1712, 65
    %v1848 = vpop.permute.xlu0 %1847
    %v1849 = vsel %vm453, %v1846, %v1848
    %v1850 = vsel %vm453, %v1844, %v1846
    %v1851 = vsel %vm453, %v1842, %v1844
    %v1852 = vsel %vm453, %v1840, %v1842
    %v1853 = vsel %vm453, %v1838, %v1840
    %v1854 = vsel %vm453, %v1836, %v1838
    %v1855 = vsel %vm453, %v1834, %v1836
    %v1856 = vsel %vm453, %v1848, %v1834
    %v1857 = vsel %vm170, %v1856, 0.0
    %v1858 = vsel %vm171, %v1855, 0.0
    %v1859 = vsel %vm172, %v1854, 0.0
    %v1860 = vsel %vm173, %v1853, 0.0
    %v1861 = vsel %vm174, %v1852, 0.0
    %v1862 = vsel %vm175, %v1851, 0.0
    %v1863 = vsel %vm176, %v1850, 0.0
    %v1864 = vsel %vm177, %v1849, 0.0
    %1865 = vst [vmem:[#allocation2 + $0xc0] sm:$0xff] %v1857
    %1866 = vst [vmem:[#allocation2 + $0xc8] sm:$0xff] %v1858
    %1867 = vst [vmem:[#allocation2 + $0xd0] sm:$0xff] %v1859
    %1868 = vst [vmem:[#allocation2 + $0xd8] sm:$0xff] %v1860
    %1869 = vst [vmem:[#allocation2 + $0xe0] sm:$0xff] %v1861
    %1870 = vst [vmem:[#allocation2 + $0xe8] sm:$0xff] %v1862
    %1871 = vst [vmem:[#allocation2 + $0xf0] sm:$0xff] %v1863
    %1872 = vst [vmem:[#allocation2 + $0xf8] sm:$0xff] %v1864
    %1873 = vrot.lane.b32.xlu0 %v1705, 64
    %v1874 = vpop.permute.xlu0 %1873
    %1875 = vrot.lane.b32.xlu0 %v1706, 64
    %v1876 = vpop.permute.xlu0 %1875
    %1877 = vrot.lane.b32.xlu0 %v1707, 64
    %v1878 = vpop.permute.xlu0 %1877
    %1879 = vrot.lane.b32.xlu0 %v1708, 64
    %v1880 = vpop.permute.xlu0 %1879
    %1881 = vrot.lane.b32.xlu0 %v1709, 64
    %v1882 = vpop.permute.xlu0 %1881
    %1883 = vrot.lane.b32.xlu0 %v1710, 64
    %v1884 = vpop.permute.xlu0 %1883
    %1885 = vrot.lane.b32.xlu0 %v1711, 64
    %v1886 = vpop.permute.xlu0 %1885
    %1887 = vrot.lane.b32.xlu0 %v1712, 64
    %v1888 = vpop.permute.xlu0 %1887
    %v1889 = vsel %vm494, %v1886, %v1888
    %v1890 = vsel %vm494, %v1884, %v1886
    %v1891 = vsel %vm494, %v1882, %v1884
    %v1892 = vsel %vm494, %v1880, %v1882
    %v1893 = vsel %vm494, %v1878, %v1880
    %v1894 = vsel %vm494, %v1876, %v1878
    %v1895 = vsel %vm494, %v1874, %v1876
    %v1896 = vsel %vm494, %v1888, %v1874
    %v1897 = vsel %vm98, %v1896, 0.0
    %v1898 = vsel %vm99, %v1895, 0.0
    %v1899 = vsel %vm100, %v1894, 0.0
    %v1900 = vsel %vm101, %v1893, 0.0
    %v1901 = vsel %vm102, %v1892, 0.0
    %v1902 = vsel %vm103, %v1891, 0.0
    %v1903 = vsel %vm104, %v1890, 0.0
    %v1904 = vsel %vm105, %v1889, 0.0
    %1905 = vst [vmem:[#allocation2 + $0x100] sm:$0xff] %v1897
    %1906 = vst [vmem:[#allocation2 + $0x108] sm:$0xff] %v1898
    %1907 = vst [vmem:[#allocation2 + $0x110] sm:$0xff] %v1899
    %1908 = vst [vmem:[#allocation2 + $0x118] sm:$0xff] %v1900
    %1909 = vst [vmem:[#allocation2 + $0x120] sm:$0xff] %v1901
    %1910 = vst [vmem:[#allocation2 + $0x128] sm:$0xff] %v1902
    %1911 = vst [vmem:[#allocation2 + $0x130] sm:$0xff] %v1903
    %1912 = vst [vmem:[#allocation2 + $0x138] sm:$0xff] %v1904
    %1913 = vrot.lane.b32.xlu0 %v1705, 63
    %v1914 = vpop.permute.xlu0 %1913
    %1915 = vrot.lane.b32.xlu0 %v1706, 63
    %v1916 = vpop.permute.xlu0 %1915
    %1917 = vrot.lane.b32.xlu0 %v1707, 63
    %v1918 = vpop.permute.xlu0 %1917
    %1919 = vrot.lane.b32.xlu0 %v1708, 63
    %v1920 = vpop.permute.xlu0 %1919
    %1921 = vrot.lane.b32.xlu0 %v1709, 63
    %v1922 = vpop.permute.xlu0 %1921
    %1923 = vrot.lane.b32.xlu0 %v1710, 63
    %v1924 = vpop.permute.xlu0 %1923
    %1925 = vrot.lane.b32.xlu0 %v1711, 63
    %v1926 = vpop.permute.xlu0 %1925
    %1927 = vrot.lane.b32.xlu0 %v1712, 63
    %v1928 = vpop.permute.xlu0 %1927
    %v1929 = vsel %vm535, %v1926, %v1928
    %v1930 = vsel %vm535, %v1924, %v1926
    %v1931 = vsel %vm535, %v1922, %v1924
    %v1932 = vsel %vm535, %v1920, %v1922
    %v1933 = vsel %vm535, %v1918, %v1920
    %v1934 = vsel %vm535, %v1916, %v1918
    %v1935 = vsel %vm535, %v1914, %v1916
    %v1936 = vsel %vm535, %v1928, %v1914
    %v1937 = vsel %vm178, %v1936, 0.0
    %v1938 = vsel %vm179, %v1935, 0.0
    %v1939 = vsel %vm180, %v1934, 0.0
    %v1940 = vsel %vm181, %v1933, 0.0
    %v1941 = vsel %vm182, %v1932, 0.0
    %v1942 = vsel %vm183, %v1931, 0.0
    %v1943 = vsel %vm184, %v1930, 0.0
    %v1944 = vsel %vm185, %v1929, 0.0
    %1945 = vst [vmem:[#allocation2 + $0x140] sm:$0xff] %v1937
    %1946 = vst [vmem:[#allocation2 + $0x148] sm:$0xff] %v1938
    %1947 = vst [vmem:[#allocation2 + $0x150] sm:$0xff] %v1939
    %1948 = vst [vmem:[#allocation2 + $0x158] sm:$0xff] %v1940
    %1949 = vst [vmem:[#allocation2 + $0x160] sm:$0xff] %v1941
    %1950 = vst [vmem:[#allocation2 + $0x168] sm:$0xff] %v1942
    %1951 = vst [vmem:[#allocation2 + $0x170] sm:$0xff] %v1943
    %1952 = vst [vmem:[#allocation2 + $0x178] sm:$0xff] %v1944
    %1953 = vrot.lane.b32.xlu0 %v1705, 57
    %v1954 = vpop.permute.xlu0 %1953
    %1955 = vrot.lane.b32.xlu0 %v1706, 57
    %v1956 = vpop.permute.xlu0 %1955
    %1957 = vrot.lane.b32.xlu0 %v1707, 57
    %v1958 = vpop.permute.xlu0 %1957
    %1959 = vrot.lane.b32.xlu0 %v1708, 57
    %v1960 = vpop.permute.xlu0 %1959
    %1961 = vrot.lane.b32.xlu0 %v1709, 57
    %v1962 = vpop.permute.xlu0 %1961
    %1963 = vrot.lane.b32.xlu0 %v1710, 57
    %v1964 = vpop.permute.xlu0 %1963
    %1965 = vrot.lane.b32.xlu0 %v1711, 57
    %v1966 = vpop.permute.xlu0 %1965
    %1967 = vrot.lane.b32.xlu0 %v1712, 57
    %v1968 = vpop.permute.xlu0 %1967
    %v1969 = vsel %vm576, %v1966, %v1968
    %v1970 = vsel %vm576, %v1964, %v1966
    %v1971 = vsel %vm576, %v1962, %v1964
    %v1972 = vsel %vm576, %v1960, %v1962
    %v1973 = vsel %vm576, %v1958, %v1960
    %v1974 = vsel %vm576, %v1956, %v1958
    %v1975 = vsel %vm576, %v1954, %v1956
    %v1976 = vsel %vm576, %v1968, %v1954
    %v1977 = vsel %vm194, %v1976, 0.0
    %v1978 = vsel %vm195, %v1975, 0.0
    %v1979 = vsel %vm196, %v1974, 0.0
    %v1980 = vsel %vm197, %v1973, 0.0
    %v1981 = vsel %vm198, %v1972, 0.0
    %v1982 = vsel %vm199, %v1971, 0.0
    %v1983 = vsel %vm200, %v1970, 0.0
    %v1984 = vsel %vm201, %v1969, 0.0
    %1985 = vst [vmem:[#allocation2 + $0x180] sm:$0xff] %v1977
    %1986 = vst [vmem:[#allocation2 + $0x188] sm:$0xff] %v1978
    %1987 = vst [vmem:[#allocation2 + $0x190] sm:$0xff] %v1979
    %1988 = vst [vmem:[#allocation2 + $0x198] sm:$0xff] %v1980
    %1989 = vst [vmem:[#allocation2 + $0x1a0] sm:$0xff] %v1981
    %1990 = vst [vmem:[#allocation2 + $0x1a8] sm:$0xff] %v1982
    %1991 = vst [vmem:[#allocation2 + $0x1b0] sm:$0xff] %v1983
    %1992 = vst [vmem:[#allocation2 + $0x1b8] sm:$0xff] %v1984
    %1993 = vrot.lane.b32.xlu0 %v1705, 56
    %v1994 = vpop.permute.xlu0 %1993
    %1995 = vrot.lane.b32.xlu0 %v1706, 56
    %v1996 = vpop.permute.xlu0 %1995
    %1997 = vrot.lane.b32.xlu0 %v1707, 56
    %v1998 = vpop.permute.xlu0 %1997
    %1999 = vrot.lane.b32.xlu0 %v1708, 56
    %v2000 = vpop.permute.xlu0 %1999
    %2001 = vrot.lane.b32.xlu0 %v1709, 56
    %v2002 = vpop.permute.xlu0 %2001
    %2003 = vrot.lane.b32.xlu0 %v1710, 56
    %v2004 = vpop.permute.xlu0 %2003
    %2005 = vrot.lane.b32.xlu0 %v1711, 56
    %v2006 = vpop.permute.xlu0 %2005
    %2007 = vrot.lane.b32.xlu0 %v1712, 56
    %v2008 = vpop.permute.xlu0 %2007
    %v2009 = vsel %vm617, %v2006, %v2008
    %v2010 = vsel %vm617, %v2004, %v2006
    %v2011 = vsel %vm617, %v2002, %v2004
    %v2012 = vsel %vm617, %v2000, %v2002
    %v2013 = vsel %vm617, %v1998, %v2000
    %v2014 = vsel %vm617, %v1996, %v1998
    %v2015 = vsel %vm617, %v1994, %v1996
    %v2016 = vsel %vm617, %v2008, %v1994
    %v2017 = vsel %vm186, %v2016, 0.0
    %v2018 = vsel %vm187, %v2015, 0.0
    %v2019 = vsel %vm188, %v2014, 0.0
    %v2020 = vsel %vm189, %v2013, 0.0
    %v2021 = vsel %vm190, %v2012, 0.0
    %v2022 = vsel %vm191, %v2011, 0.0
    %v2023 = vsel %vm192, %v2010, 0.0
    %v2024 = vsel %vm193, %v2009, 0.0
    %2025 = vst [vmem:[#allocation2 + $0x1c0] sm:$0xff] %v2017
    %2026 = vst [vmem:[#allocation2 + $0x1c8] sm:$0xff] %v2018
    %2027 = vst [vmem:[#allocation2 + $0x1d0] sm:$0xff] %v2019
    %2028 = vst [vmem:[#allocation2 + $0x1d8] sm:$0xff] %v2020
    %2029 = vst [vmem:[#allocation2 + $0x1e0] sm:$0xff] %v2021
    %2030 = vst [vmem:[#allocation2 + $0x1e8] sm:$0xff] %v2022
    %2031 = vst [vmem:[#allocation2 + $0x1f0] sm:$0xff] %v2023
    %2032 = vst [vmem:[#allocation2 + $0x1f8] sm:$0xff] %v2024
    %2033 = vrot.lane.b32.xlu0 %v1705, 55
    %v2034 = vpop.permute.xlu0 %2033
    %2035 = vrot.lane.b32.xlu0 %v1706, 55
    %v2036 = vpop.permute.xlu0 %2035
    %2037 = vrot.lane.b32.xlu0 %v1707, 55
    %v2038 = vpop.permute.xlu0 %2037
    %2039 = vrot.lane.b32.xlu0 %v1708, 55
    %v2040 = vpop.permute.xlu0 %2039
    %2041 = vrot.lane.b32.xlu0 %v1709, 55
    %v2042 = vpop.permute.xlu0 %2041
    %2043 = vrot.lane.b32.xlu0 %v1710, 55
    %v2044 = vpop.permute.xlu0 %2043
    %2045 = vrot.lane.b32.xlu0 %v1711, 55
    %v2046 = vpop.permute.xlu0 %2045
    %2047 = vrot.lane.b32.xlu0 %v1712, 55
    %v2048 = vpop.permute.xlu0 %2047
    %v2049 = vsel %vm658, %v2046, %v2048
    %v2050 = vsel %vm658, %v2044, %v2046
    %v2051 = vsel %vm658, %v2042, %v2044
    %v2052 = vsel %vm658, %v2040, %v2042
    %v2053 = vsel %vm658, %v2038, %v2040
    %v2054 = vsel %vm658, %v2036, %v2038
    %v2055 = vsel %vm658, %v2034, %v2036
    %v2056 = vsel %vm658, %v2048, %v2034
    %v2057 = vsel %vm202, %v2056, 0.0
    %v2058 = vsel %vm203, %v2055, 0.0
    %v2059 = vsel %vm204, %v2054, 0.0
    %v2060 = vsel %vm205, %v2053, 0.0
    %v2061 = vsel %vm206, %v2052, 0.0
    %v2062 = vsel %vm207, %v2051, 0.0
    %v2063 = vsel %vm208, %v2050, 0.0
    %v2064 = vsel %vm209, %v2049, 0.0
    %2065 = vst [vmem:[#allocation2 + $0x200] sm:$0xff] %v2057
    %2066 = vst [vmem:[#allocation2 + $0x208] sm:$0xff] %v2058
    %2067 = vst [vmem:[#allocation2 + $0x210] sm:$0xff] %v2059
    %2068 = vst [vmem:[#allocation2 + $0x218] sm:$0xff] %v2060
    %2069 = vst [vmem:[#allocation2 + $0x220] sm:$0xff] %v2061
    %2070 = vst [vmem:[#allocation2 + $0x228] sm:$0xff] %v2062
    %2071 = vst [vmem:[#allocation2 + $0x230] sm:$0xff] %v2063
    %2072 = vst [vmem:[#allocation2 + $0x238] sm:$0xff] %v2064
    %2073 = vrot.lane.b32.xlu0 %v1705, 9
    %v2074 = vpop.permute.xlu0 %2073
    %2075 = vrot.lane.b32.xlu0 %v1706, 9
    %v2076 = vpop.permute.xlu0 %2075
    %2077 = vrot.lane.b32.xlu0 %v1707, 9
    %v2078 = vpop.permute.xlu0 %2077
    %2079 = vrot.lane.b32.xlu0 %v1708, 9
    %v2080 = vpop.permute.xlu0 %2079
    %2081 = vrot.lane.b32.xlu0 %v1709, 9
    %v2082 = vpop.permute.xlu0 %2081
    %2083 = vrot.lane.b32.xlu0 %v1710, 9
    %v2084 = vpop.permute.xlu0 %2083
    %2085 = vrot.lane.b32.xlu0 %v1711, 9
    %v2086 = vpop.permute.xlu0 %2085
    %2087 = vrot.lane.b32.xlu0 %v1712, 9
    %v2088 = vpop.permute.xlu0 %2087
    %v2089 = vsel %vm699, %v2086, %v2088
    %v2090 = vsel %vm699, %v2084, %v2086
    %v2091 = vsel %vm699, %v2082, %v2084
    %v2092 = vsel %vm699, %v2080, %v2082
    %v2093 = vsel %vm699, %v2078, %v2080
    %v2094 = vsel %vm699, %v2076, %v2078
    %v2095 = vsel %vm699, %v2074, %v2076
    %v2096 = vsel %vm699, %v2088, %v2074
    %v2097 = vsel %vm210, %v2096, 0.0
    %v2098 = vsel %vm211, %v2095, 0.0
    %v2099 = vsel %vm212, %v2094, 0.0
    %v2100 = vsel %vm213, %v2093, 0.0
    %v2101 = vsel %vm214, %v2092, 0.0
    %v2102 = vsel %vm215, %v2091, 0.0
    %v2103 = vsel %vm216, %v2090, 0.0
    %v2104 = vsel %vm217, %v2089, 0.0
    %2105 = vst [vmem:[#allocation2 + $0x240] sm:$0xff] %v2097
    %2106 = vst [vmem:[#allocation2 + $0x248] sm:$0xff] %v2098
    %2107 = vst [vmem:[#allocation2 + $0x250] sm:$0xff] %v2099
    %2108 = vst [vmem:[#allocation2 + $0x258] sm:$0xff] %v2100
    %2109 = vst [vmem:[#allocation2 + $0x260] sm:$0xff] %v2101
    %2110 = vst [vmem:[#allocation2 + $0x268] sm:$0xff] %v2102
    %2111 = vst [vmem:[#allocation2 + $0x270] sm:$0xff] %v2103
    %2112 = vst [vmem:[#allocation2 + $0x278] sm:$0xff] %v2104
    %2113 = vrot.lane.b32.xlu0 %v1705, 8
    %v2114 = vpop.permute.xlu0 %2113
    %2115 = vrot.lane.b32.xlu0 %v1706, 8
    %v2116 = vpop.permute.xlu0 %2115
    %2117 = vrot.lane.b32.xlu0 %v1707, 8
    %v2118 = vpop.permute.xlu0 %2117
    %2119 = vrot.lane.b32.xlu0 %v1708, 8
    %v2120 = vpop.permute.xlu0 %2119
    %2121 = vrot.lane.b32.xlu0 %v1709, 8
    %v2122 = vpop.permute.xlu0 %2121
    %2123 = vrot.lane.b32.xlu0 %v1710, 8
    %v2124 = vpop.permute.xlu0 %2123
    %2125 = vrot.lane.b32.xlu0 %v1711, 8
    %v2126 = vpop.permute.xlu0 %2125
    %2127 = vrot.lane.b32.xlu0 %v1712, 8
    %v2128 = vpop.permute.xlu0 %2127
    %v2129 = vsel %vm740, %v2126, %v2128
    %v2130 = vsel %vm740, %v2124, %v2126
    %v2131 = vsel %vm740, %v2122, %v2124
    %v2132 = vsel %vm740, %v2120, %v2122
    %v2133 = vsel %vm740, %v2118, %v2120
    %v2134 = vsel %vm740, %v2116, %v2118
    %v2135 = vsel %vm740, %v2114, %v2116
    %v2136 = vsel %vm740, %v2128, %v2114
    %v2137 = vsel %vm114, %v2136, 0.0
    %v2138 = vsel %vm115, %v2135, 0.0
    %v2139 = vsel %vm116, %v2134, 0.0
    %v2140 = vsel %vm117, %v2133, 0.0
    %v2141 = vsel %vm118, %v2132, 0.0
    %v2142 = vsel %vm119, %v2131, 0.0
    %v2143 = vsel %vm120, %v2130, 0.0
    %v2144 = vsel %vm121, %v2129, 0.0
    %2145 = vst [vmem:[#allocation2 + $0x280] sm:$0xff] %v2137
    %2146 = vst [vmem:[#allocation2 + $0x288] sm:$0xff] %v2138
    %2147 = vst [vmem:[#allocation2 + $0x290] sm:$0xff] %v2139
    %2148 = vst [vmem:[#allocation2 + $0x298] sm:$0xff] %v2140
    %2149 = vst [vmem:[#allocation2 + $0x2a0] sm:$0xff] %v2141
    %2150 = vst [vmem:[#allocation2 + $0x2a8] sm:$0xff] %v2142
    %2151 = vst [vmem:[#allocation2 + $0x2b0] sm:$0xff] %v2143
    %2152 = vst [vmem:[#allocation2 + $0x2b8] sm:$0xff] %v2144
    %2153 = vrot.lane.b32.xlu0 %v1705, 7
    %v2154 = vpop.permute.xlu0 %2153
    %2155 = vrot.lane.b32.xlu0 %v1706, 7
    %v2156 = vpop.permute.xlu0 %2155
    %2157 = vrot.lane.b32.xlu0 %v1707, 7
    %v2158 = vpop.permute.xlu0 %2157
    %2159 = vrot.lane.b32.xlu0 %v1708, 7
    %v2160 = vpop.permute.xlu0 %2159
    %2161 = vrot.lane.b32.xlu0 %v1709, 7
    %v2162 = vpop.permute.xlu0 %2161
    %2163 = vrot.lane.b32.xlu0 %v1710, 7
    %v2164 = vpop.permute.xlu0 %2163
    %2165 = vrot.lane.b32.xlu0 %v1711, 7
    %v2166 = vpop.permute.xlu0 %2165
    %2167 = vrot.lane.b32.xlu0 %v1712, 7
    %v2168 = vpop.permute.xlu0 %2167
    %v2169 = vsel %vm781, %v2166, %v2168
    %v2170 = vsel %vm781, %v2164, %v2166
    %v2171 = vsel %vm781, %v2162, %v2164
    %v2172 = vsel %vm781, %v2160, %v2162
    %v2173 = vsel %vm781, %v2158, %v2160
    %v2174 = vsel %vm781, %v2156, %v2158
    %v2175 = vsel %vm781, %v2154, %v2156
    %v2176 = vsel %vm781, %v2168, %v2154
    %v2177 = vsel %vm218, %v2176, 0.0
    %v2178 = vsel %vm219, %v2175, 0.0
    %v2179 = vsel %vm220, %v2174, 0.0
    %v2180 = vsel %vm221, %v2173, 0.0
    %v2181 = vsel %vm222, %v2172, 0.0
    %v2182 = vsel %vm223, %v2171, 0.0
    %v2183 = vsel %vm224, %v2170, 0.0
    %v2184 = vsel %vm225, %v2169, 0.0
    %2185 = vst [vmem:[#allocation2 + $0x2c0] sm:$0xff] %v2177
    %2186 = vst [vmem:[#allocation2 + $0x2c8] sm:$0xff] %v2178
    %2187 = vst [vmem:[#allocation2 + $0x2d0] sm:$0xff] %v2179
    %2188 = vst [vmem:[#allocation2 + $0x2d8] sm:$0xff] %v2180
    %2189 = vst [vmem:[#allocation2 + $0x2e0] sm:$0xff] %v2181
    %2190 = vst [vmem:[#allocation2 + $0x2e8] sm:$0xff] %v2182
    %2191 = vst [vmem:[#allocation2 + $0x2f0] sm:$0xff] %v2183
    %2192 = vst [vmem:[#allocation2 + $0x2f8] sm:$0xff] %v2184
    %2193 = vrot.lane.b32.xlu0 %v1705, 1
    %v2194 = vpop.permute.xlu0 %2193
    %2195 = vrot.lane.b32.xlu0 %v1706, 1
    %v2196 = vpop.permute.xlu0 %2195
    %2197 = vrot.lane.b32.xlu0 %v1707, 1
    %v2198 = vpop.permute.xlu0 %2197
    %2199 = vrot.lane.b32.xlu0 %v1708, 1
    %v2200 = vpop.permute.xlu0 %2199
    %2201 = vrot.lane.b32.xlu0 %v1709, 1
    %v2202 = vpop.permute.xlu0 %2201
    %2203 = vrot.lane.b32.xlu0 %v1710, 1
    %v2204 = vpop.permute.xlu0 %2203
    %2205 = vrot.lane.b32.xlu0 %v1711, 1
    %v2206 = vpop.permute.xlu0 %2205
    %2207 = vrot.lane.b32.xlu0 %v1712, 1
    %v2208 = vpop.permute.xlu0 %2207
    %v2209 = vsel %vm822, %v2206, %v2208
    %v2210 = vsel %vm822, %v2204, %v2206
    %v2211 = vsel %vm822, %v2202, %v2204
    %v2212 = vsel %vm822, %v2200, %v2202
    %v2213 = vsel %vm822, %v2198, %v2200
    %v2214 = vsel %vm822, %v2196, %v2198
    %v2215 = vsel %vm822, %v2194, %v2196
    %v2216 = vsel %vm822, %v2208, %v2194
    %v2217 = vsel %vm130, %v2216, 0.0
    %v2218 = vsel %vm131, %v2215, 0.0
    %v2219 = vsel %vm132, %v2214, 0.0
    %v2220 = vsel %vm133, %v2213, 0.0
    %v2221 = vsel %vm134, %v2212, 0.0
    %v2222 = vsel %vm135, %v2211, 0.0
    %v2223 = vsel %vm136, %v2210, 0.0
    %v2224 = vsel %vm137, %v2209, 0.0
    %2225 = vst [vmem:[#allocation2 + $0x300] sm:$0xff] %v2217
    %2226 = vst [vmem:[#allocation2 + $0x308] sm:$0xff] %v2218
    %2227 = vst [vmem:[#allocation2 + $0x310] sm:$0xff] %v2219
    %2228 = vst [vmem:[#allocation2 + $0x318] sm:$0xff] %v2220
    %2229 = vst [vmem:[#allocation2 + $0x320] sm:$0xff] %v2221
    %2230 = vst [vmem:[#allocation2 + $0x328] sm:$0xff] %v2222
    %2231 = vst [vmem:[#allocation2 + $0x330] sm:$0xff] %v2223
    %2232 = vst [vmem:[#allocation2 + $0x338] sm:$0xff] %v2224
    %2233 = vst [vmem:[#allocation2 + $0x340] sm:$0xff] %v1705
    %2234 = vst [vmem:[#allocation2 + $0x348] sm:$0xff] %v1706
    %2235 = vst [vmem:[#allocation2 + $0x350] sm:$0xff] %v1707
    %2236 = vst [vmem:[#allocation2 + $0x358] sm:$0xff] %v1708
    %2237 = vst [vmem:[#allocation2 + $0x360] sm:$0xff] %v1709
    %2238 = vst [vmem:[#allocation2 + $0x368] sm:$0xff] %v1710
    %2239 = vst [vmem:[#allocation2 + $0x370] sm:$0xff] %v1711
    %2240 = vst [vmem:[#allocation2 + $0x378] sm:$0xff] %v1712
    %2241 = vrot.lane.b32.xlu0 %v1705, 127
    %v2242 = vpop.permute.xlu0 %2241
    %2243 = vrot.lane.b32.xlu0 %v1706, 127
    %v2244 = vpop.permute.xlu0 %2243
    %2245 = vrot.lane.b32.xlu0 %v1707, 127
    %v2246 = vpop.permute.xlu0 %2245
    %2247 = vrot.lane.b32.xlu0 %v1708, 127
    %v2248 = vpop.permute.xlu0 %2247
    %2249 = vrot.lane.b32.xlu0 %v1709, 127
    %v2250 = vpop.permute.xlu0 %2249
    %2251 = vrot.lane.b32.xlu0 %v1710, 127
    %v2252 = vpop.permute.xlu0 %2251
    %2253 = vrot.lane.b32.xlu0 %v1711, 127
    %v2254 = vpop.permute.xlu0 %2253
    %2255 = vrot.lane.b32.xlu0 %v1712, 127
    %v2256 = vpop.permute.xlu0 %2255
    %v2257 = vsel %vm871, %v2254, %v2256
    %v2258 = vsel %vm871, %v2252, %v2254
    %v2259 = vsel %vm871, %v2250, %v2252
    %v2260 = vsel %vm871, %v2248, %v2250
    %v2261 = vsel %vm871, %v2246, %v2248
    %v2262 = vsel %vm871, %v2244, %v2246
    %v2263 = vsel %vm871, %v2242, %v2244
    %v2264 = vsel %vm871, %v2256, %v2242
    %v2265 = vsel %vm138, %v2263, 0.0
    %v2266 = vsel %vm139, %v2262, 0.0
    %v2267 = vsel %vm140, %v2261, 0.0
    %v2268 = vsel %vm141, %v2260, 0.0
    %v2269 = vsel %vm142, %v2259, 0.0
    %v2270 = vsel %vm143, %v2258, 0.0
    %v2271 = vsel %vm144, %v2257, 0.0
    %v2272 = vsel %vm145, %v2264, 0.0
    %2273 = vst [vmem:[#allocation2 + $0x380] sm:$0xff] %v2265
    %2274 = vst [vmem:[#allocation2 + $0x388] sm:$0xff] %v2266
    %2275 = vst [vmem:[#allocation2 + $0x390] sm:$0xff] %v2267
    %2276 = vst [vmem:[#allocation2 + $0x398] sm:$0xff] %v2268
    %2277 = vst [vmem:[#allocation2 + $0x3a0] sm:$0xff] %v2269
    %2278 = vst [vmem:[#allocation2 + $0x3a8] sm:$0xff] %v2270
    %2279 = vst [vmem:[#allocation2 + $0x3b0] sm:$0xff] %v2271
    %2280 = vst [vmem:[#allocation2 + $0x3b8] sm:$0xff] %v2272
    %2281 = vrot.lane.b32.xlu0 %v1705, 121
    %v2282 = vpop.permute.xlu0 %2281
    %2283 = vrot.lane.b32.xlu0 %v1706, 121
    %v2284 = vpop.permute.xlu0 %2283
    %2285 = vrot.lane.b32.xlu0 %v1707, 121
    %v2286 = vpop.permute.xlu0 %2285
    %2287 = vrot.lane.b32.xlu0 %v1708, 121
    %v2288 = vpop.permute.xlu0 %2287
    %2289 = vrot.lane.b32.xlu0 %v1709, 121
    %v2290 = vpop.permute.xlu0 %2289
    %2291 = vrot.lane.b32.xlu0 %v1710, 121
    %v2292 = vpop.permute.xlu0 %2291
    %2293 = vrot.lane.b32.xlu0 %v1711, 121
    %v2294 = vpop.permute.xlu0 %2293
    %2295 = vrot.lane.b32.xlu0 %v1712, 121
    %v2296 = vpop.permute.xlu0 %2295
    %v2297 = vsel %vm912, %v2294, %v2296
    %v2298 = vsel %vm912, %v2292, %v2294
    %v2299 = vsel %vm912, %v2290, %v2292
    %v2300 = vsel %vm912, %v2288, %v2290
    %v2301 = vsel %vm912, %v2286, %v2288
    %v2302 = vsel %vm912, %v2284, %v2286
    %v2303 = vsel %vm912, %v2282, %v2284
    %v2304 = vsel %vm912, %v2296, %v2282
    %v2305 = vsel %vm226, %v2303, 0.0
    %v2306 = vsel %vm227, %v2302, 0.0
    %v2307 = vsel %vm228, %v2301, 0.0
    %v2308 = vsel %vm229, %v2300, 0.0
    %v2309 = vsel %vm230, %v2299, 0.0
    %v2310 = vsel %vm231, %v2298, 0.0
    %v2311 = vsel %vm232, %v2297, 0.0
    %v2312 = vsel %vm233, %v2304, 0.0
    %2313 = vst [vmem:[#allocation2 + $0x3c0] sm:$0xff] %v2305
    %2314 = vst [vmem:[#allocation2 + $0x3c8] sm:$0xff] %v2306
    %2315 = vst [vmem:[#allocation2 + $0x3d0] sm:$0xff] %v2307
    %2316 = vst [vmem:[#allocation2 + $0x3d8] sm:$0xff] %v2308
    %2317 = vst [vmem:[#allocation2 + $0x3e0] sm:$0xff] %v2309
    %2318 = vst [vmem:[#allocation2 + $0x3e8] sm:$0xff] %v2310
    %2319 = vst [vmem:[#allocation2 + $0x3f0] sm:$0xff] %v2311
    %2320 = vst [vmem:[#allocation2 + $0x3f8] sm:$0xff] %v2312
    %2321 = vrot.lane.b32.xlu0 %v1705, 120
    %v2322 = vpop.permute.xlu0 %2321
    %2323 = vrot.lane.b32.xlu0 %v1706, 120
    %v2324 = vpop.permute.xlu0 %2323
    %2325 = vrot.lane.b32.xlu0 %v1707, 120
    %v2326 = vpop.permute.xlu0 %2325
    %2327 = vrot.lane.b32.xlu0 %v1708, 120
    %v2328 = vpop.permute.xlu0 %2327
    %2329 = vrot.lane.b32.xlu0 %v1709, 120
    %v2330 = vpop.permute.xlu0 %2329
    %2331 = vrot.lane.b32.xlu0 %v1710, 120
    %v2332 = vpop.permute.xlu0 %2331
    %2333 = vrot.lane.b32.xlu0 %v1711, 120
    %v2334 = vpop.permute.xlu0 %2333
    %2335 = vrot.lane.b32.xlu0 %v1712, 120
    %v2336 = vpop.permute.xlu0 %2335
    %v2337 = vsel %vm953, %v2334, %v2336
    %v2338 = vsel %vm953, %v2332, %v2334
    %v2339 = vsel %vm953, %v2330, %v2332
    %v2340 = vsel %vm953, %v2328, %v2330
    %v2341 = vsel %vm953, %v2326, %v2328
    %v2342 = vsel %vm953, %v2324, %v2326
    %v2343 = vsel %vm953, %v2322, %v2324
    %v2344 = vsel %vm953, %v2336, %v2322
    %v2345 = vsel %vm122, %v2343, 0.0
    %v2346 = vsel %vm123, %v2342, 0.0
    %v2347 = vsel %vm124, %v2341, 0.0
    %v2348 = vsel %vm125, %v2340, 0.0
    %v2349 = vsel %vm126, %v2339, 0.0
    %v2350 = vsel %vm127, %v2338, 0.0
    %v2351 = vsel %vm128, %v2337, 0.0
    %v2352 = vsel %vm129, %v2344, 0.0
    %2353 = vst [vmem:[#allocation2 + $0x400] sm:$0xff] %v2345
    %2354 = vst [vmem:[#allocation2 + $0x408] sm:$0xff] %v2346
    %2355 = vst [vmem:[#allocation2 + $0x410] sm:$0xff] %v2347
    %2356 = vst [vmem:[#allocation2 + $0x418] sm:$0xff] %v2348
    %2357 = vst [vmem:[#allocation2 + $0x420] sm:$0xff] %v2349
    %2358 = vst [vmem:[#allocation2 + $0x428] sm:$0xff] %v2350
    %2359 = vst [vmem:[#allocation2 + $0x430] sm:$0xff] %v2351
    %2360 = vst [vmem:[#allocation2 + $0x438] sm:$0xff] %v2352
    %2361 = vrot.lane.b32.xlu0 %v1705, 119
    %v2362 = vpop.permute.xlu0 %2361
    %2363 = vrot.lane.b32.xlu0 %v1706, 119
    %v2364 = vpop.permute.xlu0 %2363
    %2365 = vrot.lane.b32.xlu0 %v1707, 119
    %v2366 = vpop.permute.xlu0 %2365
    %2367 = vrot.lane.b32.xlu0 %v1708, 119
    %v2368 = vpop.permute.xlu0 %2367
    %2369 = vrot.lane.b32.xlu0 %v1709, 119
    %v2370 = vpop.permute.xlu0 %2369
    %2371 = vrot.lane.b32.xlu0 %v1710, 119
    %v2372 = vpop.permute.xlu0 %2371
    %2373 = vrot.lane.b32.xlu0 %v1711, 119
    %v2374 = vpop.permute.xlu0 %2373
    %2375 = vrot.lane.b32.xlu0 %v1712, 119
    %v2376 = vpop.permute.xlu0 %2375
    %v2377 = vsel %vm994, %v2374, %v2376
    %v2378 = vsel %vm994, %v2372, %v2374
    %v2379 = vsel %vm994, %v2370, %v2372
    %v2380 = vsel %vm994, %v2368, %v2370
    %v2381 = vsel %vm994, %v2366, %v2368
    %v2382 = vsel %vm994, %v2364, %v2366
    %v2383 = vsel %vm994, %v2362, %v2364
    %v2384 = vsel %vm994, %v2376, %v2362
    %v2385 = vsel %vm234, %v2383, 0.0
    %v2386 = vsel %vm235, %v2382, 0.0
    %v2387 = vsel %vm236, %v2381, 0.0
    %v2388 = vsel %vm237, %v2380, 0.0
    %v2389 = vsel %vm238, %v2379, 0.0
    %v2390 = vsel %vm239, %v2378, 0.0
    %v2391 = vsel %vm240, %v2377, 0.0
    %v2392 = vsel %vm241, %v2384, 0.0
    %2393 = vst [vmem:[#allocation2 + $0x440] sm:$0xff] %v2385
    %2394 = vst [vmem:[#allocation2 + $0x448] sm:$0xff] %v2386
    %2395 = vst [vmem:[#allocation2 + $0x450] sm:$0xff] %v2387
    %2396 = vst [vmem:[#allocation2 + $0x458] sm:$0xff] %v2388
    %2397 = vst [vmem:[#allocation2 + $0x460] sm:$0xff] %v2389
    %2398 = vst [vmem:[#allocation2 + $0x468] sm:$0xff] %v2390
    %2399 = vst [vmem:[#allocation2 + $0x470] sm:$0xff] %v2391
    %2400 = vst [vmem:[#allocation2 + $0x478] sm:$0xff] %v2392
    %v2401 = vsel %vm250, %v1735, 0.0
    %v2402 = vsel %vm251, %v1734, 0.0
    %v2403 = vsel %vm252, %v1733, 0.0
    %v2404 = vsel %vm253, %v1732, 0.0
    %v2405 = vsel %vm254, %v1731, 0.0
    %v2406 = vsel %vm255, %v1730, 0.0
    %v2407 = vsel %vm256, %v1729, 0.0
    %v2408 = vsel %vm257, %v1736, 0.0
    %2409 = vst [vmem:[#allocation2 + $0x480] sm:$0xff] %v2401
    %2410 = vst [vmem:[#allocation2 + $0x488] sm:$0xff] %v2402
    %2411 = vst [vmem:[#allocation2 + $0x490] sm:$0xff] %v2403
    %2412 = vst [vmem:[#allocation2 + $0x498] sm:$0xff] %v2404
    %2413 = vst [vmem:[#allocation2 + $0x4a0] sm:$0xff] %v2405
    %2414 = vst [vmem:[#allocation2 + $0x4a8] sm:$0xff] %v2406
    %2415 = vst [vmem:[#allocation2 + $0x4b0] sm:$0xff] %v2407
    %2416 = vst [vmem:[#allocation2 + $0x4b8] sm:$0xff] %v2408
    %v2417 = vsel %vm242, %v1775, 0.0
    %v2418 = vsel %vm243, %v1774, 0.0
    %v2419 = vsel %vm244, %v1773, 0.0
    %v2420 = vsel %vm245, %v1772, 0.0
    %v2421 = vsel %vm246, %v1771, 0.0
    %v2422 = vsel %vm247, %v1770, 0.0
    %v2423 = vsel %vm248, %v1769, 0.0
    %v2424 = vsel %vm249, %v1776, 0.0
    %2425 = vst [vmem:[#allocation2 + $0x4c0] sm:$0xff] %v2417
    %2426 = vst [vmem:[#allocation2 + $0x4c8] sm:$0xff] %v2418
    %2427 = vst [vmem:[#allocation2 + $0x4d0] sm:$0xff] %v2419
    %2428 = vst [vmem:[#allocation2 + $0x4d8] sm:$0xff] %v2420
    %2429 = vst [vmem:[#allocation2 + $0x4e0] sm:$0xff] %v2421
    %2430 = vst [vmem:[#allocation2 + $0x4e8] sm:$0xff] %v2422
    %2431 = vst [vmem:[#allocation2 + $0x4f0] sm:$0xff] %v2423
    %2432 = vst [vmem:[#allocation2 + $0x4f8] sm:$0xff] %v2424
    %v2433 = vsel %vm258, %v1815, 0.0
    %v2434 = vsel %vm259, %v1814, 0.0
    %v2435 = vsel %vm260, %v1813, 0.0
    %v2436 = vsel %vm261, %v1812, 0.0
    %v2437 = vsel %vm262, %v1811, 0.0
    %v2438 = vsel %vm263, %v1810, 0.0
    %v2439 = vsel %vm264, %v1809, 0.0
    %v2440 = vsel %vm265, %v1816, 0.0
    %2441 = vst [vmem:[#allocation2 + $0x500] sm:$0xff] %v2433
    %2442 = vst [vmem:[#allocation2 + $0x508] sm:$0xff] %v2434
    %2443 = vst [vmem:[#allocation2 + $0x510] sm:$0xff] %v2435
    %2444 = vst [vmem:[#allocation2 + $0x518] sm:$0xff] %v2436
    %2445 = vst [vmem:[#allocation2 + $0x520] sm:$0xff] %v2437
    %2446 = vst [vmem:[#allocation2 + $0x528] sm:$0xff] %v2438
    %2447 = vst [vmem:[#allocation2 + $0x530] sm:$0xff] %v2439
    %2448 = vst [vmem:[#allocation2 + $0x538] sm:$0xff] %v2440
    %v2449 = vsel %vm266, %v1855, 0.0
    %v2450 = vsel %vm267, %v1854, 0.0
    %v2451 = vsel %vm268, %v1853, 0.0
    %v2452 = vsel %vm269, %v1852, 0.0
    %v2453 = vsel %vm270, %v1851, 0.0
    %v2454 = vsel %vm271, %v1850, 0.0
    %v2455 = vsel %vm272, %v1849, 0.0
    %v2456 = vsel %vm273, %v1856, 0.0
    %2457 = vst [vmem:[#allocation2 + $0x540] sm:$0xff] %v2449
    %2458 = vst [vmem:[#allocation2 + $0x548] sm:$0xff] %v2450
    %2459 = vst [vmem:[#allocation2 + $0x550] sm:$0xff] %v2451
    %2460 = vst [vmem:[#allocation2 + $0x558] sm:$0xff] %v2452
    %2461 = vst [vmem:[#allocation2 + $0x560] sm:$0xff] %v2453
    %2462 = vst [vmem:[#allocation2 + $0x568] sm:$0xff] %v2454
    %2463 = vst [vmem:[#allocation2 + $0x570] sm:$0xff] %v2455
    %2464 = vst [vmem:[#allocation2 + $0x578] sm:$0xff] %v2456
    %v2465 = vsel %vm106, %v1895, 0.0
    %v2466 = vsel %vm107, %v1894, 0.0
    %v2467 = vsel %vm108, %v1893, 0.0
    %v2468 = vsel %vm109, %v1892, 0.0
    %v2469 = vsel %vm110, %v1891, 0.0
    %v2470 = vsel %vm111, %v1890, 0.0
    %v2471 = vsel %vm112, %v1889, 0.0
    %v2472 = vsel %vm113, %v1896, 0.0
    %2473 = vst [vmem:[#allocation2 + $0x580] sm:$0xff] %v2465
    %2474 = vst [vmem:[#allocation2 + $0x588] sm:$0xff] %v2466
    %2475 = vst [vmem:[#allocation2 + $0x590] sm:$0xff] %v2467
    %2476 = vst [vmem:[#allocation2 + $0x598] sm:$0xff] %v2468
    %2477 = vst [vmem:[#allocation2 + $0x5a0] sm:$0xff] %v2469
    %2478 = vst [vmem:[#allocation2 + $0x5a8] sm:$0xff] %v2470
    %2479 = vst [vmem:[#allocation2 + $0x5b0] sm:$0xff] %v2471
    %2480 = vst [vmem:[#allocation2 + $0x5b8] sm:$0xff] %v2472
    %v2481 = vsel %vm274, %v1935, 0.0
    %v2482 = vsel %vm275, %v1934, 0.0
    %v2483 = vsel %vm276, %v1933, 0.0
    %v2484 = vsel %vm277, %v1932, 0.0
    %v2485 = vsel %vm278, %v1931, 0.0
    %v2486 = vsel %vm279, %v1930, 0.0
    %v2487 = vsel %vm280, %v1929, 0.0
    %v2488 = vsel %vm281, %v1936, 0.0
    %2489 = vst [vmem:[#allocation2 + $0x5c0] sm:$0xff] %v2481
    %2490 = vst [vmem:[#allocation2 + $0x5c8] sm:$0xff] %v2482
    %2491 = vst [vmem:[#allocation2 + $0x5d0] sm:$0xff] %v2483
    %2492 = vst [vmem:[#allocation2 + $0x5d8] sm:$0xff] %v2484
    %2493 = vst [vmem:[#allocation2 + $0x5e0] sm:$0xff] %v2485
    %2494 = vst [vmem:[#allocation2 + $0x5e8] sm:$0xff] %v2486
    %2495 = vst [vmem:[#allocation2 + $0x5f0] sm:$0xff] %v2487
    %2496 = vst [vmem:[#allocation2 + $0x5f8] sm:$0xff] %v2488
    %v2497 = vsel %vm290, %v1975, 0.0
    %v2498 = vsel %vm291, %v1974, 0.0
    %v2499 = vsel %vm292, %v1973, 0.0
    %v2500 = vsel %vm293, %v1972, 0.0
    %v2501 = vsel %vm294, %v1971, 0.0
    %v2502 = vsel %vm295, %v1970, 0.0
    %v2503 = vsel %vm296, %v1969, 0.0
    %v2504 = vsel %vm297, %v1976, 0.0
    %2505 = vst [vmem:[#allocation2 + $0x600] sm:$0xff] %v2497
    %2506 = vst [vmem:[#allocation2 + $0x608] sm:$0xff] %v2498
    %2507 = vst [vmem:[#allocation2 + $0x610] sm:$0xff] %v2499
    %2508 = vst [vmem:[#allocation2 + $0x618] sm:$0xff] %v2500
    %2509 = vst [vmem:[#allocation2 + $0x620] sm:$0xff] %v2501
    %2510 = vst [vmem:[#allocation2 + $0x628] sm:$0xff] %v2502
    %2511 = vst [vmem:[#allocation2 + $0x630] sm:$0xff] %v2503
    %2512 = vst [vmem:[#allocation2 + $0x638] sm:$0xff] %v2504
    %v2513 = vsel %vm282, %v2015, 0.0
    %v2514 = vsel %vm283, %v2014, 0.0
    %v2515 = vsel %vm284, %v2013, 0.0
    %v2516 = vsel %vm285, %v2012, 0.0
    %v2517 = vsel %vm286, %v2011, 0.0
    %v2518 = vsel %vm287, %v2010, 0.0
    %v2519 = vsel %vm288, %v2009, 0.0
    %v2520 = vsel %vm289, %v2016, 0.0
    %2521 = vst [vmem:[#allocation2 + $0x640] sm:$0xff] %v2513
    %2522 = vst [vmem:[#allocation2 + $0x648] sm:$0xff] %v2514
    %2523 = vst [vmem:[#allocation2 + $0x650] sm:$0xff] %v2515
    %2524 = vst [vmem:[#allocation2 + $0x658] sm:$0xff] %v2516
    %2525 = vst [vmem:[#allocation2 + $0x660] sm:$0xff] %v2517
    %2526 = vst [vmem:[#allocation2 + $0x668] sm:$0xff] %v2518
    %2527 = vst [vmem:[#allocation2 + $0x670] sm:$0xff] %v2519
    %2528 = vst [vmem:[#allocation2 + $0x678] sm:$0xff] %v2520
    %v2529 = vsel %vm298, %v2055, 0.0
    %v2530 = vsel %vm299, %v2054, 0.0
    %v2531 = vsel %vm300, %v2053, 0.0
    %v2532 = vsel %vm301, %v2052, 0.0
    %v2533 = vsel %vm302, %v2051, 0.0
    %v2534 = vsel %vm303, %v2050, 0.0
    %v2535 = vsel %vm304, %v2049, 0.0
    %v2536 = vsel %vm305, %v2056, 0.0
    %2537 = vst [vmem:[#allocation2 + $0x680] sm:$0xff] %v2529
    %2538 = vst [vmem:[#allocation2 + $0x688] sm:$0xff] %v2530
    %2539 = vst [vmem:[#allocation2 + $0x690] sm:$0xff] %v2531
    %2540 = vst [vmem:[#allocation2 + $0x698] sm:$0xff] %v2532
    %2541 = vst [vmem:[#allocation2 + $0x6a0] sm:$0xff] %v2533
    %2542 = vst [vmem:[#allocation2 + $0x6a8] sm:$0xff] %v2534
    %2543 = vst [vmem:[#allocation2 + $0x6b0] sm:$0xff] %v2535
    %2544 = vst [vmem:[#allocation2 + $0x6b8] sm:$0xff] %v2536
    %v2545 = vld [vmem:[#allocation6] sm:$0xff]
    %v2546 = vld [vmem:[#allocation6 + $0x8] sm:$0xff]
    %v2547 = vld [vmem:[#allocation2] sm:$0xff]
    %v2548 = vld [vmem:[#allocation2 + $0x8] sm:$0xff]
    %v2549 = vld [vmem:[#allocation2 + $0x10] sm:$0xff]
    %v2550 = vld [vmem:[#allocation2 + $0x18] sm:$0xff]
    %v2551 = vld [vmem:[#allocation2 + $0x20] sm:$0xff]
    %v2552 = vld [vmem:[#allocation2 + $0x28] sm:$0xff]
    %v2553 = vld [vmem:[#allocation2 + $0x30] sm:$0xff]
    %v2554 = vld [vmem:[#allocation2 + $0x38] sm:$0xff]
    %v2555 = vld [vmem:[#allocation2 + $0x40] sm:$0xff]
    %v2556 = vld [vmem:[#allocation2 + $0x48] sm:$0xff]
    %v2557 = vld [vmem:[#allocation2 + $0x50] sm:$0xff]
    %v2558 = vld [vmem:[#allocation2 + $0x58] sm:$0xff]
    %v2559 = vld [vmem:[#allocation2 + $0x60] sm:$0xff]
    %v2560 = vld [vmem:[#allocation2 + $0x68] sm:$0xff]
    %v2561 = vld [vmem:[#allocation2 + $0x70] sm:$0xff]
    %v2562 = vld [vmem:[#allocation2 + $0x78] sm:$0xff]
    %v2563 = vld [vmem:[#allocation2 + $0x80] sm:$0xff]
    %v2564 = vld [vmem:[#allocation2 + $0x88] sm:$0xff]
    %v2565 = vld [vmem:[#allocation2 + $0x90] sm:$0xff]
    %v2566 = vld [vmem:[#allocation2 + $0x98] sm:$0xff]
    %v2567 = vld [vmem:[#allocation2 + $0xa0] sm:$0xff]
    %v2568 = vld [vmem:[#allocation2 + $0xa8] sm:$0xff]
    %v2569 = vld [vmem:[#allocation2 + $0xb0] sm:$0xff]
    %v2570 = vld [vmem:[#allocation2 + $0xb8] sm:$0xff]
    %v2571 = vld [vmem:[#allocation2 + $0xc0] sm:$0xff]
    %v2572 = vld [vmem:[#allocation2 + $0xc8] sm:$0xff]
    %v2573 = vld [vmem:[#allocation2 + $0xd0] sm:$0xff]
    %v2574 = vld [vmem:[#allocation2 + $0xd8] sm:$0xff]
    %v2575 = vld [vmem:[#allocation2 + $0xe0] sm:$0xff]
    %v2576 = vld [vmem:[#allocation2 + $0xe8] sm:$0xff]
    %v2577 = vld [vmem:[#allocation2 + $0xf0] sm:$0xff]
    %v2578 = vld [vmem:[#allocation2 + $0xf8] sm:$0xff]
    %v2579 = vld [vmem:[#allocation2 + $0x100] sm:$0xff]
    %v2580 = vld [vmem:[#allocation2 + $0x108] sm:$0xff]
    %v2581 = vld [vmem:[#allocation2 + $0x110] sm:$0xff]
    %v2582 = vld [vmem:[#allocation2 + $0x118] sm:$0xff]
    %v2583 = vld [vmem:[#allocation2 + $0x120] sm:$0xff]
    %v2584 = vld [vmem:[#allocation2 + $0x128] sm:$0xff]
    %v2585 = vld [vmem:[#allocation2 + $0x130] sm:$0xff]
    %v2586 = vld [vmem:[#allocation2 + $0x138] sm:$0xff]
    %v2587 = vld [vmem:[#allocation2 + $0x140] sm:$0xff]
    %v2588 = vld [vmem:[#allocation2 + $0x148] sm:$0xff]
    %v2589 = vld [vmem:[#allocation2 + $0x150] sm:$0xff]
    %v2590 = vld [vmem:[#allocation2 + $0x158] sm:$0xff]
    %v2591 = vld [vmem:[#allocation2 + $0x160] sm:$0xff]
    %v2592 = vld [vmem:[#allocation2 + $0x168] sm:$0xff]
    %v2593 = vld [vmem:[#allocation2 + $0x170] sm:$0xff]
    %v2594 = vld [vmem:[#allocation2 + $0x178] sm:$0xff]
    %v2595 = vld [vmem:[#allocation2 + $0x180] sm:$0xff]
    %v2596 = vld [vmem:[#allocation2 + $0x188] sm:$0xff]
    %v2597 = vld [vmem:[#allocation2 + $0x190] sm:$0xff]
    %v2598 = vld [vmem:[#allocation2 + $0x198] sm:$0xff]
    %v2599 = vld [vmem:[#allocation2 + $0x1a0] sm:$0xff]
    %v2600 = vld [vmem:[#allocation2 + $0x1a8] sm:$0xff]
    %v2601 = vld [vmem:[#allocation2 + $0x1b0] sm:$0xff]
    %v2602 = vld [vmem:[#allocation2 + $0x1b8] sm:$0xff]
    %v2603 = vld [vmem:[#allocation2 + $0x1c0] sm:$0xff]
    %v2604 = vld [vmem:[#allocation2 + $0x1c8] sm:$0xff]
    %v2605 = vld [vmem:[#allocation2 + $0x1d0] sm:$0xff]
    %v2606 = vld [vmem:[#allocation2 + $0x1d8] sm:$0xff]
    %v2607 = vld [vmem:[#allocation2 + $0x1e0] sm:$0xff]
    %v2608 = vld [vmem:[#allocation2 + $0x1e8] sm:$0xff]
    %v2609 = vld [vmem:[#allocation2 + $0x1f0] sm:$0xff]
    %v2610 = vld [vmem:[#allocation2 + $0x1f8] sm:$0xff]
    %v2611 = vld [vmem:[#allocation2 + $0x200] sm:$0xff]
    %v2612 = vld [vmem:[#allocation2 + $0x208] sm:$0xff]
    %v2613 = vld [vmem:[#allocation2 + $0x210] sm:$0xff]
    %v2614 = vld [vmem:[#allocation2 + $0x218] sm:$0xff]
    %v2615 = vld [vmem:[#allocation2 + $0x220] sm:$0xff]
    %v2616 = vld [vmem:[#allocation2 + $0x228] sm:$0xff]
    %v2617 = vld [vmem:[#allocation2 + $0x230] sm:$0xff]
    %v2618 = vld [vmem:[#allocation2 + $0x238] sm:$0xff]
    %v2619 = vld [vmem:[#allocation2 + $0x240] sm:$0xff]
    %v2620 = vld [vmem:[#allocation2 + $0x248] sm:$0xff]
    %v2621 = vld [vmem:[#allocation2 + $0x250] sm:$0xff]
    %v2622 = vld [vmem:[#allocation2 + $0x258] sm:$0xff]
    %v2623 = vld [vmem:[#allocation2 + $0x260] sm:$0xff]
    %v2624 = vld [vmem:[#allocation2 + $0x268] sm:$0xff]
    %v2625 = vld [vmem:[#allocation2 + $0x270] sm:$0xff]
    %v2626 = vld [vmem:[#allocation2 + $0x278] sm:$0xff]
    %v2627 = vld [vmem:[#allocation2 + $0x280] sm:$0xff]
    %v2628 = vld [vmem:[#allocation2 + $0x288] sm:$0xff]
    %v2629 = vld [vmem:[#allocation2 + $0x290] sm:$0xff]
    %v2630 = vld [vmem:[#allocation2 + $0x298] sm:$0xff]
    %v2631 = vld [vmem:[#allocation2 + $0x2a0] sm:$0xff]
    %v2632 = vld [vmem:[#allocation2 + $0x2a8] sm:$0xff]
    %v2633 = vld [vmem:[#allocation2 + $0x2b0] sm:$0xff]
    %v2634 = vld [vmem:[#allocation2 + $0x2b8] sm:$0xff]
    %v2635 = vld [vmem:[#allocation2 + $0x2c0] sm:$0xff]
    %v2636 = vld [vmem:[#allocation2 + $0x2c8] sm:$0xff]
    %v2637 = vld [vmem:[#allocation2 + $0x2d0] sm:$0xff]
    %v2638 = vld [vmem:[#allocation2 + $0x2d8] sm:$0xff]
    %v2639 = vld [vmem:[#allocation2 + $0x2e0] sm:$0xff]
    %v2640 = vld [vmem:[#allocation2 + $0x2e8] sm:$0xff]
    %v2641 = vld [vmem:[#allocation2 + $0x2f0] sm:$0xff]
    %v2642 = vld [vmem:[#allocation2 + $0x2f8] sm:$0xff]
    %v2643 = vld [vmem:[#allocation2 + $0x300] sm:$0xff]
    %v2644 = vld [vmem:[#allocation2 + $0x308] sm:$0xff]
    %v2645 = vld [vmem:[#allocation2 + $0x310] sm:$0xff]
    %v2646 = vld [vmem:[#allocation2 + $0x318] sm:$0xff]
    %v2647 = vld [vmem:[#allocation2 + $0x320] sm:$0xff]
    %v2648 = vld [vmem:[#allocation2 + $0x328] sm:$0xff]
    %v2649 = vld [vmem:[#allocation2 + $0x330] sm:$0xff]
    %v2650 = vld [vmem:[#allocation2 + $0x338] sm:$0xff]
    %v2651 = vld [vmem:[#allocation2 + $0x340] sm:$0xff]
    %v2652 = vld [vmem:[#allocation2 + $0x348] sm:$0xff]
    %v2653 = vld [vmem:[#allocation2 + $0x350] sm:$0xff]
    %v2654 = vld [vmem:[#allocation2 + $0x358] sm:$0xff]
    %v2655 = vld [vmem:[#allocation2 + $0x360] sm:$0xff]
    %v2656 = vld [vmem:[#allocation2 + $0x368] sm:$0xff]
    %v2657 = vld [vmem:[#allocation2 + $0x370] sm:$0xff]
    %v2658 = vld [vmem:[#allocation2 + $0x378] sm:$0xff]
    %v2659 = vld [vmem:[#allocation2 + $0x380] sm:$0xff]
    %v2660 = vld [vmem:[#allocation2 + $0x388] sm:$0xff]
    %v2661 = vld [vmem:[#allocation2 + $0x390] sm:$0xff]
    %v2662 = vld [vmem:[#allocation2 + $0x398] sm:$0xff]
    %v2663 = vld [vmem:[#allocation2 + $0x3a0] sm:$0xff]
    %v2664 = vld [vmem:[#allocation2 + $0x3a8] sm:$0xff]
    %v2665 = vld [vmem:[#allocation2 + $0x3b0] sm:$0xff]
    %v2666 = vld [vmem:[#allocation2 + $0x3b8] sm:$0xff]
    %v2667 = vld [vmem:[#allocation2 + $0x3c0] sm:$0xff]
    %v2668 = vld [vmem:[#allocation2 + $0x3c8] sm:$0xff]
    %v2669 = vld [vmem:[#allocation2 + $0x3d0] sm:$0xff]
    %v2670 = vld [vmem:[#allocation2 + $0x3d8] sm:$0xff]
    %v2671 = vld [vmem:[#allocation2 + $0x3e0] sm:$0xff]
    %v2672 = vld [vmem:[#allocation2 + $0x3e8] sm:$0xff]
    %v2673 = vld [vmem:[#allocation2 + $0x3f0] sm:$0xff]
    %v2674 = vld [vmem:[#allocation2 + $0x3f8] sm:$0xff]
    %v2675 = vld [vmem:[#allocation2 + $0x400] sm:$0xff]
    %v2676 = vld [vmem:[#allocation2 + $0x408] sm:$0xff]
    %v2677 = vld [vmem:[#allocation2 + $0x410] sm:$0xff]
    %v2678 = vld [vmem:[#allocation2 + $0x418] sm:$0xff]
    %v2679 = vld [vmem:[#allocation2 + $0x420] sm:$0xff]
    %v2680 = vld [vmem:[#allocation2 + $0x428] sm:$0xff]
    %v2681 = vld [vmem:[#allocation2 + $0x430] sm:$0xff]
    %v2682 = vld [vmem:[#allocation2 + $0x438] sm:$0xff]
    %v2683 = vld [vmem:[#allocation2 + $0x440] sm:$0xff]
    %v2684 = vld [vmem:[#allocation2 + $0x448] sm:$0xff]
    %v2685 = vld [vmem:[#allocation2 + $0x450] sm:$0xff]
    %v2686 = vld [vmem:[#allocation2 + $0x458] sm:$0xff]
    %v2687 = vld [vmem:[#allocation2 + $0x460] sm:$0xff]
    %v2688 = vld [vmem:[#allocation2 + $0x468] sm:$0xff]
    %v2689 = vld [vmem:[#allocation2 + $0x470] sm:$0xff]
    %v2690 = vld [vmem:[#allocation2 + $0x478] sm:$0xff]
    %v2691 = vld [vmem:[#allocation2 + $0x480] sm:$0xff]
    %v2692 = vld [vmem:[#allocation2 + $0x488] sm:$0xff]
    %v2693 = vld [vmem:[#allocation2 + $0x490] sm:$0xff]
    %v2694 = vld [vmem:[#allocation2 + $0x498] sm:$0xff]
    %v2695 = vld [vmem:[#allocation2 + $0x4a0] sm:$0xff]
    %v2696 = vld [vmem:[#allocation2 + $0x4a8] sm:$0xff]
    %v2697 = vld [vmem:[#allocation2 + $0x4b0] sm:$0xff]
    %v2698 = vld [vmem:[#allocation2 + $0x4b8] sm:$0xff]
    %v2699 = vld [vmem:[#allocation2 + $0x4c0] sm:$0xff]
    %v2700 = vld [vmem:[#allocation2 + $0x4c8] sm:$0xff]
    %v2701 = vld [vmem:[#allocation2 + $0x4d0] sm:$0xff]
    %v2702 = vld [vmem:[#allocation2 + $0x4d8] sm:$0xff]
    %v2703 = vld [vmem:[#allocation2 + $0x4e0] sm:$0xff]
    %v2704 = vld [vmem:[#allocation2 + $0x4e8] sm:$0xff]
    %v2705 = vld [vmem:[#allocation2 + $0x4f0] sm:$0xff]
    %v2706 = vld [vmem:[#allocation2 + $0x4f8] sm:$0xff]
    %v2707 = vld [vmem:[#allocation2 + $0x500] sm:$0xff]
    %v2708 = vld [vmem:[#allocation2 + $0x508] sm:$0xff]
    %v2709 = vld [vmem:[#allocation2 + $0x510] sm:$0xff]
    %v2710 = vld [vmem:[#allocation2 + $0x518] sm:$0xff]
    %v2711 = vld [vmem:[#allocation2 + $0x520] sm:$0xff]
    %v2712 = vld [vmem:[#allocation2 + $0x528] sm:$0xff]
    %v2713 = vld [vmem:[#allocation2 + $0x530] sm:$0xff]
    %v2714 = vld [vmem:[#allocation2 + $0x538] sm:$0xff]
    %v2715 = vld [vmem:[#allocation2 + $0x540] sm:$0xff]
    %v2716 = vld [vmem:[#allocation2 + $0x548] sm:$0xff]
    %v2717 = vld [vmem:[#allocation2 + $0x550] sm:$0xff]
    %v2718 = vld [vmem:[#allocation2 + $0x558] sm:$0xff]
    %v2719 = vld [vmem:[#allocation2 + $0x560] sm:$0xff]
    %v2720 = vld [vmem:[#allocation2 + $0x568] sm:$0xff]
    %v2721 = vld [vmem:[#allocation2 + $0x570] sm:$0xff]
    %v2722 = vld [vmem:[#allocation2 + $0x578] sm:$0xff]
    %v2723 = vld [vmem:[#allocation2 + $0x580] sm:$0xff]
    %v2724 = vld [vmem:[#allocation2 + $0x588] sm:$0xff]
    %v2725 = vld [vmem:[#allocation2 + $0x590] sm:$0xff]
    %v2726 = vld [vmem:[#allocation2 + $0x598] sm:$0xff]
    %v2727 = vld [vmem:[#allocation2 + $0x5a0] sm:$0xff]
    %v2728 = vld [vmem:[#allocation2 + $0x5a8] sm:$0xff]
    %v2729 = vld [vmem:[#allocation2 + $0x5b0] sm:$0xff]
    %v2730 = vld [vmem:[#allocation2 + $0x5b8] sm:$0xff]
    %v2731 = vld [vmem:[#allocation2 + $0x5c0] sm:$0xff]
    %v2732 = vld [vmem:[#allocation2 + $0x5c8] sm:$0xff]
    %v2733 = vld [vmem:[#allocation2 + $0x5d0] sm:$0xff]
    %v2734 = vld [vmem:[#allocation2 + $0x5d8] sm:$0xff]
    %v2735 = vld [vmem:[#allocation2 + $0x5e0] sm:$0xff]
    %v2736 = vld [vmem:[#allocation2 + $0x5e8] sm:$0xff]
    %v2737 = vld [vmem:[#allocation2 + $0x5f0] sm:$0xff]
    %v2738 = vld [vmem:[#allocation2 + $0x5f8] sm:$0xff]
    %v2739 = vld [vmem:[#allocation2 + $0x600] sm:$0xff]
    %v2740 = vld [vmem:[#allocation2 + $0x608] sm:$0xff]
    %v2741 = vld [vmem:[#allocation2 + $0x610] sm:$0xff]
    %v2742 = vld [vmem:[#allocation2 + $0x618] sm:$0xff]
    %v2743 = vld [vmem:[#allocation2 + $0x620] sm:$0xff]
    %v2744 = vld [vmem:[#allocation2 + $0x628] sm:$0xff]
    %v2745 = vld [vmem:[#allocation2 + $0x630] sm:$0xff]
    %v2746 = vld [vmem:[#allocation2 + $0x638] sm:$0xff]
    %v2747 = vld [vmem:[#allocation2 + $0x640] sm:$0xff]
    %v2748 = vld [vmem:[#allocation2 + $0x648] sm:$0xff]
    %v2749 = vld [vmem:[#allocation2 + $0x650] sm:$0xff]
    %v2750 = vld [vmem:[#allocation2 + $0x658] sm:$0xff]
    %v2751 = vld [vmem:[#allocation2 + $0x660] sm:$0xff]
    %v2752 = vld [vmem:[#allocation2 + $0x668] sm:$0xff]
    %v2753 = vld [vmem:[#allocation2 + $0x670] sm:$0xff]
    %v2754 = vld [vmem:[#allocation2 + $0x678] sm:$0xff]
    %v2755 = vld [vmem:[#allocation2 + $0x680] sm:$0xff]
    %v2756 = vld [vmem:[#allocation2 + $0x688] sm:$0xff]
    %v2757 = vld [vmem:[#allocation2 + $0x690] sm:$0xff]
    %v2758 = vld [vmem:[#allocation2 + $0x698] sm:$0xff]
    %v2759 = vld [vmem:[#allocation2 + $0x6a0] sm:$0xff]
    %v2760 = vld [vmem:[#allocation2 + $0x6a8] sm:$0xff]
    %v2761 = vld [vmem:[#allocation2 + $0x6b0] sm:$0xff]
    %v2762 = vld [vmem:[#allocation2 + $0x6b8] sm:$0xff]
    %v2764 = vsel %vm1381, %v2546, 0
    %2766 = vmatpush.msra.mxu0 %v2667
    %2767 = vmatpush.msra.mxu0 %v2659
    %2768 = vmatpush.msra.mxu0 %v2651
    %2769 = vmatpush.msra.mxu0 %v2643
    %2770 = vmatpush.msra.mxu0 %v2635
    %2771 = vmatpush.msra.mxu0 %v2627
    %2772 = vmatpush.msra.mxu0 %v2619
    %2773 = vmatpush.msra.mxu0 %v2611
    %2774 = vmatpush.msra.mxu0 %v2603
    %2775 = vmatpush.msra.mxu0 %v2595
    %2776 = vmatpush.msra.mxu0 %v2587
    %2777 = vmatpush.msra.mxu0 %v2579
    %2778 = vmatpush.msra.mxu0 %v2571
    %2779 = vmatpush.msra.mxu0 %v2563
    %2780 = vmatpush.msra.mxu0 %v2555
    %2781 = vmatpush.msra.mxu0 %v2547
    %2782 = vmatmul.f32.gmra.mxu0 %v2545
    %v2783 = vpop.f32.mrf.mxu0
    %v2784 = vadd.f32 0.0, %v2783
    %2785 = vdwg.mxu0
    %2786 = vmatpush.msra.mxu0 0.0
    %2787 = vmatpush.msra.mxu0 0.0
    %2788 = vmatpush.msra.mxu0 0.0
    %2789 = vmatpush.msra.mxu0 0.0
    %2790 = vmatpush.msra.mxu0 0.0
    %2791 = vmatpush.msra.mxu0 %v2755
    %2792 = vmatpush.msra.mxu0 %v2747
    %2793 = vmatpush.msra.mxu0 %v2739
    %2794 = vmatpush.msra.mxu0 %v2731
    %2795 = vmatpush.msra.mxu0 %v2723
    %2796 = vmatpush.msra.mxu0 %v2715
    %2797 = vmatpush.msra.mxu0 %v2707
    %2798 = vmatpush.msra.mxu0 %v2699
    %2799 = vmatpush.msra.mxu0 %v2691
    %2800 = vmatpush.msra.mxu0 %v2683
    %2801 = vmatpush.msra.mxu0 %v2675
    %2802 = vmatmul.f32.gmra.mxu0 %v2764
    %v2803 = vpop.f32.mrf.mxu0
    %v2804 = vadd.f32 %v2784, %v2803
    %2805 = vdwg.mxu0
    %2806 = vmatpush.msra.mxu0 %v2668
    %2807 = vmatpush.msra.mxu0 %v2660
    %2808 = vmatpush.msra.mxu0 %v2652
    %2809 = vmatpush.msra.mxu0 %v2644
    %2810 = vmatpush.msra.mxu0 %v2636
    %2811 = vmatpush.msra.mxu0 %v2628
    %2812 = vmatpush.msra.mxu0 %v2620
    %2813 = vmatpush.msra.mxu0 %v2612
    %2814 = vmatpush.msra.mxu0 %v2604
    %2815 = vmatpush.msra.mxu0 %v2596
    %2816 = vmatpush.msra.mxu0 %v2588
    %2817 = vmatpush.msra.mxu0 %v2580
    %2818 = vmatpush.msra.mxu0 %v2572
    %2819 = vmatpush.msra.mxu0 %v2564
    %2820 = vmatpush.msra.mxu0 %v2556
    %2821 = vmatpush.msra.mxu0 %v2548
    %2822 = vmatmul.f32.gmra.mxu0 %v2545
    %v2823 = vpop.f32.mrf.mxu0
    %v2824 = vadd.f32 0.0, %v2823
    %2825 = vdwg.mxu0
    %2826 = vmatpush.msra.mxu0 0.0
    %2827 = vmatpush.msra.mxu0 0.0
    %2828 = vmatpush.msra.mxu0 0.0
    %2829 = vmatpush.msra.mxu0 0.0
    %2830 = vmatpush.msra.mxu0 0.0
    %2831 = vmatpush.msra.mxu0 %v2756
    %2832 = vmatpush.msra.mxu0 %v2748
    %2833 = vmatpush.msra.mxu0 %v2740
    %2834 = vmatpush.msra.mxu0 %v2732
    %2835 = vmatpush.msra.mxu0 %v2724
    %2836 = vmatpush.msra.mxu0 %v2716
    %2837 = vmatpush.msra.mxu0 %v2708
    %2838 = vmatpush.msra.mxu0 %v2700
    %2839 = vmatpush.msra.mxu0 %v2692
    %2840 = vmatpush.msra.mxu0 %v2684
    %2841 = vmatpush.msra.mxu0 %v2676
    %2842 = vmatmul.f32.gmra.mxu0 %v2764
    %v2843 = vpop.f32.mrf.mxu0
    %v2844 = vadd.f32 %v2824, %v2843
    %2845 = vdwg.mxu0
    %2846 = vmatpush.msra.mxu0 %v2669
    %2847 = vmatpush.msra.mxu0 %v2661
    %2848 = vmatpush.msra.mxu0 %v2653
    %2849 = vmatpush.msra.mxu0 %v2645
    %2850 = vmatpush.msra.mxu0 %v2637
    %2851 = vmatpush.msra.mxu0 %v2629
    %2852 = vmatpush.msra.mxu0 %v2621
    %2853 = vmatpush.msra.mxu0 %v2613
    %2854 = vmatpush.msra.mxu0 %v2605
    %2855 = vmatpush.msra.mxu0 %v2597
    %2856 = vmatpush.msra.mxu0 %v2589
    %2857 = vmatpush.msra.mxu0 %v2581
    %2858 = vmatpush.msra.mxu0 %v2573
    %2859 = vmatpush.msra.mxu0 %v2565
    %2860 = vmatpush.msra.mxu0 %v2557
    %2861 = vmatpush.msra.mxu0 %v2549
    %2862 = vmatmul.f32.gmra.mxu0 %v2545
    %v2863 = vpop.f32.mrf.mxu0
    %v2864 = vadd.f32 0.0, %v2863
    %2865 = vdwg.mxu0
    %2866 = vmatpush.msra.mxu0 0.0
    %2867 = vmatpush.msra.mxu0 0.0
    %2868 = vmatpush.msra.mxu0 0.0
    %2869 = vmatpush.msra.mxu0 0.0
    %2870 = vmatpush.msra.mxu0 0.0
    %2871 = vmatpush.msra.mxu0 %v2757
    %2872 = vmatpush.msra.mxu0 %v2749
    %2873 = vmatpush.msra.mxu0 %v2741
    %2874 = vmatpush.msra.mxu0 %v2733
    %2875 = vmatpush.msra.mxu0 %v2725
    %2876 = vmatpush.msra.mxu0 %v2717
    %2877 = vmatpush.msra.mxu0 %v2709
    %2878 = vmatpush.msra.mxu0 %v2701
    %2879 = vmatpush.msra.mxu0 %v2693
    %2880 = vmatpush.msra.mxu0 %v2685
    %2881 = vmatpush.msra.mxu0 %v2677
    %2882 = vmatmul.f32.gmra.mxu0 %v2764
    %v2883 = vpop.f32.mrf.mxu0
    %v2884 = vadd.f32 %v2864, %v2883
    %2885 = vdwg.mxu0
    %2886 = vmatpush.msra.mxu0 %v2670
    %2887 = vmatpush.msra.mxu0 %v2662
    %2888 = vmatpush.msra.mxu0 %v2654
    %2889 = vmatpush.msra.mxu0 %v2646
    %2890 = vmatpush.msra.mxu0 %v2638
    %2891 = vmatpush.msra.mxu0 %v2630
    %2892 = vmatpush.msra.mxu0 %v2622
    %2893 = vmatpush.msra.mxu0 %v2614
    %2894 = vmatpush.msra.mxu0 %v2606
    %2895 = vmatpush.msra.mxu0 %v2598
    %2896 = vmatpush.msra.mxu0 %v2590
    %2897 = vmatpush.msra.mxu0 %v2582
    %2898 = vmatpush.msra.mxu0 %v2574
    %2899 = vmatpush.msra.mxu0 %v2566
    %2900 = vmatpush.msra.mxu0 %v2558
    %2901 = vmatpush.msra.mxu0 %v2550
    %2902 = vmatmul.f32.gmra.mxu0 %v2545
    %v2903 = vpop.f32.mrf.mxu0
    %v2904 = vadd.f32 0.0, %v2903
    %2905 = vdwg.mxu0
    %2906 = vmatpush.msra.mxu0 0.0
    %2907 = vmatpush.msra.mxu0 0.0
    %2908 = vmatpush.msra.mxu0 0.0
    %2909 = vmatpush.msra.mxu0 0.0
    %2910 = vmatpush.msra.mxu0 0.0
    %2911 = vmatpush.msra.mxu0 %v2758
    %2912 = vmatpush.msra.mxu0 %v2750
    %2913 = vmatpush.msra.mxu0 %v2742
    %2914 = vmatpush.msra.mxu0 %v2734
    %2915 = vmatpush.msra.mxu0 %v2726
    %2916 = vmatpush.msra.mxu0 %v2718
    %2917 = vmatpush.msra.mxu0 %v2710
    %2918 = vmatpush.msra.mxu0 %v2702
    %2919 = vmatpush.msra.mxu0 %v2694
    %2920 = vmatpush.msra.mxu0 %v2686
    %2921 = vmatpush.msra.mxu0 %v2678
    %2922 = vmatmul.f32.gmra.mxu0 %v2764
    %v2923 = vpop.f32.mrf.mxu0
    %v2924 = vadd.f32 %v2904, %v2923
    %2925 = vdwg.mxu0
    %2926 = vmatpush.msra.mxu0 %v2671
    %2927 = vmatpush.msra.mxu0 %v2663
    %2928 = vmatpush.msra.mxu0 %v2655
    %2929 = vmatpush.msra.mxu0 %v2647
    %2930 = vmatpush.msra.mxu0 %v2639
    %2931 = vmatpush.msra.mxu0 %v2631
    %2932 = vmatpush.msra.mxu0 %v2623
    %2933 = vmatpush.msra.mxu0 %v2615
    %2934 = vmatpush.msra.mxu0 %v2607
    %2935 = vmatpush.msra.mxu0 %v2599
    %2936 = vmatpush.msra.mxu0 %v2591
    %2937 = vmatpush.msra.mxu0 %v2583
    %2938 = vmatpush.msra.mxu0 %v2575
    %2939 = vmatpush.msra.mxu0 %v2567
    %2940 = vmatpush.msra.mxu0 %v2559
    %2941 = vmatpush.msra.mxu0 %v2551
    %2942 = vmatmul.f32.gmra.mxu0 %v2545
    %v2943 = vpop.f32.mrf.mxu0
    %v2944 = vadd.f32 0.0, %v2943
    %2945 = vdwg.mxu0
    %2946 = vmatpush.msra.mxu0 0.0
    %2947 = vmatpush.msra.mxu0 0.0
    %2948 = vmatpush.msra.mxu0 0.0
    %2949 = vmatpush.msra.mxu0 0.0
    %2950 = vmatpush.msra.mxu0 0.0
    %2951 = vmatpush.msra.mxu0 %v2759
    %2952 = vmatpush.msra.mxu0 %v2751
    %2953 = vmatpush.msra.mxu0 %v2743
    %2954 = vmatpush.msra.mxu0 %v2735
    %2955 = vmatpush.msra.mxu0 %v2727
    %2956 = vmatpush.msra.mxu0 %v2719
    %2957 = vmatpush.msra.mxu0 %v2711
    %2958 = vmatpush.msra.mxu0 %v2703
    %2959 = vmatpush.msra.mxu0 %v2695
    %2960 = vmatpush.msra.mxu0 %v2687
    %2961 = vmatpush.msra.mxu0 %v2679
    %2962 = vmatmul.f32.gmra.mxu0 %v2764
    %v2963 = vpop.f32.mrf.mxu0
    %v2964 = vadd.f32 %v2944, %v2963
    %2965 = vdwg.mxu0
    %2966 = vmatpush.msra.mxu0 %v2672
    %2967 = vmatpush.msra.mxu0 %v2664
    %2968 = vmatpush.msra.mxu0 %v2656
    %2969 = vmatpush.msra.mxu0 %v2648
    %2970 = vmatpush.msra.mxu0 %v2640
    %2971 = vmatpush.msra.mxu0 %v2632
    %2972 = vmatpush.msra.mxu0 %v2624
    %2973 = vmatpush.msra.mxu0 %v2616
    %2974 = vmatpush.msra.mxu0 %v2608
    %2975 = vmatpush.msra.mxu0 %v2600
    %2976 = vmatpush.msra.mxu0 %v2592
    %2977 = vmatpush.msra.mxu0 %v2584
    %2978 = vmatpush.msra.mxu0 %v2576
    %2979 = vmatpush.msra.mxu0 %v2568
    %2980 = vmatpush.msra.mxu0 %v2560
    %2981 = vmatpush.msra.mxu0 %v2552
    %2982 = vmatmul.f32.gmra.mxu0 %v2545
    %v2983 = vpop.f32.mrf.mxu0
    %v2984 = vadd.f32 0.0, %v2983
    %2985 = vdwg.mxu0
    %2986 = vmatpush.msra.mxu0 0.0
    %2987 = vmatpush.msra.mxu0 0.0
    %2988 = vmatpush.msra.mxu0 0.0
    %2989 = vmatpush.msra.mxu0 0.0
    %2990 = vmatpush.msra.mxu0 0.0
    %2991 = vmatpush.msra.mxu0 %v2760
    %2992 = vmatpush.msra.mxu0 %v2752
    %2993 = vmatpush.msra.mxu0 %v2744
    %2994 = vmatpush.msra.mxu0 %v2736
    %2995 = vmatpush.msra.mxu0 %v2728
    %2996 = vmatpush.msra.mxu0 %v2720
    %2997 = vmatpush.msra.mxu0 %v2712
    %2998 = vmatpush.msra.mxu0 %v2704
    %2999 = vmatpush.msra.mxu0 %v2696
    %3000 = vmatpush.msra.mxu0 %v2688
    %3001 = vmatpush.msra.mxu0 %v2680
    %3002 = vmatmul.f32.gmra.mxu0 %v2764
    %v3003 = vpop.f32.mrf.mxu0
    %v3004 = vadd.f32 %v2984, %v3003
    %3005 = vdwg.mxu0
    %3006 = vmatpush.msra.mxu0 %v2673
    %3007 = vmatpush.msra.mxu0 %v2665
    %3008 = vmatpush.msra.mxu0 %v2657
    %3009 = vmatpush.msra.mxu0 %v2649
    %3010 = vmatpush.msra.mxu0 %v2641
    %3011 = vmatpush.msra.mxu0 %v2633
    %3012 = vmatpush.msra.mxu0 %v2625
    %3013 = vmatpush.msra.mxu0 %v2617
    %3014 = vmatpush.msra.mxu0 %v2609
    %3015 = vmatpush.msra.mxu0 %v2601
    %3016 = vmatpush.msra.mxu0 %v2593
    %3017 = vmatpush.msra.mxu0 %v2585
    %3018 = vmatpush.msra.mxu0 %v2577
    %3019 = vmatpush.msra.mxu0 %v2569
    %3020 = vmatpush.msra.mxu0 %v2561
    %3021 = vmatpush.msra.mxu0 %v2553
    %3022 = vmatmul.f32.gmra.mxu0 %v2545
    %v3023 = vpop.f32.mrf.mxu0
    %v3024 = vadd.f32 0.0, %v3023
    %3025 = vdwg.mxu0
    %3026 = vmatpush.msra.mxu0 0.0
    %3027 = vmatpush.msra.mxu0 0.0
    %3028 = vmatpush.msra.mxu0 0.0
    %3029 = vmatpush.msra.mxu0 0.0
    %3030 = vmatpush.msra.mxu0 0.0
    %3031 = vmatpush.msra.mxu0 %v2761
    %3032 = vmatpush.msra.mxu0 %v2753
    %3033 = vmatpush.msra.mxu0 %v2745
    %3034 = vmatpush.msra.mxu0 %v2737
    %3035 = vmatpush.msra.mxu0 %v2729
    %3036 = vmatpush.msra.mxu0 %v2721
    %3037 = vmatpush.msra.mxu0 %v2713
    %3038 = vmatpush.msra.mxu0 %v2705
    %3039 = vmatpush.msra.mxu0 %v2697
    %3040 = vmatpush.msra.mxu0 %v2689
    %3041 = vmatpush.msra.mxu0 %v2681
    %3042 = vmatmul.f32.gmra.mxu0 %v2764
    %v3043 = vpop.f32.mrf.mxu0
    %v3044 = vadd.f32 %v3024, %v3043
    %3045 = vdwg.mxu0
    %3046 = vmatpush.msra.mxu0 %v2674
    %3047 = vmatpush.msra.mxu0 %v2666
    %3048 = vmatpush.msra.mxu0 %v2658
    %3049 = vmatpush.msra.mxu0 %v2650
    %3050 = vmatpush.msra.mxu0 %v2642
    %3051 = vmatpush.msra.mxu0 %v2634
    %3052 = vmatpush.msra.mxu0 %v2626
    %3053 = vmatpush.msra.mxu0 %v2618
    %3054 = vmatpush.msra.mxu0 %v2610
    %3055 = vmatpush.msra.mxu0 %v2602
    %3056 = vmatpush.msra.mxu0 %v2594
    %3057 = vmatpush.msra.mxu0 %v2586
    %3058 = vmatpush.msra.mxu0 %v2578
    %3059 = vmatpush.msra.mxu0 %v2570
    %3060 = vmatpush.msra.mxu0 %v2562
    %3061 = vmatpush.msra.mxu0 %v2554
    %3062 = vmatmul.f32.gmra.mxu0 %v2545
    %v3063 = vpop.f32.mrf.mxu0
    %v3064 = vadd.f32 0.0, %v3063
    %3065 = vdwg.mxu0
    %3066 = vmatpush.msra.mxu0 0.0
    %3067 = vmatpush.msra.mxu0 0.0
    %3068 = vmatpush.msra.mxu0 0.0
    %3069 = vmatpush.msra.mxu0 0.0
    %3070 = vmatpush.msra.mxu0 0.0
    %3071 = vmatpush.msra.mxu0 %v2762
    %3072 = vmatpush.msra.mxu0 %v2754
    %3073 = vmatpush.msra.mxu0 %v2746
    %3074 = vmatpush.msra.mxu0 %v2738
    %3075 = vmatpush.msra.mxu0 %v2730
    %3076 = vmatpush.msra.mxu0 %v2722
    %3077 = vmatpush.msra.mxu0 %v2714
    %3078 = vmatpush.msra.mxu0 %v2706
    %3079 = vmatpush.msra.mxu0 %v2698
    %3080 = vmatpush.msra.mxu0 %v2690
    %3081 = vmatpush.msra.mxu0 %v2682
    %3082 = vmatmul.f32.gmra.mxu0 %v2764
    %v3083 = vpop.f32.mrf.mxu0
    %v3084 = vadd.f32 %v3064, %v3083
    %3085 = vdwg.mxu0
    %v3086 = vadd.f32 %v2804, %v2844
    %v3087 = vadd.f32 %v3086, %v2884
    %v3088 = vadd.f32 %v3087, %v2924
    %3089 = vadd.xlane.f32.xlu0 %v3088
    %v3090 = vpop.xlane.xlu0 %3089
    %v3091 = vrcp.pop 512.0
    %v3092 = vmul.f32 512.0, %v3091
    %v3093 = vsub.f32 1.0, %v3092
    %v3094 = vmul.f32 %v3091, %v3093
    %v3095 = vadd.f32 %v3091, %v3094
    %vm3096 = vweird.f32 %v3091
    %v3097 = vsel %vm3096, %v3091, %v3095
    %v3098 = vmul.f32 %v3090, %v3097
    %v3099 = vld [vmem:[%s3] sm:$0xff]
    %v3100 = vmul.f32 %v3099, %v3098
    %vm3101 = vcmask 15360
    %v3102 = vsel %vm3101, %v3100, 0.0
    %v3103 = vrot.slane %v3102, 4
    %v3104 = vadd.f32 %v3102, %v3103
    %v3105 = vrot.slane %v3104, 2
    %v3106 = vadd.f32 %v3104, %v3105
    %v3107 = vrot.slane %v3106, 1
    %v3108 = vadd.f32 %v3106, %v3107
    %v3109 = vmax.f32 %v3108, 0.0
    %v3110 = vld [vmem:[%s4] sm:$0xff]
    %v3111 = vmul.f32 %v3110, %v3109
    %v3112 = vsel %vm3101, %v3111, 0.0
    %3113 = vadd.xlane.f32.xlu0 %v3112
    %v3114 = vpop.xlane.xlu0 %3113
    %v3115 = vxor.u32 %v3114, 2147483648
    %v3116 = vmul.f32 %v3115, 1.442695
    %v3117 = vpow.pop %v3116
    %v3118 = vadd.f32 %v3117, 1.0
    %v3119 = vrcp.pop %v3118
    %v3120 = vmul.f32 %v3118, %v3119
    %v3121 = vsub.f32 1.0, %v3120
    %v3122 = vmul.f32 %v3119, %v3121
    %v3123 = vadd.f32 %v3119, %v3122
    %vm3124 = vweird.f32 %v3118
    %vm3125 = vweird.f32 %v3119
    %vm3126 = vmor %vm3124, %vm3125
    %v3127 = vsel %vm3126, %v3119, %v3123
    %v3128 = vand.u32 2147483647, %v3118
    %vm3129 = vcmp.eq.f32.partialorder %v3128, 8.507059e+37
    %v3130 = vand.u32 %v3118, 2147483648
    %v3131 = vor.u32 1.1754944e-38, %v3130
    %v3132 = vsel %vm3129, %v3131, %v3127
    %v3133 = vmul.f32 1.0, %v3132
    %v3134 = vmul.f32 %v2804, %v3133
    %v3135 = vmul.f32 %v2844, %v3133
    %v3136 = vmul.f32 %v2884, %v3133
    %v3137 = vmul.f32 %v2924, %v3133
    %v3138 = vadd.f32 %v3134, %v306
    %v3139 = vadd.f32 %v3135, %v307
    %v3140 = vadd.f32 %v3136, %v308
    %v3141 = vadd.f32 %v3137, %v309
    %3142 = vst [vmem:[#allocation8] sm:$0xff] %v3138
    %3143 = vst [vmem:[#allocation8 + $0x8] sm:$0xff] %v3139
    %3144 = vst [vmem:[#allocation8 + $0x10] sm:$0xff] %v3140
    %3145 = vst [vmem:[#allocation8 + $0x18] sm:$0xff] %v3141
    %v3146 = vadd.f32 %v2964, %v3004
    %v3147 = vadd.f32 %v3146, %v3044
    %v3148 = vadd.f32 %v3147, %v3084
    %3149 = vadd.xlane.f32.xlu0 %v3148
    %v3150 = vpop.xlane.xlu0 %3149
    %v3151 = vmul.f32 %v3150, %v3097
    %v3152 = vld [vmem:[%s3] sm:$0xff]
    %v3153 = vmul.f32 %v3152, %v3151
    %v3154 = vsel %vm3101, %v3153, 0.0
    %v3155 = vrot.slane %v3154, 4
    %v3156 = vadd.f32 %v3154, %v3155
    %v3157 = vrot.slane %v3156, 2
    %v3158 = vadd.f32 %v3156, %v3157
    %v3159 = vrot.slane %v3158, 1
    %v3160 = vadd.f32 %v3158, %v3159
    %v3161 = vmax.f32 %v3160, 0.0
    %v3162 = vld [vmem:[%s4] sm:$0xff]
    %v3163 = vmul.f32 %v3162, %v3161
    %v3164 = vsel %vm3101, %v3163, 0.0
    %3165 = vadd.xlane.f32.xlu0 %v3164
    %v3166 = vpop.xlane.xlu0 %3165
    %v3167 = vxor.u32 %v3166, 2147483648
    %v3168 = vmul.f32 %v3167, 1.442695
    %v3169 = vpow.pop %v3168
    %v3170 = vadd.f32 %v3169, 1.0
    %v3171 = vrcp.pop %v3170
    %v3172 = vmul.f32 %v3170, %v3171
    %v3173 = vsub.f32 1.0, %v3172
    %v3174 = vmul.f32 %v3171, %v3173
    %v3175 = vadd.f32 %v3171, %v3174
    %vm3176 = vweird.f32 %v3170
    %vm3177 = vweird.f32 %v3171
    %vm3178 = vmor %vm3176, %vm3177
    %v3179 = vsel %vm3178, %v3171, %v3175
    %v3180 = vand.u32 2147483647, %v3170
    %vm3181 = vcmp.eq.f32.partialorder %v3180, 8.507059e+37
    %v3182 = vand.u32 %v3170, 2147483648
    %v3183 = vor.u32 1.1754944e-38, %v3182
    %v3184 = vsel %vm3181, %v3183, %v3179
    %v3185 = vmul.f32 1.0, %v3184
    %v3186 = vmul.f32 %v2964, %v3185
    %v3187 = vmul.f32 %v3004, %v3185
    %v3188 = vmul.f32 %v3044, %v3185
    %v3189 = vmul.f32 %v3084, %v3185
    %v3190 = vadd.f32 %v3186, %v310
    %v3191 = vadd.f32 %v3187, %v311
    %v3192 = vadd.f32 %v3188, %v312
    %v3193 = vadd.f32 %v3189, %v313
    %3194 = vst [vmem:[#allocation8 + $0x20] sm:$0xff] %v3190
    %3195 = vst [vmem:[#allocation8 + $0x28] sm:$0xff] %v3191
    %3196 = vst [vmem:[#allocation8 + $0x30] sm:$0xff] %v3192
    %3197 = vst [vmem:[#allocation8 + $0x38] sm:$0xff] %v3193
    // Predicated region
    $region30: #{tpu_custom_call.1} parent=1 // pred_check
      _
    $region31: #{tpu_custom_call.1} parent=1 // pred_check_branch
      %3199 = sbr.rel (0) target = $region33
    $region32: #{tpu_custom_call.1} parent=1 // pred_region
      %3201 = vsyncadd [#allocation5], 0
      %s3203 = sshll.u32 [#allocation8], 4
      %s3204 = int_to_ptr.vmem [resolvable:$true] %s3203
      %s3205 = sshll.u32 %s5, 4
      %s3206 = int_to_ptr.hbm [resolvable:$true] %s3205
      %3208 = dma.vmem_to_hbm [thread:$0]  %s3204, 1024, %s3206, [#allocation5]
    $region33: #{tpu_custom_call.1} parent=1 // pred_fallthru
      _
    // Predicated region
    $region34: #{tpu_custom_call.1} parent=1 // pred_check
      _
    $region35: #{tpu_custom_call.1} parent=1 // pred_check_branch
      %3210 = sbr.rel (0) target = $region37
    $region36: #{tpu_custom_call.1} parent=1 // pred_region
      %3212 = dma.done [#allocation5], 1024
    $region37: #{tpu_custom_call.1} parent=1 // pred_fallthru
      _
    %3213 = vsyncpa [#allocation4], 1
    %3214 = vsyncpa [#allocation7], 1
    %3215 = vsyncpa [#allocation5], 1

</llo_original>
